<compile_context>
chip_gen: v6e
topology: v6e:2x2x1
jax: 0.10.0
libtpu: 0.0.40
codegen_flags: <defaults>
</compile_context>

<pallas_src>
import jax
import jax.numpy as jnp
import numpy as np
from jax.experimental import pallas as pl
from jax.experimental.pallas import tpu as pltpu

EPS = 1e-5
HIGHEST = jax.lax.Precision.HIGHEST


# -----------------------------------------------------------------------------
# Pallas kernel: full forward for one batch block of Bb samples
# -----------------------------------------------------------------------------
def _make_kernel(n_layers, n_filters):
    F = n_filters

    def kernel(x1_ref, w1_ref, wstack_ref, colp_ref, wbig_ref, bias_ref, y_ref):
        # ---- first conv (already im2col'd): (F, K_in) @ (K_in, Bb*L1) + b1
        h = jnp.dot(w1_ref[...], x1_ref[0],
                    precision=HIGHEST, preferred_element_type=jnp.float32)
        h = h + colp_ref[:, 0:1]                                   # + b1 (F,1)

        # ---- hidden layers: 1x1 conv -> folded BN (eval) -> ReLU
        for i in range(n_layers):
            Wi = wstack_ref[i * F:(i + 1) * F, :]                  # (F, F)
            a = jnp.dot(Wi, h, precision=HIGHEST,
                        preferred_element_type=jnp.float32)        # (F, Bb*L1)
            sc = colp_ref[:, 1 + 2 * i:2 + 2 * i]                  # (F, 1)
            sh = colp_ref[:, 2 + 2 * i:3 + 2 * i]                  # (F, 1)
            h = jnp.maximum(a * sc + sh, 0.0)

        # ---- fused 1x1 output conv + Linear head:
        #   Z = h @ blockdiag_Bb(Wo^T)               -> (F, Bb*n_out)
        #   y = wf @ Z + tile(bo + bf*sum_t Wo^T)    -> (1, Bb*n_out)
        z = jnp.dot(h, wbig_ref[...], precision=HIGHEST,
                    preferred_element_type=jnp.float32)
        wf = wstack_ref[n_layers * F:n_layers * F + 1, :]          # (1, F)
        y = jnp.dot(wf, z, precision=HIGHEST,
                    preferred_element_type=jnp.float32) + bias_ref[...]
        y_ref[0] = y

    return kernel


# -----------------------------------------------------------------------------
# Wrapper: JAX glue (im2col, BN folding, head fusion, batch folding) + pallas_call
# -----------------------------------------------------------------------------
def frequency_counting_forward(x, params, cfg, block_batch=None):
    B, L = x.shape
    F = cfg["n_filters"]
    d = cfg["downsampling"]
    K_in = cfg["kernel_in"]
    K = cfg["kernel_size"]
    nL = cfg["n_layers"]
    n_out = cfg["n_output"]

    p1 = K_in - d
    L1 = (L + 2 * p1 - K_in) // d + 1
    Lf = L1 + nL * (K - 1)
    assert Lf == cfg["fr_size"] // d, "module shapes inconsistent (Linear in-dim)"
    # The Linear in-dim constraint forces kernel_size == 1 in any module whose
    # forward type-checks.
    assert K == 1, "kernel_size != 1 never type-checks in the PyTorch module"

    x = x.astype(jnp.float32)

    # ---- batch block size: fill ~256 MXU lanes (multiple of L1) -------------
    if block_batch is None:
        block_batch = max(1, 256 // L1) if L1 < 256 else 1
    Bb = int(block_batch)
    G = -(-B // Bb)            # cdiv
    Bp = G * Bb

    # ---- glue: circular pad + strided im2col for the first conv -------------
    if p1 > 0:
        xpad = jnp.concatenate([x[:, L - p1:], x, x[:, :p1]], axis=1)
    else:
        xpad = x
    gidx = jnp.arange(K_in)[:, None] + (jnp.arange(L1) * d)[None, :]   # (K_in, L1)
    X1 = xpad[:, gidx]                                                  # (B, K_in, L1)
    if Bp > B:
        X1 = jnp.pad(X1, ((0, Bp - B), (0, 0), (0, 0)))
    # fold batch onto lanes (sample-major inside each block): (G, K_in, Bb*L1)
    X1 = X1.reshape(G, Bb, K_in, L1).transpose(0, 2, 1, 3).reshape(G, K_in, Bb * L1)

    # ---- glue: parameter packing (consolidated operands) --------------------
    w1_2d = params["w1"][:, 0, :].astype(jnp.float32)                   # (F, K_in)
    # wstack rows: [W_0, W_1, ..., W_{nL-1}, wf]   (K == 1 so W_i = Wl[i,:,:,0])
    wstack = jnp.concatenate(
        [params["Wl"][i][:, :, 0] for i in range(nL)]
        + [params["wf"][:, :, 0]], axis=0).astype(jnp.float32)          # (nL*F+1, F)
    # per-channel columns: [b1, scale_0, shift_0, scale_1, shift_1, ...]
    scale = params["gamma"] / jnp.sqrt(params["var"] + EPS)             # (nL, F)
    shift = params["beta"] - params["mean"] * scale
    cols = [params["b1"].astype(jnp.float32)[:, None]]
    for i in range(nL):
        cols += [scale[i][:, None], shift[i][:, None]]
    colp = jnp.concatenate(cols, axis=1).astype(jnp.float32)            # (F, 2nL+1)
    # fused head: block-diagonal Wo^T over the batch block + folded bias
    wo_t = params["Wo"].T.astype(jnp.float32)                           # (Lf, n_out)
    wbig = jnp.kron(jnp.eye(Bb, dtype=jnp.float32), wo_t)               # (Bb*Lf, Bb*n_out)
    bo_fused = (params["bo"].astype(jnp.float32)
                + params["bf"].astype(jnp.float32)[0] * wo_t.sum(axis=0))
    bias = jnp.tile(bo_fused[None, :], (1, Bb))                         # (1, Bb*n_out)

    kernel = _make_kernel(nL, F)

    grid_spec = pltpu.PrefetchScalarGridSpec(
        num_scalar_prefetch=0,
        grid=(G,),
        in_specs=[
            pl.BlockSpec((1, K_in, Bb * L1), lambda g: (g, 0, 0)),  # X1 batch block
            pl.BlockSpec((F, K_in), lambda g: (0, 0)),              # conv1 weight
            pl.BlockSpec((nL * F + 1, F), lambda g: (0, 0)),        # hidden Ws + wf
            pl.BlockSpec((F, 2 * nL + 1), lambda g: (0, 0)),        # b1 + BN scale/shift
            pl.BlockSpec((Bb * Lf, Bb * n_out), lambda g: (0, 0)),  # blockdiag(Wo^T)
            pl.BlockSpec((1, Bb * n_out), lambda g: (0, 0)),        # fused bias (tiled)
        ],
        out_specs=pl.BlockSpec((1, 1, Bb * n_out), lambda g: (g, 0, 0)),
    )

    y = pl.pallas_call(
        kernel,
        out_shape=jax.ShapeDtypeStruct((G, 1, Bb * n_out), jnp.float32),
        grid_spec=grid_spec,
        compiler_params=pltpu.CompilerParams(dimension_semantics=("parallel",)),
    )(X1, w1_2d, wstack, colp, wbig, bias)

    return y.reshape(Bp, n_out)[:B]


# -----------------------------------------------------------------------------
# Pure-JAX reference (lax.conv_general_dilated with wrap-padding, all HIGHEST)
# -----------------------------------------------------------------------------
def reference_forward(x, params, cfg):
    d = cfg["downsampling"]
    K_in = cfg["kernel_in"]
    K = cfg["kernel_size"]
    nL = cfg["n_layers"]
    p1 = K_in - d

    inp = x.astype(jnp.float32)[:, None, :]                            # (B, 1, L)
    if p1 > 0:
        inp = jnp.pad(inp, ((0, 0), (0, 0), (p1, p1)), mode="wrap")
    h = jax.lax.conv_general_dilated(
        inp, params["w1"], (d,), "VALID",
        dimension_numbers=("NCH", "OIH", "NCH"), precision=HIGHEST)
    h = h + params["b1"][None, :, None]

    for i in range(nL):
        p = K - 1
        hp = jnp.pad(h, ((0, 0), (0, 0), (p, p)), mode="wrap") if p > 0 else h
        h = jax.lax.conv_general_dilated(
            hp, params["Wl"][i], (1,), "VALID",
            dimension_numbers=("NCH", "OIH", "NCH"), precision=HIGHEST)
        scale = params["gamma"][i] / jnp.sqrt(params["var"][i] + EPS)
        shift = params["beta"][i] - params["mean"][i] * scale
        h = jnp.maximum(h * scale[None, :, None] + shift[None, :, None], 0.0)

    z = jax.lax.conv_general_dilated(
        h, params["wf"], (1,), "VALID",
        dimension_numbers=("NCH", "OIH", "NCH"), precision=HIGHEST)
    z = z + params["bf"][None, :, None]
    z = z.reshape(x.shape[0], -1)
    y = jnp.dot(z, params["Wo"].T, precision=HIGHEST) + params["bo"]
    return y


# -----------------------------------------------------------------------------
# Main
# -----------------------------------------------------------------------------
if __name__ == "__main__":
    # Module hyper-parameters (the module's Linear in-dim constraint forces
    # kernel_size == 1 and downsampling <= kernel_in < 2*downsampling).
    cfg = dict(
        n_output=5,
        n_layers=2,
        n_filters=8,
        kernel_size=1,
        fr_size=64,
        downsampling=2,
        kernel_in=3,
    )
    # B=16 -> 2 batch blocks of 8 (Bb*L1 = 256 lanes per step, grid=2 so both
    # v7x TensorCores get work).
    B = 16
    F = cfg["n_filters"]
    nL = cfg["n_layers"]
    K = cfg["kernel_size"]
    Lf = cfg["fr_size"] // cfg["downsampling"]

    key = jax.random.PRNGKey(0)
    ks = jax.random.split(key, 12)
    params = dict(
        w1=0.3 * jax.random.normal(ks[0], (F, 1, cfg["kernel_in"]), jnp.float32),
        b1=0.1 * jax.random.normal(ks[1], (F,), jnp.float32),
        Wl=0.3 * jax.random.normal(ks[2], (nL, F, F, K), jnp.float32),
        gamma=1.0 + 0.1 * jax.random.normal(ks[3], (nL, F), jnp.float32),
        beta=0.1 * jax.random.normal(ks[4], (nL, F), jnp.float32),
        mean=0.1 * jax.random.normal(ks[5], (nL, F), jnp.float32),
        var=jax.random.uniform(ks[6], (nL, F), jnp.float32, 0.5, 1.5),
        wf=0.3 * jax.random.normal(ks[7], (1, F, 1), jnp.float32),
        bf=0.1 * jax.random.normal(ks[8], (1,), jnp.float32),
        Wo=0.2 * jax.random.normal(ks[9], (cfg["n_output"], Lf), jnp.float32),
        bo=0.1 * jax.random.normal(ks[10], (cfg["n_output"],), jnp.float32),
    )
    x = jax.random.normal(ks[11], (B, cfg["fr_size"]), jnp.float32)

    y_kernel = jax.block_until_ready(frequency_counting_forward(x, params, cfg))
    y_ref = jax.block_until_ready(reference_forward(x, params, cfg))

    assert y_kernel.shape == (B, cfg["n_output"])
    np.testing.assert_allclose(np.asarray(y_kernel), np.asarray(y_ref),
                               rtol=1e-4, atol=1e-4)
    print("KERNEL_OK")
</pallas_src>

<mosaic_0001>
module attributes {stable_mosaic.version = 11 : i64} {
  func.func @kernel(%arg0: i32, %arg1: memref<1x3x256xf32, #tpu.memory_space<vmem>>, %arg2: memref<8x3xf32, #tpu.memory_space<vmem>>, %arg3: memref<17x8xf32, #tpu.memory_space<vmem>>, %arg4: memref<8x5xf32, #tpu.memory_space<vmem>>, %arg5: memref<256x40xf32, #tpu.memory_space<vmem>>, %arg6: memref<1x40xf32, #tpu.memory_space<vmem>>, %arg7: memref<1x1x40xf32, #tpu.memory_space<vmem>>) attributes {dimension_semantics = [#tpu.dimension_semantics<parallel>], iteration_bounds = array<i64: 2>, scalar_prefetch = 0 : i64, scratch_operands = 0 : i64, tpu.core_type = #tpu.core_type<tc>, window_params = [{transform_indices = @transform_0, window_bounds = array<i64: 1, 3, 256>}, {pipeline_mode = #tpu.pipeline_mode<synchronous>, transform_indices = @transform_1, window_bounds = array<i64: 8, 3>}, {pipeline_mode = #tpu.pipeline_mode<synchronous>, transform_indices = @transform_2, window_bounds = array<i64: 17, 8>}, {pipeline_mode = #tpu.pipeline_mode<synchronous>, transform_indices = @transform_3, window_bounds = array<i64: 8, 5>}, {pipeline_mode = #tpu.pipeline_mode<synchronous>, transform_indices = @transform_4, window_bounds = array<i64: 256, 40>}, {pipeline_mode = #tpu.pipeline_mode<synchronous>, transform_indices = @transform_5, window_bounds = array<i64: 1, 40>}, {transform_indices = @transform_6, window_bounds = array<i64: 1, 1, 40>}]} {
    %c0 = arith.constant 0 : index
    %c0_0 = arith.constant 0 : index
    %0 = vector.load %arg2[%c0, %c0_0] : memref<8x3xf32, #tpu.memory_space<vmem>>, vector<8x3xf32>
    %c0_1 = arith.constant 0 : index
    %c0_2 = arith.constant 0 : index
    %c0_3 = arith.constant 0 : index
    %1 = vector.load %arg1[%c0_1, %c0_2, %c0_3] : memref<1x3x256xf32, #tpu.memory_space<vmem>>, vector<1x3x256xf32>
    %2 = vector.shape_cast %1 : vector<1x3x256xf32> to vector<3x256xf32>
    %cst = arith.constant dense<0.000000e+00> : vector<8x256xf32>
    %3 = tpu.matmul %0, %2, %cst {dimension_numbers = #tpu.dot_dimension_numbers<[1], [0], [0], [1], [0, 0, 1, 1], [], []>, precision = #tpu.contract_precision<fp32>} : vector<8x3xf32>, vector<3x256xf32>, vector<8x256xf32> -> vector<8x256xf32>
    %c0_4 = arith.constant 0 : index
    %c0_5 = arith.constant 0 : index
    %4 = vector.load %arg4[%c0_4, %c0_5] : memref<8x5xf32, #tpu.memory_space<vmem>>, vector<8x1xf32>
    %5 = vector.broadcast %4 : vector<8x1xf32> to vector<8x256xf32>
    %6 = arith.addf %3, %5 : vector<8x256xf32>
    %c0_6 = arith.constant 0 : index
    %c0_7 = arith.constant 0 : index
    %7 = vector.load %arg3[%c0_6, %c0_7] : memref<17x8xf32, #tpu.memory_space<vmem>>, vector<8x8xf32>
    %cst_8 = arith.constant dense<0.000000e+00> : vector<8x256xf32>
    %8 = tpu.matmul %7, %6, %cst_8 {dimension_numbers = #tpu.dot_dimension_numbers<[1], [0], [0], [1], [0, 0, 1, 1], [], []>, precision = #tpu.contract_precision<fp32>} : vector<8x8xf32>, vector<8x256xf32>, vector<8x256xf32> -> vector<8x256xf32>
    %c0_9 = arith.constant 0 : index
    %c1 = arith.constant 1 : index
    %9 = vector.load %arg4[%c0_9, %c1] : memref<8x5xf32, #tpu.memory_space<vmem>>, vector<8x1xf32>
    %c0_10 = arith.constant 0 : index
    %c2 = arith.constant 2 : index
    %10 = vector.load %arg4[%c0_10, %c2] : memref<8x5xf32, #tpu.memory_space<vmem>>, vector<8x1xf32>
    %11 = vector.broadcast %9 : vector<8x1xf32> to vector<8x256xf32>
    %12 = arith.mulf %8, %11 : vector<8x256xf32>
    %13 = vector.broadcast %10 : vector<8x1xf32> to vector<8x256xf32>
    %14 = arith.addf %12, %13 : vector<8x256xf32>
    %cst_11 = arith.constant 0.000000e+00 : f32
    %15 = vector.broadcast %cst_11 : f32 to vector<8x256xf32>
    %16 = arith.maximumf %14, %15 : vector<8x256xf32>
    %c8 = arith.constant 8 : index
    %c0_12 = arith.constant 0 : index
    %17 = vector.load %arg3[%c8, %c0_12] : memref<17x8xf32, #tpu.memory_space<vmem>>, vector<8x8xf32>
    %cst_13 = arith.constant dense<0.000000e+00> : vector<8x256xf32>
    %18 = tpu.matmul %17, %16, %cst_13 {dimension_numbers = #tpu.dot_dimension_numbers<[1], [0], [0], [1], [0, 0, 1, 1], [], []>, precision = #tpu.contract_precision<fp32>} : vector<8x8xf32>, vector<8x256xf32>, vector<8x256xf32> -> vector<8x256xf32>
    %c0_14 = arith.constant 0 : index
    %c3 = arith.constant 3 : index
    %19 = vector.load %arg4[%c0_14, %c3] : memref<8x5xf32, #tpu.memory_space<vmem>>, vector<8x1xf32>
    %c0_15 = arith.constant 0 : index
    %c4 = arith.constant 4 : index
    %20 = vector.load %arg4[%c0_15, %c4] : memref<8x5xf32, #tpu.memory_space<vmem>>, vector<8x1xf32>
    %21 = vector.broadcast %19 : vector<8x1xf32> to vector<8x256xf32>
    %22 = arith.mulf %18, %21 : vector<8x256xf32>
    %23 = vector.broadcast %20 : vector<8x1xf32> to vector<8x256xf32>
    %24 = arith.addf %22, %23 : vector<8x256xf32>
    %cst_16 = arith.constant 0.000000e+00 : f32
    %25 = vector.broadcast %cst_16 : f32 to vector<8x256xf32>
    %26 = arith.maximumf %24, %25 : vector<8x256xf32>
    %c0_17 = arith.constant 0 : index
    %c0_18 = arith.constant 0 : index
    %27 = vector.load %arg5[%c0_17, %c0_18] : memref<256x40xf32, #tpu.memory_space<vmem>>, vector<256x40xf32>
    %cst_19 = arith.constant dense<0.000000e+00> : vector<8x40xf32>
    %28 = tpu.matmul %26, %27, %cst_19 {dimension_numbers = #tpu.dot_dimension_numbers<[1], [0], [0], [1], [0, 0, 1, 1], [], []>, precision = #tpu.contract_precision<fp32>} : vector<8x256xf32>, vector<256x40xf32>, vector<8x40xf32> -> vector<8x40xf32>
    %c16 = arith.constant 16 : index
    %c0_20 = arith.constant 0 : index
    %29 = vector.load %arg3[%c16, %c0_20] : memref<17x8xf32, #tpu.memory_space<vmem>>, vector<1x8xf32>
    %cst_21 = arith.constant dense<0.000000e+00> : vector<1x40xf32>
    %30 = tpu.matmul %29, %28, %cst_21 {dimension_numbers = #tpu.dot_dimension_numbers<[1], [0], [0], [1], [0, 0, 1, 1], [], []>, precision = #tpu.contract_precision<fp32>} : vector<1x8xf32>, vector<8x40xf32>, vector<1x40xf32> -> vector<1x40xf32>
    %c0_22 = arith.constant 0 : index
    %c0_23 = arith.constant 0 : index
    %31 = vector.load %arg6[%c0_22, %c0_23] : memref<1x40xf32, #tpu.memory_space<vmem>>, vector<1x40xf32>
    %32 = arith.addf %30, %31 : vector<1x40xf32>
    %c0_24 = arith.constant 0 : index
    %c0_25 = arith.constant 0 : index
    %c0_26 = arith.constant 0 : index
    %33 = vector.load %arg7[%c0_24, %c0_25, %c0_26] : memref<1x1x40xf32, #tpu.memory_space<vmem>>, vector<1x1x40xf32>
    %34 = vector.shape_cast %33 : vector<1x1x40xf32> to vector<1x40xf32>
    %35 = vector.shape_cast %32 : vector<1x40xf32> to vector<1x1x40xf32>
    tpu.vector_store %arg7[%c0_24, %c0_25, %c0_26], %35 {strides = array<i32>} : memref<1x1x40xf32, #tpu.memory_space<vmem>>, vector<1x1x40xf32>,
    return
  }
  func.func @transform_0(%arg0: i32) -> (i32, i32, i32) {
    %c0_i32 = arith.constant 0 : i32
    %c0_i32_0 = arith.constant 0 : i32
    %c0_i32_1 = arith.constant 0 : i32
    return %arg0, %c0_i32, %c0_i32_0 : i32, i32, i32
  }
  func.func @transform_1(%arg0: i32) -> (i32, i32) {
    %c0_i32 = arith.constant 0 : i32
    %c0_i32_0 = arith.constant 0 : i32
    %c0_i32_1 = arith.constant 0 : i32
    return %c0_i32, %c0_i32_0 : i32, i32
  }
  func.func @transform_2(%arg0: i32) -> (i32, i32) {
    %c0_i32 = arith.constant 0 : i32
    %c0_i32_0 = arith.constant 0 : i32
    %c0_i32_1 = arith.constant 0 : i32
    return %c0_i32, %c0_i32_0 : i32, i32
  }
  func.func @transform_3(%arg0: i32) -> (i32, i32) {
    %c0_i32 = arith.constant 0 : i32
    %c0_i32_0 = arith.constant 0 : i32
    %c0_i32_1 = arith.constant 0 : i32
    return %c0_i32, %c0_i32_0 : i32, i32
  }
  func.func @transform_4(%arg0: i32) -> (i32, i32) {
    %c0_i32 = arith.constant 0 : i32
    %c0_i32_0 = arith.constant 0 : i32
    %c0_i32_1 = arith.constant 0 : i32
    return %c0_i32, %c0_i32_0 : i32, i32
  }
  func.func @transform_5(%arg0: i32) -> (i32, i32) {
    %c0_i32 = arith.constant 0 : i32
    %c0_i32_0 = arith.constant 0 : i32
    %c0_i32_1 = arith.constant 0 : i32
    return %c0_i32, %c0_i32_0 : i32, i32
  }
  func.func @transform_6(%arg0: i32) -> (i32, i32, i32) {
    %c0_i32 = arith.constant 0 : i32
    %c0_i32_0 = arith.constant 0 : i32
    %c0_i32_1 = arith.constant 0 : i32
    return %arg0, %c0_i32, %c0_i32_0 : i32, i32, i32
  }
}

</mosaic_0001>

<llo_original>
// kernel: tpu_custom_call.1
$region0: #{tpu_custom_call.1}
  #allocation0 [shape = 'u32[]', space=smem, size = 0x4, offset = 0x4, fixed_abs, tag = 'smem constant byte address 0x4 - core index']
  #allocation1 [shape = 'u32[144,128]{1,0:T(1,128)}', space=vmem, size = 0x12000, scoped, tag = 'internal scratch']
  %s0 = inlined_call_operand.vmem [shape: f32[2,3,256], index: 0, kind: input, shape index: {}]
  %s1 = inlined_call_operand.vmem [shape: f32[8,3], index: 1, kind: input, shape index: {}]
  %s2 = inlined_call_operand.vmem [shape: f32[17,8], index: 2, kind: input, shape index: {}]
  %s3 = inlined_call_operand.vmem [shape: f32[8,5], index: 3, kind: input, shape index: {}]
  %s4 = inlined_call_operand.vmem [shape: f32[256,40], index: 4, kind: input, shape index: {}]
  %s5 = inlined_call_operand.vmem [shape: f32[1,40], index: 5, kind: input, shape index: {}]
  %s6 = inlined_call_operand.hbm [shape: f32[2,1,40], index: 6, kind: output, shape index: {}]
  %s7 = sld [smem:[#allocation0]]
  $region57: #{tpu_custom_call.1} parent=0
    _
  %s9 = ssub.s32 1, %s7
  %s10 = scalar_select 0, %s9, %s7
  $region1: #{tpu_custom_call.1} parent=0
    #allocation2 [shape = 'u8[1024]{0}', space=vmem, size = 0x400, scoped, tag = 'output window, operand 0']
    #allocation3 [shape = 's32[2]{0}', space=sflag, size = 0x8, scoped, tag = 'scoped memory for tpu_custom_call.1']
    %11 = vsyncpa [#allocation3], 0
    %s12 = scalar_lea.sflag [#allocation3], 1
    %13 = vsyncpa %s12, 0
    loop: start=0, step=1, limit=4
    $region2: #{tpu_custom_call.1} parent=1 // loop_pre_header
      _
    $region3: #{tpu_custom_call.1} parent=1 // loop_header
      %s15 = sphi 0, %s19
      %p16 = scmp.ge.s32.totalorder %s15, 4
      %s25 = sphi 0, %s27
      %s28 = sphi 0, %s25
      %s29 = sphi 0, %s28
      %s45 = sphi 0, %s29
      %s49 = sphi 0, %s49
      %s51 = sphi 0, %s49
      %s52 = sphi 0, %s51
      %s66 = sphi 0, %s52
      %s70 = sphi 0, %s70
      %s72 = sphi 0, %s70
      %s73 = sphi 0, %s72
      %s87 = sphi 0, %s73
      %s91 = sphi 0, %s91
      %s93 = sphi 0, %s91
      %s94 = sphi 0, %s93
      %s108 = sphi 0, %s94
      %s112 = sphi 0, %s112
      %s114 = sphi 0, %s112
      %s115 = sphi 0, %s114
      %s129 = sphi 0, %s115
      %s133 = sphi 0, %s133
      %s135 = sphi 0, %s133
      %s136 = sphi 0, %s135
      %s150 = sphi 0, %s136
      %s156 = sphi 0, %s158
      %s159 = sphi 0, %s156
      %s160 = sphi 0, %s159
      %s176 = sphi 0, %s160
    $region4: #{tpu_custom_call.1} parent=1 // loop_header_branch
      %18 = sbr.rel (%p16) target = $region8
    $region5: #{tpu_custom_call.1} parent=1 // loop_body
      %s20 = ssub.s32 %s15, 1
      %s21 = ssub.s32 %s15, 2
      %s22 = sadd.s32 %s15, 1
      %s23 = ssub.s32 %s15, %s22
      %p24 = scmp.eq.s32.totalorder %s23, 0
      %s26 = sadd.s32 %s25, 1
      %s27 = scalar_select %p24, %s25, %s26
      %p30 = pneg %p24
      %p31 = scmp.eq.s32.totalorder %s15, 1
      %p32 = por %p30, %p31
      %p33 = scmp.ne.s32.totalorder %s25, %s28
      %p34 = scmp.eq.s32.totalorder %s15, 0
      %p35 = por %p33, %p34
      %p36 = scmp.ne.s32.totalorder %s25, %s28
      %p37 = scmp.eq.s32.totalorder %s20, 1
      %p38 = por %p36, %p37
      %p39 = scmp.ne.s32.totalorder %s28, %s29
      %p40 = scmp.eq.s32.totalorder %s20, 0
      %p41 = por %p39, %p40
      %p42 = scmp.ne.s32.totalorder %s28, %s29
      %p43 = scmp.eq.s32.totalorder %s21, 1
      %p44 = por %p42, %p43
      %p46 = scmp.ne.s32.totalorder %s29, %s45
      %p47 = scmp.eq.s32.totalorder %s21, 0
      %p48 = por %p46, %p47
      %s50 = sadd.s32 %s49, 1
      %p53 = scmp.eq.s32.totalorder %s15, 1
      %p54 = scmp.ne.s32.totalorder %s49, %s51
      %p55 = scmp.eq.s32.totalorder %s15, 0
      %p56 = por %p54, %p55
      %p57 = scmp.ne.s32.totalorder %s49, %s51
      %p58 = scmp.eq.s32.totalorder %s20, 1
      %p59 = por %p57, %p58
      %p60 = scmp.ne.s32.totalorder %s51, %s52
      %p61 = scmp.eq.s32.totalorder %s20, 0
      %p62 = por %p60, %p61
      %p63 = scmp.ne.s32.totalorder %s51, %s52
      %p64 = scmp.eq.s32.totalorder %s21, 1
      %p65 = por %p63, %p64
      %p67 = scmp.ne.s32.totalorder %s52, %s66
      %p68 = scmp.eq.s32.totalorder %s21, 0
      %p69 = por %p67, %p68
      %s71 = sadd.s32 %s70, 1
      %p74 = scmp.eq.s32.totalorder %s15, 1
      %p75 = scmp.ne.s32.totalorder %s70, %s72
      %p76 = scmp.eq.s32.totalorder %s15, 0
      %p77 = por %p75, %p76
      %p78 = scmp.ne.s32.totalorder %s70, %s72
      %p79 = scmp.eq.s32.totalorder %s20, 1
      %p80 = por %p78, %p79
      %p81 = scmp.ne.s32.totalorder %s72, %s73
      %p82 = scmp.eq.s32.totalorder %s20, 0
      %p83 = por %p81, %p82
      %p84 = scmp.ne.s32.totalorder %s72, %s73
      %p85 = scmp.eq.s32.totalorder %s21, 1
      %p86 = por %p84, %p85
      %p88 = scmp.ne.s32.totalorder %s73, %s87
      %p89 = scmp.eq.s32.totalorder %s21, 0
      %p90 = por %p88, %p89
      %s92 = sadd.s32 %s91, 1
      %p95 = scmp.eq.s32.totalorder %s15, 1
      %p96 = scmp.ne.s32.totalorder %s91, %s93
      %p97 = scmp.eq.s32.totalorder %s15, 0
      %p98 = por %p96, %p97
      %p99 = scmp.ne.s32.totalorder %s91, %s93
      %p100 = scmp.eq.s32.totalorder %s20, 1
      %p101 = por %p99, %p100
      %p102 = scmp.ne.s32.totalorder %s93, %s94
      %p103 = scmp.eq.s32.totalorder %s20, 0
      %p104 = por %p102, %p103
      %p105 = scmp.ne.s32.totalorder %s93, %s94
      %p106 = scmp.eq.s32.totalorder %s21, 1
      %p107 = por %p105, %p106
      %p109 = scmp.ne.s32.totalorder %s94, %s108
      %p110 = scmp.eq.s32.totalorder %s21, 0
      %p111 = por %p109, %p110
      %s113 = sadd.s32 %s112, 1
      %p116 = scmp.eq.s32.totalorder %s15, 1
      %p117 = scmp.ne.s32.totalorder %s112, %s114
      %p118 = scmp.eq.s32.totalorder %s15, 0
      %p119 = por %p117, %p118
      %p120 = scmp.ne.s32.totalorder %s112, %s114
      %p121 = scmp.eq.s32.totalorder %s20, 1
      %p122 = por %p120, %p121
      %p123 = scmp.ne.s32.totalorder %s114, %s115
      %p124 = scmp.eq.s32.totalorder %s20, 0
      %p125 = por %p123, %p124
      %p126 = scmp.ne.s32.totalorder %s114, %s115
      %p127 = scmp.eq.s32.totalorder %s21, 1
      %p128 = por %p126, %p127
      %p130 = scmp.ne.s32.totalorder %s115, %s129
      %p131 = scmp.eq.s32.totalorder %s21, 0
      %p132 = por %p130, %p131
      %s134 = sadd.s32 %s133, 1
      %p137 = scmp.eq.s32.totalorder %s15, 1
      %p138 = scmp.ne.s32.totalorder %s133, %s135
      %p139 = scmp.eq.s32.totalorder %s15, 0
      %p140 = por %p138, %p139
      %p141 = scmp.ne.s32.totalorder %s133, %s135
      %p142 = scmp.eq.s32.totalorder %s20, 1
      %p143 = por %p141, %p142
      %p144 = scmp.ne.s32.totalorder %s135, %s136
      %p145 = scmp.eq.s32.totalorder %s20, 0
      %p146 = por %p144, %p145
      %p147 = scmp.ne.s32.totalorder %s135, %s136
      %p148 = scmp.eq.s32.totalorder %s21, 1
      %p149 = por %p147, %p148
      %p151 = scmp.ne.s32.totalorder %s136, %s150
      %p152 = scmp.eq.s32.totalorder %s21, 0
      %p153 = por %p151, %p152
      %s154 = ssub.s32 %s15, %s22
      %p155 = scmp.eq.s32.totalorder %s154, 0
      %s157 = sadd.s32 %s156, 1
      %s158 = scalar_select %p155, %s156, %s157
      %p161 = pneg %p155
      %p162 = scmp.eq.s32.totalorder %s15, 1
      %p163 = por %p161, %p162
      %p164 = scmp.ne.s32.totalorder %s156, %s159
      %p165 = scmp.eq.s32.totalorder %s15, 0
      %p166 = por %p164, %p165
      %p167 = scmp.ne.s32.totalorder %s156, %s159
      %p168 = scmp.eq.s32.totalorder %s20, 1
      %p169 = por %p167, %p168
      %p170 = scmp.ne.s32.totalorder %s159, %s160
      %p171 = scmp.eq.s32.totalorder %s20, 0
      %p172 = por %p170, %p171
      %p173 = scmp.ne.s32.totalorder %s159, %s160
      %p174 = scmp.eq.s32.totalorder %s21, 1
      %p175 = por %p173, %p174
      %p177 = scmp.ne.s32.totalorder %s160, %s176
      %p178 = scmp.eq.s32.totalorder %s21, 0
      %p179 = por %p177, %p178
      %p180 = scmp.le.s32.totalorder 1, %s15
      %p181 = scmp.lt.s32.totalorder %s15, 3
      %p182 = pnand %p180, %p181
      %p183 = pneg %p182
      // Predicated region
      $region9: #{tpu_custom_call.1} parent=5 // pred_check
        _
      $region10: #{tpu_custom_call.1} parent=5 // pred_check_branch
        %185 = sbr.rel (%p182) target = $region12
      $region11: #{tpu_custom_call.1} parent=5 // pred_region
        %s186 = ssub.s32 %s15, 1
        // Predicated region
        $region13: #{tpu_custom_call.1} parent=11 // pred_check
          %p187 = pneg %p62
        $region14: #{tpu_custom_call.1} parent=11 // pred_check_branch
          %189 = sbr.rel (%p187) target = $region16
        $region15: #{tpu_custom_call.1} parent=11 // pred_region
          _
        $region16: #{tpu_custom_call.1} parent=11 // pred_fallthru
          _
        // Predicated region
        $region17: #{tpu_custom_call.1} parent=11 // pred_check
          %p190 = pneg %p83
        $region18: #{tpu_custom_call.1} parent=11 // pred_check_branch
          %192 = sbr.rel (%p190) target = $region20
        $region19: #{tpu_custom_call.1} parent=11 // pred_region
          _
        $region20: #{tpu_custom_call.1} parent=11 // pred_fallthru
          _
        // Predicated region
        $region21: #{tpu_custom_call.1} parent=11 // pred_check
          %p193 = pneg %p104
        $region22: #{tpu_custom_call.1} parent=11 // pred_check_branch
          %195 = sbr.rel (%p193) target = $region24
        $region23: #{tpu_custom_call.1} parent=11 // pred_region
          _
        $region24: #{tpu_custom_call.1} parent=11 // pred_fallthru
          _
        // Predicated region
        $region25: #{tpu_custom_call.1} parent=11 // pred_check
          %p196 = pneg %p125
        $region26: #{tpu_custom_call.1} parent=11 // pred_check_branch
          %198 = sbr.rel (%p196) target = $region28
        $region27: #{tpu_custom_call.1} parent=11 // pred_region
          _
        $region28: #{tpu_custom_call.1} parent=11 // pred_fallthru
          _
        // Predicated region
        $region29: #{tpu_custom_call.1} parent=11 // pred_check
          %p199 = pneg %p146
        $region30: #{tpu_custom_call.1} parent=11 // pred_check_branch
          %201 = sbr.rel (%p199) target = $region32
        $region31: #{tpu_custom_call.1} parent=11 // pred_region
          _
        $region32: #{tpu_custom_call.1} parent=11 // pred_fallthru
          _
      $region12: #{tpu_custom_call.1} parent=5 // pred_fallthru
        _
      %p202 = scmp.lt.s32.totalorder %s15, 2
      // Predicated region
      $region33: #{tpu_custom_call.1} parent=5 // pred_check
        %p203 = pneg %p202
      $region34: #{tpu_custom_call.1} parent=5 // pred_check_branch
        %205 = sbr.rel (%p203) target = $region36
      $region35: #{tpu_custom_call.1} parent=5 // pred_region
        // Predicated region
        $region37: #{tpu_custom_call.1} parent=35 // pred_check
          %p206 = pneg %p35
        $region38: #{tpu_custom_call.1} parent=35 // pred_check_branch
          %208 = sbr.rel (%p206) target = $region40
        $region39: #{tpu_custom_call.1} parent=35 // pred_region
          %p209 = scmp.lt.s32.totalorder %s15, 1
          %s210 = scalar_select %p209, %s15, 1
          %s211 = smul.addr %s210, 2
          %s212 = smul.addr %s211, 4
          %s213 = scalar_lea.vmem %s0, %s212
        $region40: #{tpu_custom_call.1} parent=35 // pred_fallthru
          _
      $region36: #{tpu_custom_call.1} parent=5 // pred_fallthru
        _
      %p214 = scmp.le.s32.totalorder 1, %s15
      %p215 = scmp.lt.s32.totalorder %s15, 3
      %p216 = pnand %p214, %p215
      %p217 = pneg %p216
      // Predicated region
      $region41: #{tpu_custom_call.1} parent=5 // pred_check
        _
      $region42: #{tpu_custom_call.1} parent=5 // pred_check_branch
        %219 = sbr.rel (%p216) target = $region44
      $region43: #{tpu_custom_call.1} parent=5 // pred_region
        %s220 = ssub.s32 %s15, 1
        %p221 = scmp.lt.s32.totalorder %s20, 1
        %s222 = scalar_select %p221, %s20, 1
        %s223 = smul.addr %s222, 2
        %s224 = smul.addr %s223, 4
        %s225 = scalar_lea.vmem %s0, %s224
        %p226 = pneg %p41
        %p227 = pneg %p38
        %p228 = pneg %p62
        %p229 = pneg %p59
        %p230 = pneg %p83
        %p231 = pneg %p80
        %p232 = pneg %p104
        %p233 = pneg %p101
        %p234 = pneg %p125
        %p235 = pneg %p122
        %p236 = pneg %p146
        %p237 = pneg %p143
        %p238 = pneg %p172
        %p239 = pneg %p169
        %s240 = sand.u32 %s159, 1
        %s241 = scalar_lea.sflag [#allocation3], %s240
        %s242 = sand.u32 %s159, 1
        %s243 = scalar_lea.vmem [#allocation2], %s242
        %p244 = scmp.lt.s32.totalorder %s20, 1
        %s245 = scalar_select %p244, %s20, 1
        %s246 = smul.addr %s245, 2
        %s247 = smul.addr %s246, 4
        %s248 = scalar_lea.vmem %s0, %s247
        %v249 = vld [vmem:[%s1] sm:$0xff]
        %v250 = vld [vmem:[%s248] sm:$0x77]
        %v251 = vld [vmem:[%s3] sm:$0xff]
        %253 = vset.pattern.permute.xlu0 0
        %254 = vperm.xlu0 %253, %v251
        %v255 = vpop.permute.xlu0 %254
        %v258 = vcombine.high %v250, %v250
        %vm259 = vcmask 23552
        %v261 = vsel %vm259, %v249, 0
        %vm263 = vcmask 1042432
        %v264 = vsel %vm263, %v250, 0
        %v266 = vsel %vm263, %v258, 0
        %268 = vmatprep.subr.mxu0 0.0
        %269 = vmatpush1.msra.mxu0 0.0
        %270 = vmatprep.subr.mxu0 0.0
        %271 = vmatpush1.msra.mxu0 0.0
        %272 = vmatprep.subr.mxu0 0.0
        %273 = vmatpush1.msra.mxu0 0.0
        %274 = vmatprep.subr.mxu0 0.0
        %275 = vmatpush1.msra.mxu0 0.0
        %276 = vmatprep.subr.mxu0 0.0
        %277 = vmatpush1.msra.mxu0 0.0
        %278 = vmatprep.subr.mxu0 0.0
        %279 = vmatpush1.msra.mxu0 0.0
        %280 = vmatprep.subr.mxu0 0.0
        %281 = vmatpush1.msra.mxu0 0.0
        %282 = vmatprep.subr.mxu0 0.0
        %283 = vmatpush1.msra.mxu0 0.0
        %284 = vmatprep.subr.mxu0 0.0
        %285 = vmatpush1.msra.mxu0 0.0
        %286 = vmatprep.subr.mxu0 0.0
        %287 = vmatpush1.msra.mxu0 0.0
        %288 = vmatprep.subr.mxu0 0.0
        %289 = vmatpush1.msra.mxu0 0.0
        %290 = vmatprep.subr.mxu0 0.0
        %291 = vmatpush1.msra.mxu0 0.0
        %292 = vmatprep.subr.mxu0 0.0
        %293 = vmatpush1.msra.mxu0 0.0
        %294 = vmatprep.subr.mxu0 0.0
        %295 = vmatpush1.msra.mxu0 0.0
        %296 = vmatprep.subr.mxu0 0.0
        %297 = vmatpush1.msra.mxu0 0.0
        %v298 = vand.u32 %v266, 4294901760
        %299 = vmatprep.subr.mxu0 %v298
        %v300 = vand.u32 %v264, 4294901760
        %301 = vmatpush1.msra.mxu0 %v300
        %302 = vmatprep.subr.mxu0 0.0
        %303 = vmatpush2.msra.mxu0 0.0
        %304 = vmatprep.subr.mxu0 0.0
        %305 = vmatpush2.msra.mxu0 0.0
        %306 = vmatprep.subr.mxu0 0.0
        %307 = vmatpush2.msra.mxu0 0.0
        %308 = vmatprep.subr.mxu0 0.0
        %309 = vmatpush2.msra.mxu0 0.0
        %310 = vmatprep.subr.mxu0 0.0
        %311 = vmatpush2.msra.mxu0 0.0
        %312 = vmatprep.subr.mxu0 0.0
        %313 = vmatpush2.msra.mxu0 0.0
        %314 = vmatprep.subr.mxu0 0.0
        %315 = vmatpush2.msra.mxu0 0.0
        %316 = vmatprep.subr.mxu0 0.0
        %317 = vmatpush2.msra.mxu0 0.0
        %318 = vmatprep.subr.mxu0 0.0
        %319 = vmatpush2.msra.mxu0 0.0
        %320 = vmatprep.subr.mxu0 0.0
        %321 = vmatpush2.msra.mxu0 0.0
        %322 = vmatprep.subr.mxu0 0.0
        %323 = vmatpush2.msra.mxu0 0.0
        %324 = vmatprep.subr.mxu0 0.0
        %325 = vmatpush2.msra.mxu0 0.0
        %326 = vmatprep.subr.mxu0 0.0
        %327 = vmatpush2.msra.mxu0 0.0
        %328 = vmatprep.subr.mxu0 0.0
        %329 = vmatpush2.msra.mxu0 0.0
        %330 = vmatprep.subr.mxu0 0.0
        %331 = vmatpush2.msra.mxu0 0.0
        %332 = vmatprep.subr.mxu0 0.0
        %333 = vmatpush2.msra.mxu0 0.0
        %334 = vmatprep.mubr.f32.mxu0 0.0
        %v335 = vand.u32 %v261, 4294901760
        %v336 = vsub.f32 %v261, %v335
        %v337 = vand.u32 %v336, 4294901760
        %v338 = vsub.f32 %v336, %v337
        %v339 = vand.u32 %v338, 4294901760
        %340 = vmatmul.mubr.f32.gmra.mxu0 %v339
        %v341 = vpop.f32.mrf.mxu0
        %v342 = vadd.f32 %v255, %v341
        %v343 = vpop.f32.mrf.mxu0
        %v344 = vadd.f32 %v255, %v343
        %345 = vdwg.mxu0
        %346 = vmatprep.subr.mxu0 0.0
        %347 = vmatpush1.msra.mxu0 0.0
        %348 = vmatprep.subr.mxu0 0.0
        %349 = vmatpush1.msra.mxu0 0.0
        %350 = vmatprep.subr.mxu0 0.0
        %351 = vmatpush1.msra.mxu0 0.0
        %352 = vmatprep.subr.mxu0 0.0
        %353 = vmatpush1.msra.mxu0 0.0
        %354 = vmatprep.subr.mxu0 0.0
        %355 = vmatpush1.msra.mxu0 0.0
        %356 = vmatprep.subr.mxu0 0.0
        %357 = vmatpush1.msra.mxu0 0.0
        %358 = vmatprep.subr.mxu0 0.0
        %359 = vmatpush1.msra.mxu0 0.0
        %360 = vmatprep.subr.mxu0 0.0
        %361 = vmatpush1.msra.mxu0 0.0
        %362 = vmatprep.subr.mxu0 0.0
        %363 = vmatpush1.msra.mxu0 0.0
        %364 = vmatprep.subr.mxu0 0.0
        %365 = vmatpush1.msra.mxu0 0.0
        %366 = vmatprep.subr.mxu0 0.0
        %367 = vmatpush1.msra.mxu0 0.0
        %368 = vmatprep.subr.mxu0 0.0
        %369 = vmatpush1.msra.mxu0 0.0
        %370 = vmatprep.subr.mxu0 0.0
        %371 = vmatpush1.msra.mxu0 0.0
        %372 = vmatprep.subr.mxu0 0.0
        %373 = vmatpush1.msra.mxu0 0.0
        %374 = vmatprep.subr.mxu0 0.0
        %375 = vmatpush1.msra.mxu0 0.0
        %v376 = vand.u32 %v266, 4294901760
        %v377 = vsub.f32 %v266, %v376
        %v378 = vand.u32 %v377, 4294901760
        %v379 = vsub.f32 %v377, %v378
        %v380 = vand.u32 %v379, 4294901760
        %381 = vmatprep.subr.mxu0 %v380
        %v382 = vand.u32 %v264, 4294901760
        %v383 = vsub.f32 %v264, %v382
        %v384 = vand.u32 %v383, 4294901760
        %v385 = vsub.f32 %v383, %v384
        %v386 = vand.u32 %v385, 4294901760
        %387 = vmatpush1.msra.mxu0 %v386
        %388 = vmatprep.subr.mxu0 0.0
        %389 = vmatpush2.msra.mxu0 0.0
        %390 = vmatprep.subr.mxu0 0.0
        %391 = vmatpush2.msra.mxu0 0.0
        %392 = vmatprep.subr.mxu0 0.0
        %393 = vmatpush2.msra.mxu0 0.0
        %394 = vmatprep.subr.mxu0 0.0
        %395 = vmatpush2.msra.mxu0 0.0
        %396 = vmatprep.subr.mxu0 0.0
        %397 = vmatpush2.msra.mxu0 0.0
        %398 = vmatprep.subr.mxu0 0.0
        %399 = vmatpush2.msra.mxu0 0.0
        %400 = vmatprep.subr.mxu0 0.0
        %401 = vmatpush2.msra.mxu0 0.0
        %402 = vmatprep.subr.mxu0 0.0
        %403 = vmatpush2.msra.mxu0 0.0
        %404 = vmatprep.subr.mxu0 0.0
        %405 = vmatpush2.msra.mxu0 0.0
        %406 = vmatprep.subr.mxu0 0.0
        %407 = vmatpush2.msra.mxu0 0.0
        %408 = vmatprep.subr.mxu0 0.0
        %409 = vmatpush2.msra.mxu0 0.0
        %410 = vmatprep.subr.mxu0 0.0
        %411 = vmatpush2.msra.mxu0 0.0
        %412 = vmatprep.subr.mxu0 0.0
        %413 = vmatpush2.msra.mxu0 0.0
        %414 = vmatprep.subr.mxu0 0.0
        %415 = vmatpush2.msra.mxu0 0.0
        %416 = vmatprep.subr.mxu0 0.0
        %417 = vmatpush2.msra.mxu0 0.0
        %418 = vmatprep.subr.mxu0 0.0
        %419 = vmatpush2.msra.mxu0 0.0
        %420 = vmatprep.mubr.f32.mxu0 0.0
        %v421 = vand.u32 %v261, 4294901760
        %422 = vmatmul.mubr.f32.gmra.mxu0 %v421
        %v423 = vpop.f32.mrf.mxu0
        %v424 = vadd.f32 %v342, %v423
        %v425 = vpop.f32.mrf.mxu0
        %v426 = vadd.f32 %v344, %v425
        %427 = vdwg.mxu0
        %428 = vmatprep.subr.mxu0 0.0
        %429 = vmatpush1.msra.mxu0 0.0
        %430 = vmatprep.subr.mxu0 0.0
        %431 = vmatpush1.msra.mxu0 0.0
        %432 = vmatprep.subr.mxu0 0.0
        %433 = vmatpush1.msra.mxu0 0.0
        %434 = vmatprep.subr.mxu0 0.0
        %435 = vmatpush1.msra.mxu0 0.0
        %436 = vmatprep.subr.mxu0 0.0
        %437 = vmatpush1.msra.mxu0 0.0
        %438 = vmatprep.subr.mxu0 0.0
        %439 = vmatpush1.msra.mxu0 0.0
        %440 = vmatprep.subr.mxu0 0.0
        %441 = vmatpush1.msra.mxu0 0.0
        %442 = vmatprep.subr.mxu0 0.0
        %443 = vmatpush1.msra.mxu0 0.0
        %444 = vmatprep.subr.mxu0 0.0
        %445 = vmatpush1.msra.mxu0 0.0
        %446 = vmatprep.subr.mxu0 0.0
        %447 = vmatpush1.msra.mxu0 0.0
        %448 = vmatprep.subr.mxu0 0.0
        %449 = vmatpush1.msra.mxu0 0.0
        %450 = vmatprep.subr.mxu0 0.0
        %451 = vmatpush1.msra.mxu0 0.0
        %452 = vmatprep.subr.mxu0 0.0
        %453 = vmatpush1.msra.mxu0 0.0
        %454 = vmatprep.subr.mxu0 0.0
        %455 = vmatpush1.msra.mxu0 0.0
        %456 = vmatprep.subr.mxu0 0.0
        %457 = vmatpush1.msra.mxu0 0.0
        %v458 = vand.u32 %v266, 4294901760
        %v459 = vsub.f32 %v266, %v458
        %460 = vmatprep.subr.mxu0 %v459
        %v461 = vand.u32 %v264, 4294901760
        %v462 = vsub.f32 %v264, %v461
        %463 = vmatpush1.msra.mxu0 %v462
        %464 = vmatprep.subr.mxu0 0.0
        %465 = vmatpush2.msra.mxu0 0.0
        %466 = vmatprep.subr.mxu0 0.0
        %467 = vmatpush2.msra.mxu0 0.0
        %468 = vmatprep.subr.mxu0 0.0
        %469 = vmatpush2.msra.mxu0 0.0
        %470 = vmatprep.subr.mxu0 0.0
        %471 = vmatpush2.msra.mxu0 0.0
        %472 = vmatprep.subr.mxu0 0.0
        %473 = vmatpush2.msra.mxu0 0.0
        %474 = vmatprep.subr.mxu0 0.0
        %475 = vmatpush2.msra.mxu0 0.0
        %476 = vmatprep.subr.mxu0 0.0
        %477 = vmatpush2.msra.mxu0 0.0
        %478 = vmatprep.subr.mxu0 0.0
        %479 = vmatpush2.msra.mxu0 0.0
        %480 = vmatprep.subr.mxu0 0.0
        %481 = vmatpush2.msra.mxu0 0.0
        %482 = vmatprep.subr.mxu0 0.0
        %483 = vmatpush2.msra.mxu0 0.0
        %484 = vmatprep.subr.mxu0 0.0
        %485 = vmatpush2.msra.mxu0 0.0
        %486 = vmatprep.subr.mxu0 0.0
        %487 = vmatpush2.msra.mxu0 0.0
        %488 = vmatprep.subr.mxu0 0.0
        %489 = vmatpush2.msra.mxu0 0.0
        %490 = vmatprep.subr.mxu0 0.0
        %491 = vmatpush2.msra.mxu0 0.0
        %492 = vmatprep.subr.mxu0 0.0
        %493 = vmatpush2.msra.mxu0 0.0
        %494 = vmatprep.subr.mxu0 0.0
        %495 = vmatpush2.msra.mxu0 0.0
        %496 = vmatprep.mubr.f32.mxu0 0.0
        %v497 = vand.u32 %v261, 4294901760
        %v498 = vsub.f32 %v261, %v497
        %499 = vmatmul.mubr.f32.gmra.mxu0 %v498
        %v500 = vpop.f32.mrf.mxu0
        %v501 = vadd.f32 %v424, %v500
        %v502 = vpop.f32.mrf.mxu0
        %v503 = vadd.f32 %v426, %v502
        %504 = vdwg.mxu0
        %505 = vmatprep.subr.mxu0 0.0
        %506 = vmatpush1.msra.mxu0 0.0
        %507 = vmatprep.subr.mxu0 0.0
        %508 = vmatpush1.msra.mxu0 0.0
        %509 = vmatprep.subr.mxu0 0.0
        %510 = vmatpush1.msra.mxu0 0.0
        %511 = vmatprep.subr.mxu0 0.0
        %512 = vmatpush1.msra.mxu0 0.0
        %513 = vmatprep.subr.mxu0 0.0
        %514 = vmatpush1.msra.mxu0 0.0
        %515 = vmatprep.subr.mxu0 0.0
        %516 = vmatpush1.msra.mxu0 0.0
        %517 = vmatprep.subr.mxu0 0.0
        %518 = vmatpush1.msra.mxu0 0.0
        %519 = vmatprep.subr.mxu0 0.0
        %520 = vmatpush1.msra.mxu0 0.0
        %521 = vmatprep.subr.mxu0 0.0
        %522 = vmatpush1.msra.mxu0 0.0
        %523 = vmatprep.subr.mxu0 0.0
        %524 = vmatpush1.msra.mxu0 0.0
        %525 = vmatprep.subr.mxu0 0.0
        %526 = vmatpush1.msra.mxu0 0.0
        %527 = vmatprep.subr.mxu0 0.0
        %528 = vmatpush1.msra.mxu0 0.0
        %529 = vmatprep.subr.mxu0 0.0
        %530 = vmatpush1.msra.mxu0 0.0
        %531 = vmatprep.subr.mxu0 0.0
        %532 = vmatpush1.msra.mxu0 0.0
        %533 = vmatprep.subr.mxu0 0.0
        %534 = vmatpush1.msra.mxu0 0.0
        %v535 = vand.u32 %v266, 4294901760
        %536 = vmatprep.subr.mxu0 %v535
        %v537 = vand.u32 %v264, 4294901760
        %538 = vmatpush1.msra.mxu0 %v537
        %539 = vmatprep.subr.mxu0 0.0
        %540 = vmatpush2.msra.mxu0 0.0
        %541 = vmatprep.subr.mxu0 0.0
        %542 = vmatpush2.msra.mxu0 0.0
        %543 = vmatprep.subr.mxu0 0.0
        %544 = vmatpush2.msra.mxu0 0.0
        %545 = vmatprep.subr.mxu0 0.0
        %546 = vmatpush2.msra.mxu0 0.0
        %547 = vmatprep.subr.mxu0 0.0
        %548 = vmatpush2.msra.mxu0 0.0
        %549 = vmatprep.subr.mxu0 0.0
        %550 = vmatpush2.msra.mxu0 0.0
        %551 = vmatprep.subr.mxu0 0.0
        %552 = vmatpush2.msra.mxu0 0.0
        %553 = vmatprep.subr.mxu0 0.0
        %554 = vmatpush2.msra.mxu0 0.0
        %555 = vmatprep.subr.mxu0 0.0
        %556 = vmatpush2.msra.mxu0 0.0
        %557 = vmatprep.subr.mxu0 0.0
        %558 = vmatpush2.msra.mxu0 0.0
        %559 = vmatprep.subr.mxu0 0.0
        %560 = vmatpush2.msra.mxu0 0.0
        %561 = vmatprep.subr.mxu0 0.0
        %562 = vmatpush2.msra.mxu0 0.0
        %563 = vmatprep.subr.mxu0 0.0
        %564 = vmatpush2.msra.mxu0 0.0
        %565 = vmatprep.subr.mxu0 0.0
        %566 = vmatpush2.msra.mxu0 0.0
        %567 = vmatprep.subr.mxu0 0.0
        %568 = vmatpush2.msra.mxu0 0.0
        %569 = vmatprep.subr.mxu0 0.0
        %570 = vmatpush2.msra.mxu0 0.0
        %571 = vmatprep.mubr.f32.mxu0 0.0
        %v572 = vand.u32 %v261, 4294901760
        %v573 = vsub.f32 %v261, %v572
        %v574 = vand.u32 %v573, 4294901760
        %575 = vmatmul.mubr.f32.gmra.mxu0 %v574
        %v576 = vpop.f32.mrf.mxu0
        %v577 = vadd.f32 %v501, %v576
        %v578 = vpop.f32.mrf.mxu0
        %v579 = vadd.f32 %v503, %v578
        %580 = vdwg.mxu0
        %581 = vmatprep.subr.mxu0 0.0
        %582 = vmatpush1.msra.mxu0 0.0
        %583 = vmatprep.subr.mxu0 0.0
        %584 = vmatpush1.msra.mxu0 0.0
        %585 = vmatprep.subr.mxu0 0.0
        %586 = vmatpush1.msra.mxu0 0.0
        %587 = vmatprep.subr.mxu0 0.0
        %588 = vmatpush1.msra.mxu0 0.0
        %589 = vmatprep.subr.mxu0 0.0
        %590 = vmatpush1.msra.mxu0 0.0
        %591 = vmatprep.subr.mxu0 0.0
        %592 = vmatpush1.msra.mxu0 0.0
        %593 = vmatprep.subr.mxu0 0.0
        %594 = vmatpush1.msra.mxu0 0.0
        %595 = vmatprep.subr.mxu0 0.0
        %596 = vmatpush1.msra.mxu0 0.0
        %597 = vmatprep.subr.mxu0 0.0
        %598 = vmatpush1.msra.mxu0 0.0
        %599 = vmatprep.subr.mxu0 0.0
        %600 = vmatpush1.msra.mxu0 0.0
        %601 = vmatprep.subr.mxu0 0.0
        %602 = vmatpush1.msra.mxu0 0.0
        %603 = vmatprep.subr.mxu0 0.0
        %604 = vmatpush1.msra.mxu0 0.0
        %605 = vmatprep.subr.mxu0 0.0
        %606 = vmatpush1.msra.mxu0 0.0
        %607 = vmatprep.subr.mxu0 0.0
        %608 = vmatpush1.msra.mxu0 0.0
        %609 = vmatprep.subr.mxu0 0.0
        %610 = vmatpush1.msra.mxu0 0.0
        %v611 = vand.u32 %v266, 4294901760
        %v612 = vsub.f32 %v266, %v611
        %v613 = vand.u32 %v612, 4294901760
        %614 = vmatprep.subr.mxu0 %v613
        %v615 = vand.u32 %v264, 4294901760
        %v616 = vsub.f32 %v264, %v615
        %v617 = vand.u32 %v616, 4294901760
        %618 = vmatpush1.msra.mxu0 %v617
        %619 = vmatprep.subr.mxu0 0.0
        %620 = vmatpush2.msra.mxu0 0.0
        %621 = vmatprep.subr.mxu0 0.0
        %622 = vmatpush2.msra.mxu0 0.0
        %623 = vmatprep.subr.mxu0 0.0
        %624 = vmatpush2.msra.mxu0 0.0
        %625 = vmatprep.subr.mxu0 0.0
        %626 = vmatpush2.msra.mxu0 0.0
        %627 = vmatprep.subr.mxu0 0.0
        %628 = vmatpush2.msra.mxu0 0.0
        %629 = vmatprep.subr.mxu0 0.0
        %630 = vmatpush2.msra.mxu0 0.0
        %631 = vmatprep.subr.mxu0 0.0
        %632 = vmatpush2.msra.mxu0 0.0
        %633 = vmatprep.subr.mxu0 0.0
        %634 = vmatpush2.msra.mxu0 0.0
        %635 = vmatprep.subr.mxu0 0.0
        %636 = vmatpush2.msra.mxu0 0.0
        %637 = vmatprep.subr.mxu0 0.0
        %638 = vmatpush2.msra.mxu0 0.0
        %639 = vmatprep.subr.mxu0 0.0
        %640 = vmatpush2.msra.mxu0 0.0
        %641 = vmatprep.subr.mxu0 0.0
        %642 = vmatpush2.msra.mxu0 0.0
        %643 = vmatprep.subr.mxu0 0.0
        %644 = vmatpush2.msra.mxu0 0.0
        %645 = vmatprep.subr.mxu0 0.0
        %646 = vmatpush2.msra.mxu0 0.0
        %647 = vmatprep.subr.mxu0 0.0
        %648 = vmatpush2.msra.mxu0 0.0
        %649 = vmatprep.subr.mxu0 0.0
        %650 = vmatpush2.msra.mxu0 0.0
        %651 = vmatprep.mubr.f32.mxu0 0.0
        %v652 = vand.u32 %v261, 4294901760
        %653 = vmatmul.mubr.f32.gmra.mxu0 %v652
        %v654 = vpop.f32.mrf.mxu0
        %v655 = vadd.f32 %v577, %v654
        %v656 = vpop.f32.mrf.mxu0
        %v657 = vadd.f32 %v579, %v656
        %658 = vdwg.mxu0
        %659 = vmatprep.subr.mxu0 0.0
        %660 = vmatpush1.msra.mxu0 0.0
        %661 = vmatprep.subr.mxu0 0.0
        %662 = vmatpush1.msra.mxu0 0.0
        %663 = vmatprep.subr.mxu0 0.0
        %664 = vmatpush1.msra.mxu0 0.0
        %665 = vmatprep.subr.mxu0 0.0
        %666 = vmatpush1.msra.mxu0 0.0
        %667 = vmatprep.subr.mxu0 0.0
        %668 = vmatpush1.msra.mxu0 0.0
        %669 = vmatprep.subr.mxu0 0.0
        %670 = vmatpush1.msra.mxu0 0.0
        %671 = vmatprep.subr.mxu0 0.0
        %672 = vmatpush1.msra.mxu0 0.0
        %673 = vmatprep.subr.mxu0 0.0
        %674 = vmatpush1.msra.mxu0 0.0
        %675 = vmatprep.subr.mxu0 0.0
        %676 = vmatpush1.msra.mxu0 0.0
        %677 = vmatprep.subr.mxu0 0.0
        %678 = vmatpush1.msra.mxu0 0.0
        %679 = vmatprep.subr.mxu0 0.0
        %680 = vmatpush1.msra.mxu0 0.0
        %681 = vmatprep.subr.mxu0 0.0
        %682 = vmatpush1.msra.mxu0 0.0
        %683 = vmatprep.subr.mxu0 0.0
        %684 = vmatpush1.msra.mxu0 0.0
        %685 = vmatprep.subr.mxu0 0.0
        %686 = vmatpush1.msra.mxu0 0.0
        %687 = vmatprep.subr.mxu0 0.0
        %688 = vmatpush1.msra.mxu0 0.0
        %v689 = vand.u32 %v266, 4294901760
        %690 = vmatprep.subr.mxu0 %v689
        %v691 = vand.u32 %v264, 4294901760
        %692 = vmatpush1.msra.mxu0 %v691
        %693 = vmatprep.subr.mxu0 0.0
        %694 = vmatpush2.msra.mxu0 0.0
        %695 = vmatprep.subr.mxu0 0.0
        %696 = vmatpush2.msra.mxu0 0.0
        %697 = vmatprep.subr.mxu0 0.0
        %698 = vmatpush2.msra.mxu0 0.0
        %699 = vmatprep.subr.mxu0 0.0
        %700 = vmatpush2.msra.mxu0 0.0
        %701 = vmatprep.subr.mxu0 0.0
        %702 = vmatpush2.msra.mxu0 0.0
        %703 = vmatprep.subr.mxu0 0.0
        %704 = vmatpush2.msra.mxu0 0.0
        %705 = vmatprep.subr.mxu0 0.0
        %706 = vmatpush2.msra.mxu0 0.0
        %707 = vmatprep.subr.mxu0 0.0
        %708 = vmatpush2.msra.mxu0 0.0
        %709 = vmatprep.subr.mxu0 0.0
        %710 = vmatpush2.msra.mxu0 0.0
        %711 = vmatprep.subr.mxu0 0.0
        %712 = vmatpush2.msra.mxu0 0.0
        %713 = vmatprep.subr.mxu0 0.0
        %714 = vmatpush2.msra.mxu0 0.0
        %715 = vmatprep.subr.mxu0 0.0
        %716 = vmatpush2.msra.mxu0 0.0
        %717 = vmatprep.subr.mxu0 0.0
        %718 = vmatpush2.msra.mxu0 0.0
        %719 = vmatprep.subr.mxu0 0.0
        %720 = vmatpush2.msra.mxu0 0.0
        %721 = vmatprep.subr.mxu0 0.0
        %722 = vmatpush2.msra.mxu0 0.0
        %723 = vmatprep.subr.mxu0 0.0
        %724 = vmatpush2.msra.mxu0 0.0
        %725 = vmatprep.mubr.f32.mxu0 0.0
        %v726 = vand.u32 %v261, 4294901760
        %727 = vmatmul.mubr.f32.gmra.mxu0 %v726
        %v728 = vpop.f32.mrf.mxu0
        %v729 = vadd.f32 %v655, %v728
        %v730 = vpop.f32.mrf.mxu0
        %v731 = vadd.f32 %v657, %v730
        %732 = vdwg.mxu0
        %v733 = vld [vmem:[%s2] sm:$0xff]
        %vm734 = vcmask 64512
        %v736 = vsel %vm734, %v733, 0
        %738 = vmatprep.subr.mxu0 0.0
        %739 = vmatpush1.msra.mxu0 0.0
        %740 = vmatprep.subr.mxu0 0.0
        %741 = vmatpush1.msra.mxu0 0.0
        %742 = vmatprep.subr.mxu0 0.0
        %743 = vmatpush1.msra.mxu0 0.0
        %744 = vmatprep.subr.mxu0 0.0
        %745 = vmatpush1.msra.mxu0 0.0
        %746 = vmatprep.subr.mxu0 0.0
        %747 = vmatpush1.msra.mxu0 0.0
        %748 = vmatprep.subr.mxu0 0.0
        %749 = vmatpush1.msra.mxu0 0.0
        %750 = vmatprep.subr.mxu0 0.0
        %751 = vmatpush1.msra.mxu0 0.0
        %752 = vmatprep.subr.mxu0 0.0
        %753 = vmatpush1.msra.mxu0 0.0
        %754 = vmatprep.subr.mxu0 0.0
        %755 = vmatpush1.msra.mxu0 0.0
        %756 = vmatprep.subr.mxu0 0.0
        %757 = vmatpush1.msra.mxu0 0.0
        %758 = vmatprep.subr.mxu0 0.0
        %759 = vmatpush1.msra.mxu0 0.0
        %760 = vmatprep.subr.mxu0 0.0
        %761 = vmatpush1.msra.mxu0 0.0
        %762 = vmatprep.subr.mxu0 0.0
        %763 = vmatpush1.msra.mxu0 0.0
        %764 = vmatprep.subr.mxu0 0.0
        %765 = vmatpush1.msra.mxu0 0.0
        %766 = vmatprep.subr.mxu0 0.0
        %767 = vmatpush1.msra.mxu0 0.0
        %v768 = vand.u32 %v731, 4294901760
        %769 = vmatprep.subr.mxu0 %v768
        %v770 = vand.u32 %v729, 4294901760
        %771 = vmatpush1.msra.mxu0 %v770
        %772 = vmatprep.subr.mxu0 0.0
        %773 = vmatpush2.msra.mxu0 0.0
        %774 = vmatprep.subr.mxu0 0.0
        %775 = vmatpush2.msra.mxu0 0.0
        %776 = vmatprep.subr.mxu0 0.0
        %777 = vmatpush2.msra.mxu0 0.0
        %778 = vmatprep.subr.mxu0 0.0
        %779 = vmatpush2.msra.mxu0 0.0
        %780 = vmatprep.subr.mxu0 0.0
        %781 = vmatpush2.msra.mxu0 0.0
        %782 = vmatprep.subr.mxu0 0.0
        %783 = vmatpush2.msra.mxu0 0.0
        %784 = vmatprep.subr.mxu0 0.0
        %785 = vmatpush2.msra.mxu0 0.0
        %786 = vmatprep.subr.mxu0 0.0
        %787 = vmatpush2.msra.mxu0 0.0
        %788 = vmatprep.subr.mxu0 0.0
        %789 = vmatpush2.msra.mxu0 0.0
        %790 = vmatprep.subr.mxu0 0.0
        %791 = vmatpush2.msra.mxu0 0.0
        %792 = vmatprep.subr.mxu0 0.0
        %793 = vmatpush2.msra.mxu0 0.0
        %794 = vmatprep.subr.mxu0 0.0
        %795 = vmatpush2.msra.mxu0 0.0
        %796 = vmatprep.subr.mxu0 0.0
        %797 = vmatpush2.msra.mxu0 0.0
        %798 = vmatprep.subr.mxu0 0.0
        %799 = vmatpush2.msra.mxu0 0.0
        %800 = vmatprep.subr.mxu0 0.0
        %801 = vmatpush2.msra.mxu0 0.0
        %802 = vmatprep.subr.mxu0 0.0
        %803 = vmatpush2.msra.mxu0 0.0
        %804 = vmatprep.mubr.f32.mxu0 0.0
        %v805 = vand.u32 %v736, 4294901760
        %v806 = vsub.f32 %v736, %v805
        %v807 = vand.u32 %v806, 4294901760
        %v808 = vsub.f32 %v806, %v807
        %v809 = vand.u32 %v808, 4294901760
        %810 = vmatmul.mubr.f32.gmra.mxu0 %v809
        %v811 = vpop.f32.mrf.mxu0
        %v812 = vadd.f32 0.0, %v811
        %v813 = vpop.f32.mrf.mxu0
        %v814 = vadd.f32 0.0, %v813
        %815 = vdwg.mxu0
        %816 = vmatprep.subr.mxu0 0.0
        %817 = vmatpush1.msra.mxu0 0.0
        %818 = vmatprep.subr.mxu0 0.0
        %819 = vmatpush1.msra.mxu0 0.0
        %820 = vmatprep.subr.mxu0 0.0
        %821 = vmatpush1.msra.mxu0 0.0
        %822 = vmatprep.subr.mxu0 0.0
        %823 = vmatpush1.msra.mxu0 0.0
        %824 = vmatprep.subr.mxu0 0.0
        %825 = vmatpush1.msra.mxu0 0.0
        %826 = vmatprep.subr.mxu0 0.0
        %827 = vmatpush1.msra.mxu0 0.0
        %828 = vmatprep.subr.mxu0 0.0
        %829 = vmatpush1.msra.mxu0 0.0
        %830 = vmatprep.subr.mxu0 0.0
        %831 = vmatpush1.msra.mxu0 0.0
        %832 = vmatprep.subr.mxu0 0.0
        %833 = vmatpush1.msra.mxu0 0.0
        %834 = vmatprep.subr.mxu0 0.0
        %835 = vmatpush1.msra.mxu0 0.0
        %836 = vmatprep.subr.mxu0 0.0
        %837 = vmatpush1.msra.mxu0 0.0
        %838 = vmatprep.subr.mxu0 0.0
        %839 = vmatpush1.msra.mxu0 0.0
        %840 = vmatprep.subr.mxu0 0.0
        %841 = vmatpush1.msra.mxu0 0.0
        %842 = vmatprep.subr.mxu0 0.0
        %843 = vmatpush1.msra.mxu0 0.0
        %844 = vmatprep.subr.mxu0 0.0
        %845 = vmatpush1.msra.mxu0 0.0
        %v846 = vand.u32 %v731, 4294901760
        %v847 = vsub.f32 %v731, %v846
        %v848 = vand.u32 %v847, 4294901760
        %v849 = vsub.f32 %v847, %v848
        %v850 = vand.u32 %v849, 4294901760
        %851 = vmatprep.subr.mxu0 %v850
        %v852 = vand.u32 %v729, 4294901760
        %v853 = vsub.f32 %v729, %v852
        %v854 = vand.u32 %v853, 4294901760
        %v855 = vsub.f32 %v853, %v854
        %v856 = vand.u32 %v855, 4294901760
        %857 = vmatpush1.msra.mxu0 %v856
        %858 = vmatprep.subr.mxu0 0.0
        %859 = vmatpush2.msra.mxu0 0.0
        %860 = vmatprep.subr.mxu0 0.0
        %861 = vmatpush2.msra.mxu0 0.0
        %862 = vmatprep.subr.mxu0 0.0
        %863 = vmatpush2.msra.mxu0 0.0
        %864 = vmatprep.subr.mxu0 0.0
        %865 = vmatpush2.msra.mxu0 0.0
        %866 = vmatprep.subr.mxu0 0.0
        %867 = vmatpush2.msra.mxu0 0.0
        %868 = vmatprep.subr.mxu0 0.0
        %869 = vmatpush2.msra.mxu0 0.0
        %870 = vmatprep.subr.mxu0 0.0
        %871 = vmatpush2.msra.mxu0 0.0
        %872 = vmatprep.subr.mxu0 0.0
        %873 = vmatpush2.msra.mxu0 0.0
        %874 = vmatprep.subr.mxu0 0.0
        %875 = vmatpush2.msra.mxu0 0.0
        %876 = vmatprep.subr.mxu0 0.0
        %877 = vmatpush2.msra.mxu0 0.0
        %878 = vmatprep.subr.mxu0 0.0
        %879 = vmatpush2.msra.mxu0 0.0
        %880 = vmatprep.subr.mxu0 0.0
        %881 = vmatpush2.msra.mxu0 0.0
        %882 = vmatprep.subr.mxu0 0.0
        %883 = vmatpush2.msra.mxu0 0.0
        %884 = vmatprep.subr.mxu0 0.0
        %885 = vmatpush2.msra.mxu0 0.0
        %886 = vmatprep.subr.mxu0 0.0
        %887 = vmatpush2.msra.mxu0 0.0
        %888 = vmatprep.subr.mxu0 0.0
        %889 = vmatpush2.msra.mxu0 0.0
        %890 = vmatprep.mubr.f32.mxu0 0.0
        %v891 = vand.u32 %v736, 4294901760
        %892 = vmatmul.mubr.f32.gmra.mxu0 %v891
        %v893 = vpop.f32.mrf.mxu0
        %v894 = vadd.f32 %v812, %v893
        %v895 = vpop.f32.mrf.mxu0
        %v896 = vadd.f32 %v814, %v895
        %897 = vdwg.mxu0
        %898 = vmatprep.subr.mxu0 0.0
        %899 = vmatpush1.msra.mxu0 0.0
        %900 = vmatprep.subr.mxu0 0.0
        %901 = vmatpush1.msra.mxu0 0.0
        %902 = vmatprep.subr.mxu0 0.0
        %903 = vmatpush1.msra.mxu0 0.0
        %904 = vmatprep.subr.mxu0 0.0
        %905 = vmatpush1.msra.mxu0 0.0
        %906 = vmatprep.subr.mxu0 0.0
        %907 = vmatpush1.msra.mxu0 0.0
        %908 = vmatprep.subr.mxu0 0.0
        %909 = vmatpush1.msra.mxu0 0.0
        %910 = vmatprep.subr.mxu0 0.0
        %911 = vmatpush1.msra.mxu0 0.0
        %912 = vmatprep.subr.mxu0 0.0
        %913 = vmatpush1.msra.mxu0 0.0
        %914 = vmatprep.subr.mxu0 0.0
        %915 = vmatpush1.msra.mxu0 0.0
        %916 = vmatprep.subr.mxu0 0.0
        %917 = vmatpush1.msra.mxu0 0.0
        %918 = vmatprep.subr.mxu0 0.0
        %919 = vmatpush1.msra.mxu0 0.0
        %920 = vmatprep.subr.mxu0 0.0
        %921 = vmatpush1.msra.mxu0 0.0
        %922 = vmatprep.subr.mxu0 0.0
        %923 = vmatpush1.msra.mxu0 0.0
        %924 = vmatprep.subr.mxu0 0.0
        %925 = vmatpush1.msra.mxu0 0.0
        %926 = vmatprep.subr.mxu0 0.0
        %927 = vmatpush1.msra.mxu0 0.0
        %v928 = vand.u32 %v731, 4294901760
        %v929 = vsub.f32 %v731, %v928
        %930 = vmatprep.subr.mxu0 %v929
        %v931 = vand.u32 %v729, 4294901760
        %v932 = vsub.f32 %v729, %v931
        %933 = vmatpush1.msra.mxu0 %v932
        %934 = vmatprep.subr.mxu0 0.0
        %935 = vmatpush2.msra.mxu0 0.0
        %936 = vmatprep.subr.mxu0 0.0
        %937 = vmatpush2.msra.mxu0 0.0
        %938 = vmatprep.subr.mxu0 0.0
        %939 = vmatpush2.msra.mxu0 0.0
        %940 = vmatprep.subr.mxu0 0.0
        %941 = vmatpush2.msra.mxu0 0.0
        %942 = vmatprep.subr.mxu0 0.0
        %943 = vmatpush2.msra.mxu0 0.0
        %944 = vmatprep.subr.mxu0 0.0
        %945 = vmatpush2.msra.mxu0 0.0
        %946 = vmatprep.subr.mxu0 0.0
        %947 = vmatpush2.msra.mxu0 0.0
        %948 = vmatprep.subr.mxu0 0.0
        %949 = vmatpush2.msra.mxu0 0.0
        %950 = vmatprep.subr.mxu0 0.0
        %951 = vmatpush2.msra.mxu0 0.0
        %952 = vmatprep.subr.mxu0 0.0
        %953 = vmatpush2.msra.mxu0 0.0
        %954 = vmatprep.subr.mxu0 0.0
        %955 = vmatpush2.msra.mxu0 0.0
        %956 = vmatprep.subr.mxu0 0.0
        %957 = vmatpush2.msra.mxu0 0.0
        %958 = vmatprep.subr.mxu0 0.0
        %959 = vmatpush2.msra.mxu0 0.0
        %960 = vmatprep.subr.mxu0 0.0
        %961 = vmatpush2.msra.mxu0 0.0
        %962 = vmatprep.subr.mxu0 0.0
        %963 = vmatpush2.msra.mxu0 0.0
        %964 = vmatprep.subr.mxu0 0.0
        %965 = vmatpush2.msra.mxu0 0.0
        %966 = vmatprep.mubr.f32.mxu0 0.0
        %v967 = vand.u32 %v736, 4294901760
        %v968 = vsub.f32 %v736, %v967
        %969 = vmatmul.mubr.f32.gmra.mxu0 %v968
        %v970 = vpop.f32.mrf.mxu0
        %v971 = vadd.f32 %v894, %v970
        %v972 = vpop.f32.mrf.mxu0
        %v973 = vadd.f32 %v896, %v972
        %974 = vdwg.mxu0
        %975 = vmatprep.subr.mxu0 0.0
        %976 = vmatpush1.msra.mxu0 0.0
        %977 = vmatprep.subr.mxu0 0.0
        %978 = vmatpush1.msra.mxu0 0.0
        %979 = vmatprep.subr.mxu0 0.0
        %980 = vmatpush1.msra.mxu0 0.0
        %981 = vmatprep.subr.mxu0 0.0
        %982 = vmatpush1.msra.mxu0 0.0
        %983 = vmatprep.subr.mxu0 0.0
        %984 = vmatpush1.msra.mxu0 0.0
        %985 = vmatprep.subr.mxu0 0.0
        %986 = vmatpush1.msra.mxu0 0.0
        %987 = vmatprep.subr.mxu0 0.0
        %988 = vmatpush1.msra.mxu0 0.0
        %989 = vmatprep.subr.mxu0 0.0
        %990 = vmatpush1.msra.mxu0 0.0
        %991 = vmatprep.subr.mxu0 0.0
        %992 = vmatpush1.msra.mxu0 0.0
        %993 = vmatprep.subr.mxu0 0.0
        %994 = vmatpush1.msra.mxu0 0.0
        %995 = vmatprep.subr.mxu0 0.0
        %996 = vmatpush1.msra.mxu0 0.0
        %997 = vmatprep.subr.mxu0 0.0
        %998 = vmatpush1.msra.mxu0 0.0
        %999 = vmatprep.subr.mxu0 0.0
        %1000 = vmatpush1.msra.mxu0 0.0
        %1001 = vmatprep.subr.mxu0 0.0
        %1002 = vmatpush1.msra.mxu0 0.0
        %1003 = vmatprep.subr.mxu0 0.0
        %1004 = vmatpush1.msra.mxu0 0.0
        %v1005 = vand.u32 %v731, 4294901760
        %1006 = vmatprep.subr.mxu0 %v1005
        %v1007 = vand.u32 %v729, 4294901760
        %1008 = vmatpush1.msra.mxu0 %v1007
        %1009 = vmatprep.subr.mxu0 0.0
        %1010 = vmatpush2.msra.mxu0 0.0
        %1011 = vmatprep.subr.mxu0 0.0
        %1012 = vmatpush2.msra.mxu0 0.0
        %1013 = vmatprep.subr.mxu0 0.0
        %1014 = vmatpush2.msra.mxu0 0.0
        %1015 = vmatprep.subr.mxu0 0.0
        %1016 = vmatpush2.msra.mxu0 0.0
        %1017 = vmatprep.subr.mxu0 0.0
        %1018 = vmatpush2.msra.mxu0 0.0
        %1019 = vmatprep.subr.mxu0 0.0
        %1020 = vmatpush2.msra.mxu0 0.0
        %1021 = vmatprep.subr.mxu0 0.0
        %1022 = vmatpush2.msra.mxu0 0.0
        %1023 = vmatprep.subr.mxu0 0.0
        %1024 = vmatpush2.msra.mxu0 0.0
        %1025 = vmatprep.subr.mxu0 0.0
        %1026 = vmatpush2.msra.mxu0 0.0
        %1027 = vmatprep.subr.mxu0 0.0
        %1028 = vmatpush2.msra.mxu0 0.0
        %1029 = vmatprep.subr.mxu0 0.0
        %1030 = vmatpush2.msra.mxu0 0.0
        %1031 = vmatprep.subr.mxu0 0.0
        %1032 = vmatpush2.msra.mxu0 0.0
        %1033 = vmatprep.subr.mxu0 0.0
        %1034 = vmatpush2.msra.mxu0 0.0
        %1035 = vmatprep.subr.mxu0 0.0
        %1036 = vmatpush2.msra.mxu0 0.0
        %1037 = vmatprep.subr.mxu0 0.0
        %1038 = vmatpush2.msra.mxu0 0.0
        %1039 = vmatprep.subr.mxu0 0.0
        %1040 = vmatpush2.msra.mxu0 0.0
        %1041 = vmatprep.mubr.f32.mxu0 0.0
        %v1042 = vand.u32 %v736, 4294901760
        %v1043 = vsub.f32 %v736, %v1042
        %v1044 = vand.u32 %v1043, 4294901760
        %1045 = vmatmul.mubr.f32.gmra.mxu0 %v1044
        %v1046 = vpop.f32.mrf.mxu0
        %v1047 = vadd.f32 %v971, %v1046
        %v1048 = vpop.f32.mrf.mxu0
        %v1049 = vadd.f32 %v973, %v1048
        %1050 = vdwg.mxu0
        %1051 = vmatprep.subr.mxu0 0.0
        %1052 = vmatpush1.msra.mxu0 0.0
        %1053 = vmatprep.subr.mxu0 0.0
        %1054 = vmatpush1.msra.mxu0 0.0
        %1055 = vmatprep.subr.mxu0 0.0
        %1056 = vmatpush1.msra.mxu0 0.0
        %1057 = vmatprep.subr.mxu0 0.0
        %1058 = vmatpush1.msra.mxu0 0.0
        %1059 = vmatprep.subr.mxu0 0.0
        %1060 = vmatpush1.msra.mxu0 0.0
        %1061 = vmatprep.subr.mxu0 0.0
        %1062 = vmatpush1.msra.mxu0 0.0
        %1063 = vmatprep.subr.mxu0 0.0
        %1064 = vmatpush1.msra.mxu0 0.0
        %1065 = vmatprep.subr.mxu0 0.0
        %1066 = vmatpush1.msra.mxu0 0.0
        %1067 = vmatprep.subr.mxu0 0.0
        %1068 = vmatpush1.msra.mxu0 0.0
        %1069 = vmatprep.subr.mxu0 0.0
        %1070 = vmatpush1.msra.mxu0 0.0
        %1071 = vmatprep.subr.mxu0 0.0
        %1072 = vmatpush1.msra.mxu0 0.0
        %1073 = vmatprep.subr.mxu0 0.0
        %1074 = vmatpush1.msra.mxu0 0.0
        %1075 = vmatprep.subr.mxu0 0.0
        %1076 = vmatpush1.msra.mxu0 0.0
        %1077 = vmatprep.subr.mxu0 0.0
        %1078 = vmatpush1.msra.mxu0 0.0
        %1079 = vmatprep.subr.mxu0 0.0
        %1080 = vmatpush1.msra.mxu0 0.0
        %v1081 = vand.u32 %v731, 4294901760
        %v1082 = vsub.f32 %v731, %v1081
        %v1083 = vand.u32 %v1082, 4294901760
        %1084 = vmatprep.subr.mxu0 %v1083
        %v1085 = vand.u32 %v729, 4294901760
        %v1086 = vsub.f32 %v729, %v1085
        %v1087 = vand.u32 %v1086, 4294901760
        %1088 = vmatpush1.msra.mxu0 %v1087
        %1089 = vmatprep.subr.mxu0 0.0
        %1090 = vmatpush2.msra.mxu0 0.0
        %1091 = vmatprep.subr.mxu0 0.0
        %1092 = vmatpush2.msra.mxu0 0.0
        %1093 = vmatprep.subr.mxu0 0.0
        %1094 = vmatpush2.msra.mxu0 0.0
        %1095 = vmatprep.subr.mxu0 0.0
        %1096 = vmatpush2.msra.mxu0 0.0
        %1097 = vmatprep.subr.mxu0 0.0
        %1098 = vmatpush2.msra.mxu0 0.0
        %1099 = vmatprep.subr.mxu0 0.0
        %1100 = vmatpush2.msra.mxu0 0.0
        %1101 = vmatprep.subr.mxu0 0.0
        %1102 = vmatpush2.msra.mxu0 0.0
        %1103 = vmatprep.subr.mxu0 0.0
        %1104 = vmatpush2.msra.mxu0 0.0
        %1105 = vmatprep.subr.mxu0 0.0
        %1106 = vmatpush2.msra.mxu0 0.0
        %1107 = vmatprep.subr.mxu0 0.0
        %1108 = vmatpush2.msra.mxu0 0.0
        %1109 = vmatprep.subr.mxu0 0.0
        %1110 = vmatpush2.msra.mxu0 0.0
        %1111 = vmatprep.subr.mxu0 0.0
        %1112 = vmatpush2.msra.mxu0 0.0
        %1113 = vmatprep.subr.mxu0 0.0
        %1114 = vmatpush2.msra.mxu0 0.0
        %1115 = vmatprep.subr.mxu0 0.0
        %1116 = vmatpush2.msra.mxu0 0.0
        %1117 = vmatprep.subr.mxu0 0.0
        %1118 = vmatpush2.msra.mxu0 0.0
        %1119 = vmatprep.subr.mxu0 0.0
        %1120 = vmatpush2.msra.mxu0 0.0
        %1121 = vmatprep.mubr.f32.mxu0 0.0
        %v1122 = vand.u32 %v736, 4294901760
        %1123 = vmatmul.mubr.f32.gmra.mxu0 %v1122
        %v1124 = vpop.f32.mrf.mxu0
        %v1125 = vadd.f32 %v1047, %v1124
        %v1126 = vpop.f32.mrf.mxu0
        %v1127 = vadd.f32 %v1049, %v1126
        %1128 = vdwg.mxu0
        %1129 = vmatprep.subr.mxu0 0.0
        %1130 = vmatpush1.msra.mxu0 0.0
        %1131 = vmatprep.subr.mxu0 0.0
        %1132 = vmatpush1.msra.mxu0 0.0
        %1133 = vmatprep.subr.mxu0 0.0
        %1134 = vmatpush1.msra.mxu0 0.0
        %1135 = vmatprep.subr.mxu0 0.0
        %1136 = vmatpush1.msra.mxu0 0.0
        %1137 = vmatprep.subr.mxu0 0.0
        %1138 = vmatpush1.msra.mxu0 0.0
        %1139 = vmatprep.subr.mxu0 0.0
        %1140 = vmatpush1.msra.mxu0 0.0
        %1141 = vmatprep.subr.mxu0 0.0
        %1142 = vmatpush1.msra.mxu0 0.0
        %1143 = vmatprep.subr.mxu0 0.0
        %1144 = vmatpush1.msra.mxu0 0.0
        %1145 = vmatprep.subr.mxu0 0.0
        %1146 = vmatpush1.msra.mxu0 0.0
        %1147 = vmatprep.subr.mxu0 0.0
        %1148 = vmatpush1.msra.mxu0 0.0
        %1149 = vmatprep.subr.mxu0 0.0
        %1150 = vmatpush1.msra.mxu0 0.0
        %1151 = vmatprep.subr.mxu0 0.0
        %1152 = vmatpush1.msra.mxu0 0.0
        %1153 = vmatprep.subr.mxu0 0.0
        %1154 = vmatpush1.msra.mxu0 0.0
        %1155 = vmatprep.subr.mxu0 0.0
        %1156 = vmatpush1.msra.mxu0 0.0
        %1157 = vmatprep.subr.mxu0 0.0
        %1158 = vmatpush1.msra.mxu0 0.0
        %v1159 = vand.u32 %v731, 4294901760
        %1160 = vmatprep.subr.mxu0 %v1159
        %v1161 = vand.u32 %v729, 4294901760
        %1162 = vmatpush1.msra.mxu0 %v1161
        %1163 = vmatprep.subr.mxu0 0.0
        %1164 = vmatpush2.msra.mxu0 0.0
        %1165 = vmatprep.subr.mxu0 0.0
        %1166 = vmatpush2.msra.mxu0 0.0
        %1167 = vmatprep.subr.mxu0 0.0
        %1168 = vmatpush2.msra.mxu0 0.0
        %1169 = vmatprep.subr.mxu0 0.0
        %1170 = vmatpush2.msra.mxu0 0.0
        %1171 = vmatprep.subr.mxu0 0.0
        %1172 = vmatpush2.msra.mxu0 0.0
        %1173 = vmatprep.subr.mxu0 0.0
        %1174 = vmatpush2.msra.mxu0 0.0
        %1175 = vmatprep.subr.mxu0 0.0
        %1176 = vmatpush2.msra.mxu0 0.0
        %1177 = vmatprep.subr.mxu0 0.0
        %1178 = vmatpush2.msra.mxu0 0.0
        %1179 = vmatprep.subr.mxu0 0.0
        %1180 = vmatpush2.msra.mxu0 0.0
        %1181 = vmatprep.subr.mxu0 0.0
        %1182 = vmatpush2.msra.mxu0 0.0
        %1183 = vmatprep.subr.mxu0 0.0
        %1184 = vmatpush2.msra.mxu0 0.0
        %1185 = vmatprep.subr.mxu0 0.0
        %1186 = vmatpush2.msra.mxu0 0.0
        %1187 = vmatprep.subr.mxu0 0.0
        %1188 = vmatpush2.msra.mxu0 0.0
        %1189 = vmatprep.subr.mxu0 0.0
        %1190 = vmatpush2.msra.mxu0 0.0
        %1191 = vmatprep.subr.mxu0 0.0
        %1192 = vmatpush2.msra.mxu0 0.0
        %1193 = vmatprep.subr.mxu0 0.0
        %1194 = vmatpush2.msra.mxu0 0.0
        %1195 = vmatprep.mubr.f32.mxu0 0.0
        %v1196 = vand.u32 %v736, 4294901760
        %1197 = vmatmul.mubr.f32.gmra.mxu0 %v1196
        %v1198 = vpop.f32.mrf.mxu0
        %v1199 = vadd.f32 %v1125, %v1198
        %v1200 = vpop.f32.mrf.mxu0
        %v1201 = vadd.f32 %v1127, %v1200
        %1202 = vdwg.mxu0
        %v1203 = vld [vmem:[%s3] sm:$0xff]
        %1205 = vset.pattern.permute.xlu0 1
        %1206 = vperm.xlu0 %1205, %v1203
        %v1207 = vpop.permute.xlu0 %1206
        %v1209 = vmul.f32 %v1199, %v1207
        %v1210 = vmul.f32 %v1201, %v1207
        %1211 = vset.pattern.permute.xlu0 2
        %1212 = vperm.xlu0 %1211, %v1203
        %v1213 = vpop.permute.xlu0 %1212
        %v1215 = vadd.f32 %v1209, %v1213
        %v1216 = vadd.f32 %v1210, %v1213
        %v1217 = vmax.f32 %v1215, 0.0
        %v1218 = vmax.f32 %v1216, 0.0
        %v1219 = vld [vmem:[%s2 + $0x8] sm:$0xff]
        %v1221 = vsel %vm734, %v1219, 0
        %1223 = vmatprep.subr.mxu0 0.0
        %1224 = vmatpush1.msra.mxu0 0.0
        %1225 = vmatprep.subr.mxu0 0.0
        %1226 = vmatpush1.msra.mxu0 0.0
        %1227 = vmatprep.subr.mxu0 0.0
        %1228 = vmatpush1.msra.mxu0 0.0
        %1229 = vmatprep.subr.mxu0 0.0
        %1230 = vmatpush1.msra.mxu0 0.0
        %1231 = vmatprep.subr.mxu0 0.0
        %1232 = vmatpush1.msra.mxu0 0.0
        %1233 = vmatprep.subr.mxu0 0.0
        %1234 = vmatpush1.msra.mxu0 0.0
        %1235 = vmatprep.subr.mxu0 0.0
        %1236 = vmatpush1.msra.mxu0 0.0
        %1237 = vmatprep.subr.mxu0 0.0
        %1238 = vmatpush1.msra.mxu0 0.0
        %1239 = vmatprep.subr.mxu0 0.0
        %1240 = vmatpush1.msra.mxu0 0.0
        %1241 = vmatprep.subr.mxu0 0.0
        %1242 = vmatpush1.msra.mxu0 0.0
        %1243 = vmatprep.subr.mxu0 0.0
        %1244 = vmatpush1.msra.mxu0 0.0
        %1245 = vmatprep.subr.mxu0 0.0
        %1246 = vmatpush1.msra.mxu0 0.0
        %1247 = vmatprep.subr.mxu0 0.0
        %1248 = vmatpush1.msra.mxu0 0.0
        %1249 = vmatprep.subr.mxu0 0.0
        %1250 = vmatpush1.msra.mxu0 0.0
        %1251 = vmatprep.subr.mxu0 0.0
        %1252 = vmatpush1.msra.mxu0 0.0
        %v1253 = vand.u32 %v1218, 4294901760
        %1254 = vmatprep.subr.mxu0 %v1253
        %v1255 = vand.u32 %v1217, 4294901760
        %1256 = vmatpush1.msra.mxu0 %v1255
        %1257 = vmatprep.subr.mxu0 0.0
        %1258 = vmatpush2.msra.mxu0 0.0
        %1259 = vmatprep.subr.mxu0 0.0
        %1260 = vmatpush2.msra.mxu0 0.0
        %1261 = vmatprep.subr.mxu0 0.0
        %1262 = vmatpush2.msra.mxu0 0.0
        %1263 = vmatprep.subr.mxu0 0.0
        %1264 = vmatpush2.msra.mxu0 0.0
        %1265 = vmatprep.subr.mxu0 0.0
        %1266 = vmatpush2.msra.mxu0 0.0
        %1267 = vmatprep.subr.mxu0 0.0
        %1268 = vmatpush2.msra.mxu0 0.0
        %1269 = vmatprep.subr.mxu0 0.0
        %1270 = vmatpush2.msra.mxu0 0.0
        %1271 = vmatprep.subr.mxu0 0.0
        %1272 = vmatpush2.msra.mxu0 0.0
        %1273 = vmatprep.subr.mxu0 0.0
        %1274 = vmatpush2.msra.mxu0 0.0
        %1275 = vmatprep.subr.mxu0 0.0
        %1276 = vmatpush2.msra.mxu0 0.0
        %1277 = vmatprep.subr.mxu0 0.0
        %1278 = vmatpush2.msra.mxu0 0.0
        %1279 = vmatprep.subr.mxu0 0.0
        %1280 = vmatpush2.msra.mxu0 0.0
        %1281 = vmatprep.subr.mxu0 0.0
        %1282 = vmatpush2.msra.mxu0 0.0
        %1283 = vmatprep.subr.mxu0 0.0
        %1284 = vmatpush2.msra.mxu0 0.0
        %1285 = vmatprep.subr.mxu0 0.0
        %1286 = vmatpush2.msra.mxu0 0.0
        %1287 = vmatprep.subr.mxu0 0.0
        %1288 = vmatpush2.msra.mxu0 0.0
        %1289 = vmatprep.mubr.f32.mxu0 0.0
        %v1290 = vand.u32 %v1221, 4294901760
        %v1291 = vsub.f32 %v1221, %v1290
        %v1292 = vand.u32 %v1291, 4294901760
        %v1293 = vsub.f32 %v1291, %v1292
        %v1294 = vand.u32 %v1293, 4294901760
        %1295 = vmatmul.mubr.f32.gmra.mxu0 %v1294
        %v1296 = vpop.f32.mrf.mxu0
        %v1297 = vadd.f32 0.0, %v1296
        %v1298 = vpop.f32.mrf.mxu0
        %v1299 = vadd.f32 0.0, %v1298
        %1300 = vdwg.mxu0
        %1301 = vmatprep.subr.mxu0 0.0
        %1302 = vmatpush1.msra.mxu0 0.0
        %1303 = vmatprep.subr.mxu0 0.0
        %1304 = vmatpush1.msra.mxu0 0.0
        %1305 = vmatprep.subr.mxu0 0.0
        %1306 = vmatpush1.msra.mxu0 0.0
        %1307 = vmatprep.subr.mxu0 0.0
        %1308 = vmatpush1.msra.mxu0 0.0
        %1309 = vmatprep.subr.mxu0 0.0
        %1310 = vmatpush1.msra.mxu0 0.0
        %1311 = vmatprep.subr.mxu0 0.0
        %1312 = vmatpush1.msra.mxu0 0.0
        %1313 = vmatprep.subr.mxu0 0.0
        %1314 = vmatpush1.msra.mxu0 0.0
        %1315 = vmatprep.subr.mxu0 0.0
        %1316 = vmatpush1.msra.mxu0 0.0
        %1317 = vmatprep.subr.mxu0 0.0
        %1318 = vmatpush1.msra.mxu0 0.0
        %1319 = vmatprep.subr.mxu0 0.0
        %1320 = vmatpush1.msra.mxu0 0.0
        %1321 = vmatprep.subr.mxu0 0.0
        %1322 = vmatpush1.msra.mxu0 0.0
        %1323 = vmatprep.subr.mxu0 0.0
        %1324 = vmatpush1.msra.mxu0 0.0
        %1325 = vmatprep.subr.mxu0 0.0
        %1326 = vmatpush1.msra.mxu0 0.0
        %1327 = vmatprep.subr.mxu0 0.0
        %1328 = vmatpush1.msra.mxu0 0.0
        %1329 = vmatprep.subr.mxu0 0.0
        %1330 = vmatpush1.msra.mxu0 0.0
        %v1331 = vand.u32 %v1218, 4294901760
        %v1332 = vsub.f32 %v1218, %v1331
        %v1333 = vand.u32 %v1332, 4294901760
        %v1334 = vsub.f32 %v1332, %v1333
        %v1335 = vand.u32 %v1334, 4294901760
        %1336 = vmatprep.subr.mxu0 %v1335
        %v1337 = vand.u32 %v1217, 4294901760
        %v1338 = vsub.f32 %v1217, %v1337
        %v1339 = vand.u32 %v1338, 4294901760
        %v1340 = vsub.f32 %v1338, %v1339
        %v1341 = vand.u32 %v1340, 4294901760
        %1342 = vmatpush1.msra.mxu0 %v1341
        %1343 = vmatprep.subr.mxu0 0.0
        %1344 = vmatpush2.msra.mxu0 0.0
        %1345 = vmatprep.subr.mxu0 0.0
        %1346 = vmatpush2.msra.mxu0 0.0
        %1347 = vmatprep.subr.mxu0 0.0
        %1348 = vmatpush2.msra.mxu0 0.0
        %1349 = vmatprep.subr.mxu0 0.0
        %1350 = vmatpush2.msra.mxu0 0.0
        %1351 = vmatprep.subr.mxu0 0.0
        %1352 = vmatpush2.msra.mxu0 0.0
        %1353 = vmatprep.subr.mxu0 0.0
        %1354 = vmatpush2.msra.mxu0 0.0
        %1355 = vmatprep.subr.mxu0 0.0
        %1356 = vmatpush2.msra.mxu0 0.0
        %1357 = vmatprep.subr.mxu0 0.0
        %1358 = vmatpush2.msra.mxu0 0.0
        %1359 = vmatprep.subr.mxu0 0.0
        %1360 = vmatpush2.msra.mxu0 0.0
        %1361 = vmatprep.subr.mxu0 0.0
        %1362 = vmatpush2.msra.mxu0 0.0
        %1363 = vmatprep.subr.mxu0 0.0
        %1364 = vmatpush2.msra.mxu0 0.0
        %1365 = vmatprep.subr.mxu0 0.0
        %1366 = vmatpush2.msra.mxu0 0.0
        %1367 = vmatprep.subr.mxu0 0.0
        %1368 = vmatpush2.msra.mxu0 0.0
        %1369 = vmatprep.subr.mxu0 0.0
        %1370 = vmatpush2.msra.mxu0 0.0
        %1371 = vmatprep.subr.mxu0 0.0
        %1372 = vmatpush2.msra.mxu0 0.0
        %1373 = vmatprep.subr.mxu0 0.0
        %1374 = vmatpush2.msra.mxu0 0.0
        %1375 = vmatprep.mubr.f32.mxu0 0.0
        %v1376 = vand.u32 %v1221, 4294901760
        %1377 = vmatmul.mubr.f32.gmra.mxu0 %v1376
        %v1378 = vpop.f32.mrf.mxu0
        %v1379 = vadd.f32 %v1297, %v1378
        %v1380 = vpop.f32.mrf.mxu0
        %v1381 = vadd.f32 %v1299, %v1380
        %1382 = vdwg.mxu0
        %1383 = vmatprep.subr.mxu0 0.0
        %1384 = vmatpush1.msra.mxu0 0.0
        %1385 = vmatprep.subr.mxu0 0.0
        %1386 = vmatpush1.msra.mxu0 0.0
        %1387 = vmatprep.subr.mxu0 0.0
        %1388 = vmatpush1.msra.mxu0 0.0
        %1389 = vmatprep.subr.mxu0 0.0
        %1390 = vmatpush1.msra.mxu0 0.0
        %1391 = vmatprep.subr.mxu0 0.0
        %1392 = vmatpush1.msra.mxu0 0.0
        %1393 = vmatprep.subr.mxu0 0.0
        %1394 = vmatpush1.msra.mxu0 0.0
        %1395 = vmatprep.subr.mxu0 0.0
        %1396 = vmatpush1.msra.mxu0 0.0
        %1397 = vmatprep.subr.mxu0 0.0
        %1398 = vmatpush1.msra.mxu0 0.0
        %1399 = vmatprep.subr.mxu0 0.0
        %1400 = vmatpush1.msra.mxu0 0.0
        %1401 = vmatprep.subr.mxu0 0.0
        %1402 = vmatpush1.msra.mxu0 0.0
        %1403 = vmatprep.subr.mxu0 0.0
        %1404 = vmatpush1.msra.mxu0 0.0
        %1405 = vmatprep.subr.mxu0 0.0
        %1406 = vmatpush1.msra.mxu0 0.0
        %1407 = vmatprep.subr.mxu0 0.0
        %1408 = vmatpush1.msra.mxu0 0.0
        %1409 = vmatprep.subr.mxu0 0.0
        %1410 = vmatpush1.msra.mxu0 0.0
        %1411 = vmatprep.subr.mxu0 0.0
        %1412 = vmatpush1.msra.mxu0 0.0
        %v1413 = vand.u32 %v1218, 4294901760
        %v1414 = vsub.f32 %v1218, %v1413
        %1415 = vmatprep.subr.mxu0 %v1414
        %v1416 = vand.u32 %v1217, 4294901760
        %v1417 = vsub.f32 %v1217, %v1416
        %1418 = vmatpush1.msra.mxu0 %v1417
        %1419 = vmatprep.subr.mxu0 0.0
        %1420 = vmatpush2.msra.mxu0 0.0
        %1421 = vmatprep.subr.mxu0 0.0
        %1422 = vmatpush2.msra.mxu0 0.0
        %1423 = vmatprep.subr.mxu0 0.0
        %1424 = vmatpush2.msra.mxu0 0.0
        %1425 = vmatprep.subr.mxu0 0.0
        %1426 = vmatpush2.msra.mxu0 0.0
        %1427 = vmatprep.subr.mxu0 0.0
        %1428 = vmatpush2.msra.mxu0 0.0
        %1429 = vmatprep.subr.mxu0 0.0
        %1430 = vmatpush2.msra.mxu0 0.0
        %1431 = vmatprep.subr.mxu0 0.0
        %1432 = vmatpush2.msra.mxu0 0.0
        %1433 = vmatprep.subr.mxu0 0.0
        %1434 = vmatpush2.msra.mxu0 0.0
        %1435 = vmatprep.subr.mxu0 0.0
        %1436 = vmatpush2.msra.mxu0 0.0
        %1437 = vmatprep.subr.mxu0 0.0
        %1438 = vmatpush2.msra.mxu0 0.0
        %1439 = vmatprep.subr.mxu0 0.0
        %1440 = vmatpush2.msra.mxu0 0.0
        %1441 = vmatprep.subr.mxu0 0.0
        %1442 = vmatpush2.msra.mxu0 0.0
        %1443 = vmatprep.subr.mxu0 0.0
        %1444 = vmatpush2.msra.mxu0 0.0
        %1445 = vmatprep.subr.mxu0 0.0
        %1446 = vmatpush2.msra.mxu0 0.0
        %1447 = vmatprep.subr.mxu0 0.0
        %1448 = vmatpush2.msra.mxu0 0.0
        %1449 = vmatprep.subr.mxu0 0.0
        %1450 = vmatpush2.msra.mxu0 0.0
        %1451 = vmatprep.mubr.f32.mxu0 0.0
        %v1452 = vand.u32 %v1221, 4294901760
        %v1453 = vsub.f32 %v1221, %v1452
        %1454 = vmatmul.mubr.f32.gmra.mxu0 %v1453
        %v1455 = vpop.f32.mrf.mxu0
        %v1456 = vadd.f32 %v1379, %v1455
        %v1457 = vpop.f32.mrf.mxu0
        %v1458 = vadd.f32 %v1381, %v1457
        %1459 = vdwg.mxu0
        %1460 = vmatprep.subr.mxu0 0.0
        %1461 = vmatpush1.msra.mxu0 0.0
        %1462 = vmatprep.subr.mxu0 0.0
        %1463 = vmatpush1.msra.mxu0 0.0
        %1464 = vmatprep.subr.mxu0 0.0
        %1465 = vmatpush1.msra.mxu0 0.0
        %1466 = vmatprep.subr.mxu0 0.0
        %1467 = vmatpush1.msra.mxu0 0.0
        %1468 = vmatprep.subr.mxu0 0.0
        %1469 = vmatpush1.msra.mxu0 0.0
        %1470 = vmatprep.subr.mxu0 0.0
        %1471 = vmatpush1.msra.mxu0 0.0
        %1472 = vmatprep.subr.mxu0 0.0
        %1473 = vmatpush1.msra.mxu0 0.0
        %1474 = vmatprep.subr.mxu0 0.0
        %1475 = vmatpush1.msra.mxu0 0.0
        %1476 = vmatprep.subr.mxu0 0.0
        %1477 = vmatpush1.msra.mxu0 0.0
        %1478 = vmatprep.subr.mxu0 0.0
        %1479 = vmatpush1.msra.mxu0 0.0
        %1480 = vmatprep.subr.mxu0 0.0
        %1481 = vmatpush1.msra.mxu0 0.0
        %1482 = vmatprep.subr.mxu0 0.0
        %1483 = vmatpush1.msra.mxu0 0.0
        %1484 = vmatprep.subr.mxu0 0.0
        %1485 = vmatpush1.msra.mxu0 0.0
        %1486 = vmatprep.subr.mxu0 0.0
        %1487 = vmatpush1.msra.mxu0 0.0
        %1488 = vmatprep.subr.mxu0 0.0
        %1489 = vmatpush1.msra.mxu0 0.0
        %v1490 = vand.u32 %v1218, 4294901760
        %1491 = vmatprep.subr.mxu0 %v1490
        %v1492 = vand.u32 %v1217, 4294901760
        %1493 = vmatpush1.msra.mxu0 %v1492
        %1494 = vmatprep.subr.mxu0 0.0
        %1495 = vmatpush2.msra.mxu0 0.0
        %1496 = vmatprep.subr.mxu0 0.0
        %1497 = vmatpush2.msra.mxu0 0.0
        %1498 = vmatprep.subr.mxu0 0.0
        %1499 = vmatpush2.msra.mxu0 0.0
        %1500 = vmatprep.subr.mxu0 0.0
        %1501 = vmatpush2.msra.mxu0 0.0
        %1502 = vmatprep.subr.mxu0 0.0
        %1503 = vmatpush2.msra.mxu0 0.0
        %1504 = vmatprep.subr.mxu0 0.0
        %1505 = vmatpush2.msra.mxu0 0.0
        %1506 = vmatprep.subr.mxu0 0.0
        %1507 = vmatpush2.msra.mxu0 0.0
        %1508 = vmatprep.subr.mxu0 0.0
        %1509 = vmatpush2.msra.mxu0 0.0
        %1510 = vmatprep.subr.mxu0 0.0
        %1511 = vmatpush2.msra.mxu0 0.0
        %1512 = vmatprep.subr.mxu0 0.0
        %1513 = vmatpush2.msra.mxu0 0.0
        %1514 = vmatprep.subr.mxu0 0.0
        %1515 = vmatpush2.msra.mxu0 0.0
        %1516 = vmatprep.subr.mxu0 0.0
        %1517 = vmatpush2.msra.mxu0 0.0
        %1518 = vmatprep.subr.mxu0 0.0
        %1519 = vmatpush2.msra.mxu0 0.0
        %1520 = vmatprep.subr.mxu0 0.0
        %1521 = vmatpush2.msra.mxu0 0.0
        %1522 = vmatprep.subr.mxu0 0.0
        %1523 = vmatpush2.msra.mxu0 0.0
        %1524 = vmatprep.subr.mxu0 0.0
        %1525 = vmatpush2.msra.mxu0 0.0
        %1526 = vmatprep.mubr.f32.mxu0 0.0
        %v1527 = vand.u32 %v1221, 4294901760
        %v1528 = vsub.f32 %v1221, %v1527
        %v1529 = vand.u32 %v1528, 4294901760
        %1530 = vmatmul.mubr.f32.gmra.mxu0 %v1529
        %v1531 = vpop.f32.mrf.mxu0
        %v1532 = vadd.f32 %v1456, %v1531
        %v1533 = vpop.f32.mrf.mxu0
        %v1534 = vadd.f32 %v1458, %v1533
        %1535 = vdwg.mxu0
        %1536 = vmatprep.subr.mxu0 0.0
        %1537 = vmatpush1.msra.mxu0 0.0
        %1538 = vmatprep.subr.mxu0 0.0
        %1539 = vmatpush1.msra.mxu0 0.0
        %1540 = vmatprep.subr.mxu0 0.0
        %1541 = vmatpush1.msra.mxu0 0.0
        %1542 = vmatprep.subr.mxu0 0.0
        %1543 = vmatpush1.msra.mxu0 0.0
        %1544 = vmatprep.subr.mxu0 0.0
        %1545 = vmatpush1.msra.mxu0 0.0
        %1546 = vmatprep.subr.mxu0 0.0
        %1547 = vmatpush1.msra.mxu0 0.0
        %1548 = vmatprep.subr.mxu0 0.0
        %1549 = vmatpush1.msra.mxu0 0.0
        %1550 = vmatprep.subr.mxu0 0.0
        %1551 = vmatpush1.msra.mxu0 0.0
        %1552 = vmatprep.subr.mxu0 0.0
        %1553 = vmatpush1.msra.mxu0 0.0
        %1554 = vmatprep.subr.mxu0 0.0
        %1555 = vmatpush1.msra.mxu0 0.0
        %1556 = vmatprep.subr.mxu0 0.0
        %1557 = vmatpush1.msra.mxu0 0.0
        %1558 = vmatprep.subr.mxu0 0.0
        %1559 = vmatpush1.msra.mxu0 0.0
        %1560 = vmatprep.subr.mxu0 0.0
        %1561 = vmatpush1.msra.mxu0 0.0
        %1562 = vmatprep.subr.mxu0 0.0
        %1563 = vmatpush1.msra.mxu0 0.0
        %1564 = vmatprep.subr.mxu0 0.0
        %1565 = vmatpush1.msra.mxu0 0.0
        %v1566 = vand.u32 %v1218, 4294901760
        %v1567 = vsub.f32 %v1218, %v1566
        %v1568 = vand.u32 %v1567, 4294901760
        %1569 = vmatprep.subr.mxu0 %v1568
        %v1570 = vand.u32 %v1217, 4294901760
        %v1571 = vsub.f32 %v1217, %v1570
        %v1572 = vand.u32 %v1571, 4294901760
        %1573 = vmatpush1.msra.mxu0 %v1572
        %1574 = vmatprep.subr.mxu0 0.0
        %1575 = vmatpush2.msra.mxu0 0.0
        %1576 = vmatprep.subr.mxu0 0.0
        %1577 = vmatpush2.msra.mxu0 0.0
        %1578 = vmatprep.subr.mxu0 0.0
        %1579 = vmatpush2.msra.mxu0 0.0
        %1580 = vmatprep.subr.mxu0 0.0
        %1581 = vmatpush2.msra.mxu0 0.0
        %1582 = vmatprep.subr.mxu0 0.0
        %1583 = vmatpush2.msra.mxu0 0.0
        %1584 = vmatprep.subr.mxu0 0.0
        %1585 = vmatpush2.msra.mxu0 0.0
        %1586 = vmatprep.subr.mxu0 0.0
        %1587 = vmatpush2.msra.mxu0 0.0
        %1588 = vmatprep.subr.mxu0 0.0
        %1589 = vmatpush2.msra.mxu0 0.0
        %1590 = vmatprep.subr.mxu0 0.0
        %1591 = vmatpush2.msra.mxu0 0.0
        %1592 = vmatprep.subr.mxu0 0.0
        %1593 = vmatpush2.msra.mxu0 0.0
        %1594 = vmatprep.subr.mxu0 0.0
        %1595 = vmatpush2.msra.mxu0 0.0
        %1596 = vmatprep.subr.mxu0 0.0
        %1597 = vmatpush2.msra.mxu0 0.0
        %1598 = vmatprep.subr.mxu0 0.0
        %1599 = vmatpush2.msra.mxu0 0.0
        %1600 = vmatprep.subr.mxu0 0.0
        %1601 = vmatpush2.msra.mxu0 0.0
        %1602 = vmatprep.subr.mxu0 0.0
        %1603 = vmatpush2.msra.mxu0 0.0
        %1604 = vmatprep.subr.mxu0 0.0
        %1605 = vmatpush2.msra.mxu0 0.0
        %1606 = vmatprep.mubr.f32.mxu0 0.0
        %v1607 = vand.u32 %v1221, 4294901760
        %1608 = vmatmul.mubr.f32.gmra.mxu0 %v1607
        %v1609 = vpop.f32.mrf.mxu0
        %v1610 = vadd.f32 %v1532, %v1609
        %v1611 = vpop.f32.mrf.mxu0
        %v1612 = vadd.f32 %v1534, %v1611
        %1613 = vdwg.mxu0
        %1614 = vmatprep.subr.mxu0 0.0
        %1615 = vmatpush1.msra.mxu0 0.0
        %1616 = vmatprep.subr.mxu0 0.0
        %1617 = vmatpush1.msra.mxu0 0.0
        %1618 = vmatprep.subr.mxu0 0.0
        %1619 = vmatpush1.msra.mxu0 0.0
        %1620 = vmatprep.subr.mxu0 0.0
        %1621 = vmatpush1.msra.mxu0 0.0
        %1622 = vmatprep.subr.mxu0 0.0
        %1623 = vmatpush1.msra.mxu0 0.0
        %1624 = vmatprep.subr.mxu0 0.0
        %1625 = vmatpush1.msra.mxu0 0.0
        %1626 = vmatprep.subr.mxu0 0.0
        %1627 = vmatpush1.msra.mxu0 0.0
        %1628 = vmatprep.subr.mxu0 0.0
        %1629 = vmatpush1.msra.mxu0 0.0
        %1630 = vmatprep.subr.mxu0 0.0
        %1631 = vmatpush1.msra.mxu0 0.0
        %1632 = vmatprep.subr.mxu0 0.0
        %1633 = vmatpush1.msra.mxu0 0.0
        %1634 = vmatprep.subr.mxu0 0.0
        %1635 = vmatpush1.msra.mxu0 0.0
        %1636 = vmatprep.subr.mxu0 0.0
        %1637 = vmatpush1.msra.mxu0 0.0
        %1638 = vmatprep.subr.mxu0 0.0
        %1639 = vmatpush1.msra.mxu0 0.0
        %1640 = vmatprep.subr.mxu0 0.0
        %1641 = vmatpush1.msra.mxu0 0.0
        %1642 = vmatprep.subr.mxu0 0.0
        %1643 = vmatpush1.msra.mxu0 0.0
        %v1644 = vand.u32 %v1218, 4294901760
        %1645 = vmatprep.subr.mxu0 %v1644
        %v1646 = vand.u32 %v1217, 4294901760
        %1647 = vmatpush1.msra.mxu0 %v1646
        %1648 = vmatprep.subr.mxu0 0.0
        %1649 = vmatpush2.msra.mxu0 0.0
        %1650 = vmatprep.subr.mxu0 0.0
        %1651 = vmatpush2.msra.mxu0 0.0
        %1652 = vmatprep.subr.mxu0 0.0
        %1653 = vmatpush2.msra.mxu0 0.0
        %1654 = vmatprep.subr.mxu0 0.0
        %1655 = vmatpush2.msra.mxu0 0.0
        %1656 = vmatprep.subr.mxu0 0.0
        %1657 = vmatpush2.msra.mxu0 0.0
        %1658 = vmatprep.subr.mxu0 0.0
        %1659 = vmatpush2.msra.mxu0 0.0
        %1660 = vmatprep.subr.mxu0 0.0
        %1661 = vmatpush2.msra.mxu0 0.0
        %1662 = vmatprep.subr.mxu0 0.0
        %1663 = vmatpush2.msra.mxu0 0.0
        %1664 = vmatprep.subr.mxu0 0.0
        %1665 = vmatpush2.msra.mxu0 0.0
        %1666 = vmatprep.subr.mxu0 0.0
        %1667 = vmatpush2.msra.mxu0 0.0
        %1668 = vmatprep.subr.mxu0 0.0
        %1669 = vmatpush2.msra.mxu0 0.0
        %1670 = vmatprep.subr.mxu0 0.0
        %1671 = vmatpush2.msra.mxu0 0.0
        %1672 = vmatprep.subr.mxu0 0.0
        %1673 = vmatpush2.msra.mxu0 0.0
        %1674 = vmatprep.subr.mxu0 0.0
        %1675 = vmatpush2.msra.mxu0 0.0
        %1676 = vmatprep.subr.mxu0 0.0
        %1677 = vmatpush2.msra.mxu0 0.0
        %1678 = vmatprep.subr.mxu0 0.0
        %1679 = vmatpush2.msra.mxu0 0.0
        %1680 = vmatprep.mubr.f32.mxu0 0.0
        %v1681 = vand.u32 %v1221, 4294901760
        %1682 = vmatmul.mubr.f32.gmra.mxu0 %v1681
        %v1683 = vpop.f32.mrf.mxu0
        %v1684 = vadd.f32 %v1610, %v1683
        %v1685 = vpop.f32.mrf.mxu0
        %v1686 = vadd.f32 %v1612, %v1685
        %1687 = vdwg.mxu0
        %1688 = vset.pattern.permute.xlu0 3
        %1689 = vperm.xlu0 %1688, %v1203
        %v1690 = vpop.permute.xlu0 %1689
        %v1692 = vmul.f32 %v1684, %v1690
        %v1693 = vmul.f32 %v1686, %v1690
        %1694 = vset.pattern.permute.xlu0 4
        %1695 = vperm.xlu0 %1694, %v1203
        %v1696 = vpop.permute.xlu0 %1695
        %v1698 = vadd.f32 %v1692, %v1696
        %v1699 = vadd.f32 %v1693, %v1696
        %v1700 = vmax.f32 %v1698, 0.0
        %v1701 = vmax.f32 %v1699, 0.0
        %v1702 = vld [vmem:[%s4] sm:$0xff]
        %v1703 = vld [vmem:[%s4 + $0x8] sm:$0xff]
        %v1704 = vld [vmem:[%s4 + $0x10] sm:$0xff]
        %v1705 = vld [vmem:[%s4 + $0x18] sm:$0xff]
        %v1706 = vld [vmem:[%s4 + $0x20] sm:$0xff]
        %v1707 = vld [vmem:[%s4 + $0x28] sm:$0xff]
        %v1708 = vld [vmem:[%s4 + $0x30] sm:$0xff]
        %v1709 = vld [vmem:[%s4 + $0x38] sm:$0xff]
        %v1710 = vld [vmem:[%s4 + $0x40] sm:$0xff]
        %v1711 = vld [vmem:[%s4 + $0x48] sm:$0xff]
        %v1712 = vld [vmem:[%s4 + $0x50] sm:$0xff]
        %v1713 = vld [vmem:[%s4 + $0x58] sm:$0xff]
        %v1714 = vld [vmem:[%s4 + $0x60] sm:$0xff]
        %v1715 = vld [vmem:[%s4 + $0x68] sm:$0xff]
        %v1716 = vld [vmem:[%s4 + $0x70] sm:$0xff]
        %v1717 = vld [vmem:[%s4 + $0x78] sm:$0xff]
        %v1718 = vld [vmem:[%s4 + $0x80] sm:$0xff]
        %v1719 = vld [vmem:[%s4 + $0x88] sm:$0xff]
        %v1720 = vld [vmem:[%s4 + $0x90] sm:$0xff]
        %v1721 = vld [vmem:[%s4 + $0x98] sm:$0xff]
        %v1722 = vld [vmem:[%s4 + $0xa0] sm:$0xff]
        %v1723 = vld [vmem:[%s4 + $0xa8] sm:$0xff]
        %v1724 = vld [vmem:[%s4 + $0xb0] sm:$0xff]
        %v1725 = vld [vmem:[%s4 + $0xb8] sm:$0xff]
        %v1726 = vld [vmem:[%s4 + $0xc0] sm:$0xff]
        %v1727 = vld [vmem:[%s4 + $0xc8] sm:$0xff]
        %v1728 = vld [vmem:[%s4 + $0xd0] sm:$0xff]
        %v1729 = vld [vmem:[%s4 + $0xd8] sm:$0xff]
        %v1730 = vld [vmem:[%s4 + $0xe0] sm:$0xff]
        %v1731 = vld [vmem:[%s4 + $0xe8] sm:$0xff]
        %v1732 = vld [vmem:[%s4 + $0xf0] sm:$0xff]
        %v1733 = vld [vmem:[%s4 + $0xf8] sm:$0xff]
        %1734 = vmatprep.subr.mxu0 0.0
        %v1735 = vand.u32 %v1717, 4294901760
        %1736 = vmatpush1.msra.mxu0 %v1735
        %1737 = vmatprep.subr.mxu0 0.0
        %v1738 = vand.u32 %v1716, 4294901760
        %1739 = vmatpush1.msra.mxu0 %v1738
        %1740 = vmatprep.subr.mxu0 0.0
        %v1741 = vand.u32 %v1715, 4294901760
        %1742 = vmatpush1.msra.mxu0 %v1741
        %1743 = vmatprep.subr.mxu0 0.0
        %v1744 = vand.u32 %v1714, 4294901760
        %1745 = vmatpush1.msra.mxu0 %v1744
        %1746 = vmatprep.subr.mxu0 0.0
        %v1747 = vand.u32 %v1713, 4294901760
        %1748 = vmatpush1.msra.mxu0 %v1747
        %1749 = vmatprep.subr.mxu0 0.0
        %v1750 = vand.u32 %v1712, 4294901760
        %1751 = vmatpush1.msra.mxu0 %v1750
        %1752 = vmatprep.subr.mxu0 0.0
        %v1753 = vand.u32 %v1711, 4294901760
        %1754 = vmatpush1.msra.mxu0 %v1753
        %1755 = vmatprep.subr.mxu0 0.0
        %v1756 = vand.u32 %v1710, 4294901760
        %1757 = vmatpush1.msra.mxu0 %v1756
        %1758 = vmatprep.subr.mxu0 0.0
        %v1759 = vand.u32 %v1709, 4294901760
        %1760 = vmatpush1.msra.mxu0 %v1759
        %1761 = vmatprep.subr.mxu0 0.0
        %v1762 = vand.u32 %v1708, 4294901760
        %1763 = vmatpush1.msra.mxu0 %v1762
        %1764 = vmatprep.subr.mxu0 0.0
        %v1765 = vand.u32 %v1707, 4294901760
        %1766 = vmatpush1.msra.mxu0 %v1765
        %1767 = vmatprep.subr.mxu0 0.0
        %v1768 = vand.u32 %v1706, 4294901760
        %1769 = vmatpush1.msra.mxu0 %v1768
        %1770 = vmatprep.subr.mxu0 0.0
        %v1771 = vand.u32 %v1705, 4294901760
        %1772 = vmatpush1.msra.mxu0 %v1771
        %1773 = vmatprep.subr.mxu0 0.0
        %v1774 = vand.u32 %v1704, 4294901760
        %1775 = vmatpush1.msra.mxu0 %v1774
        %1776 = vmatprep.subr.mxu0 0.0
        %v1777 = vand.u32 %v1703, 4294901760
        %1778 = vmatpush1.msra.mxu0 %v1777
        %1779 = vmatprep.subr.mxu0 0.0
        %v1780 = vand.u32 %v1702, 4294901760
        %1781 = vmatpush1.msra.mxu0 %v1780
        %1782 = vmatprep.subr.mxu0 0.0
        %v1783 = vand.u32 %v1733, 4294901760
        %1784 = vmatpush2.msra.mxu0 %v1783
        %1785 = vmatprep.subr.mxu0 0.0
        %v1786 = vand.u32 %v1732, 4294901760
        %1787 = vmatpush2.msra.mxu0 %v1786
        %1788 = vmatprep.subr.mxu0 0.0
        %v1789 = vand.u32 %v1731, 4294901760
        %1790 = vmatpush2.msra.mxu0 %v1789
        %1791 = vmatprep.subr.mxu0 0.0
        %v1792 = vand.u32 %v1730, 4294901760
        %1793 = vmatpush2.msra.mxu0 %v1792
        %1794 = vmatprep.subr.mxu0 0.0
        %v1795 = vand.u32 %v1729, 4294901760
        %1796 = vmatpush2.msra.mxu0 %v1795
        %1797 = vmatprep.subr.mxu0 0.0
        %v1798 = vand.u32 %v1728, 4294901760
        %1799 = vmatpush2.msra.mxu0 %v1798
        %1800 = vmatprep.subr.mxu0 0.0
        %v1801 = vand.u32 %v1727, 4294901760
        %1802 = vmatpush2.msra.mxu0 %v1801
        %1803 = vmatprep.subr.mxu0 0.0
        %v1804 = vand.u32 %v1726, 4294901760
        %1805 = vmatpush2.msra.mxu0 %v1804
        %1806 = vmatprep.subr.mxu0 0.0
        %v1807 = vand.u32 %v1725, 4294901760
        %1808 = vmatpush2.msra.mxu0 %v1807
        %1809 = vmatprep.subr.mxu0 0.0
        %v1810 = vand.u32 %v1724, 4294901760
        %1811 = vmatpush2.msra.mxu0 %v1810
        %1812 = vmatprep.subr.mxu0 0.0
        %v1813 = vand.u32 %v1723, 4294901760
        %1814 = vmatpush2.msra.mxu0 %v1813
        %1815 = vmatprep.subr.mxu0 0.0
        %v1816 = vand.u32 %v1722, 4294901760
        %1817 = vmatpush2.msra.mxu0 %v1816
        %1818 = vmatprep.subr.mxu0 0.0
        %v1819 = vand.u32 %v1721, 4294901760
        %1820 = vmatpush2.msra.mxu0 %v1819
        %1821 = vmatprep.subr.mxu0 0.0
        %v1822 = vand.u32 %v1720, 4294901760
        %1823 = vmatpush2.msra.mxu0 %v1822
        %1824 = vmatprep.subr.mxu0 0.0
        %v1825 = vand.u32 %v1719, 4294901760
        %1826 = vmatpush2.msra.mxu0 %v1825
        %1827 = vmatprep.subr.mxu0 0.0
        %v1828 = vand.u32 %v1718, 4294901760
        %1829 = vmatpush2.msra.mxu0 %v1828
        %v1830 = vand.u32 %v1701, 4294901760
        %v1831 = vsub.f32 %v1701, %v1830
        %v1832 = vand.u32 %v1831, 4294901760
        %v1833 = vsub.f32 %v1831, %v1832
        %v1834 = vand.u32 %v1833, 4294901760
        %1835 = vmatprep.mubr.f32.mxu0 %v1834
        %v1836 = vand.u32 %v1700, 4294901760
        %v1837 = vsub.f32 %v1700, %v1836
        %v1838 = vand.u32 %v1837, 4294901760
        %v1839 = vsub.f32 %v1837, %v1838
        %v1840 = vand.u32 %v1839, 4294901760
        %1841 = vmatmul.mubr.f32.gmra.mxu0 %v1840
        %v1842 = vpop.f32.mrf.mxu0
        %v1843 = vadd.f32 0.0, %v1842
        %v1844 = vpop.f32.mrf.mxu0
        %1845 = vdwg.mxu0
        %1846 = vmatprep.subr.mxu0 0.0
        %v1847 = vand.u32 %v1717, 4294901760
        %v1848 = vsub.f32 %v1717, %v1847
        %v1849 = vand.u32 %v1848, 4294901760
        %v1850 = vsub.f32 %v1848, %v1849
        %v1851 = vand.u32 %v1850, 4294901760
        %1852 = vmatpush1.msra.mxu0 %v1851
        %1853 = vmatprep.subr.mxu0 0.0
        %v1854 = vand.u32 %v1716, 4294901760
        %v1855 = vsub.f32 %v1716, %v1854
        %v1856 = vand.u32 %v1855, 4294901760
        %v1857 = vsub.f32 %v1855, %v1856
        %v1858 = vand.u32 %v1857, 4294901760
        %1859 = vmatpush1.msra.mxu0 %v1858
        %1860 = vmatprep.subr.mxu0 0.0
        %v1861 = vand.u32 %v1715, 4294901760
        %v1862 = vsub.f32 %v1715, %v1861
        %v1863 = vand.u32 %v1862, 4294901760
        %v1864 = vsub.f32 %v1862, %v1863
        %v1865 = vand.u32 %v1864, 4294901760
        %1866 = vmatpush1.msra.mxu0 %v1865
        %1867 = vmatprep.subr.mxu0 0.0
        %v1868 = vand.u32 %v1714, 4294901760
        %v1869 = vsub.f32 %v1714, %v1868
        %v1870 = vand.u32 %v1869, 4294901760
        %v1871 = vsub.f32 %v1869, %v1870
        %v1872 = vand.u32 %v1871, 4294901760
        %1873 = vmatpush1.msra.mxu0 %v1872
        %1874 = vmatprep.subr.mxu0 0.0
        %v1875 = vand.u32 %v1713, 4294901760
        %v1876 = vsub.f32 %v1713, %v1875
        %v1877 = vand.u32 %v1876, 4294901760
        %v1878 = vsub.f32 %v1876, %v1877
        %v1879 = vand.u32 %v1878, 4294901760
        %1880 = vmatpush1.msra.mxu0 %v1879
        %1881 = vmatprep.subr.mxu0 0.0
        %v1882 = vand.u32 %v1712, 4294901760
        %v1883 = vsub.f32 %v1712, %v1882
        %v1884 = vand.u32 %v1883, 4294901760
        %v1885 = vsub.f32 %v1883, %v1884
        %v1886 = vand.u32 %v1885, 4294901760
        %1887 = vmatpush1.msra.mxu0 %v1886
        %1888 = vmatprep.subr.mxu0 0.0
        %v1889 = vand.u32 %v1711, 4294901760
        %v1890 = vsub.f32 %v1711, %v1889
        %v1891 = vand.u32 %v1890, 4294901760
        %v1892 = vsub.f32 %v1890, %v1891
        %v1893 = vand.u32 %v1892, 4294901760
        %1894 = vmatpush1.msra.mxu0 %v1893
        %1895 = vmatprep.subr.mxu0 0.0
        %v1896 = vand.u32 %v1710, 4294901760
        %v1897 = vsub.f32 %v1710, %v1896
        %v1898 = vand.u32 %v1897, 4294901760
        %v1899 = vsub.f32 %v1897, %v1898
        %v1900 = vand.u32 %v1899, 4294901760
        %1901 = vmatpush1.msra.mxu0 %v1900
        %1902 = vmatprep.subr.mxu0 0.0
        %v1903 = vand.u32 %v1709, 4294901760
        %v1904 = vsub.f32 %v1709, %v1903
        %v1905 = vand.u32 %v1904, 4294901760
        %v1906 = vsub.f32 %v1904, %v1905
        %v1907 = vand.u32 %v1906, 4294901760
        %1908 = vmatpush1.msra.mxu0 %v1907
        %1909 = vmatprep.subr.mxu0 0.0
        %v1910 = vand.u32 %v1708, 4294901760
        %v1911 = vsub.f32 %v1708, %v1910
        %v1912 = vand.u32 %v1911, 4294901760
        %v1913 = vsub.f32 %v1911, %v1912
        %v1914 = vand.u32 %v1913, 4294901760
        %1915 = vmatpush1.msra.mxu0 %v1914
        %1916 = vmatprep.subr.mxu0 0.0
        %v1917 = vand.u32 %v1707, 4294901760
        %v1918 = vsub.f32 %v1707, %v1917
        %v1919 = vand.u32 %v1918, 4294901760
        %v1920 = vsub.f32 %v1918, %v1919
        %v1921 = vand.u32 %v1920, 4294901760
        %1922 = vmatpush1.msra.mxu0 %v1921
        %1923 = vmatprep.subr.mxu0 0.0
        %v1924 = vand.u32 %v1706, 4294901760
        %v1925 = vsub.f32 %v1706, %v1924
        %v1926 = vand.u32 %v1925, 4294901760
        %v1927 = vsub.f32 %v1925, %v1926
        %v1928 = vand.u32 %v1927, 4294901760
        %1929 = vmatpush1.msra.mxu0 %v1928
        %1930 = vmatprep.subr.mxu0 0.0
        %v1931 = vand.u32 %v1705, 4294901760
        %v1932 = vsub.f32 %v1705, %v1931
        %v1933 = vand.u32 %v1932, 4294901760
        %v1934 = vsub.f32 %v1932, %v1933
        %v1935 = vand.u32 %v1934, 4294901760
        %1936 = vmatpush1.msra.mxu0 %v1935
        %1937 = vmatprep.subr.mxu0 0.0
        %v1938 = vand.u32 %v1704, 4294901760
        %v1939 = vsub.f32 %v1704, %v1938
        %v1940 = vand.u32 %v1939, 4294901760
        %v1941 = vsub.f32 %v1939, %v1940
        %v1942 = vand.u32 %v1941, 4294901760
        %1943 = vmatpush1.msra.mxu0 %v1942
        %1944 = vmatprep.subr.mxu0 0.0
        %v1945 = vand.u32 %v1703, 4294901760
        %v1946 = vsub.f32 %v1703, %v1945
        %v1947 = vand.u32 %v1946, 4294901760
        %v1948 = vsub.f32 %v1946, %v1947
        %v1949 = vand.u32 %v1948, 4294901760
        %1950 = vmatpush1.msra.mxu0 %v1949
        %1951 = vmatprep.subr.mxu0 0.0
        %v1952 = vand.u32 %v1702, 4294901760
        %v1953 = vsub.f32 %v1702, %v1952
        %v1954 = vand.u32 %v1953, 4294901760
        %v1955 = vsub.f32 %v1953, %v1954
        %v1956 = vand.u32 %v1955, 4294901760
        %1957 = vmatpush1.msra.mxu0 %v1956
        %1958 = vmatprep.subr.mxu0 0.0
        %v1959 = vand.u32 %v1733, 4294901760
        %v1960 = vsub.f32 %v1733, %v1959
        %v1961 = vand.u32 %v1960, 4294901760
        %v1962 = vsub.f32 %v1960, %v1961
        %v1963 = vand.u32 %v1962, 4294901760
        %1964 = vmatpush2.msra.mxu0 %v1963
        %1965 = vmatprep.subr.mxu0 0.0
        %v1966 = vand.u32 %v1732, 4294901760
        %v1967 = vsub.f32 %v1732, %v1966
        %v1968 = vand.u32 %v1967, 4294901760
        %v1969 = vsub.f32 %v1967, %v1968
        %v1970 = vand.u32 %v1969, 4294901760
        %1971 = vmatpush2.msra.mxu0 %v1970
        %1972 = vmatprep.subr.mxu0 0.0
        %v1973 = vand.u32 %v1731, 4294901760
        %v1974 = vsub.f32 %v1731, %v1973
        %v1975 = vand.u32 %v1974, 4294901760
        %v1976 = vsub.f32 %v1974, %v1975
        %v1977 = vand.u32 %v1976, 4294901760
        %1978 = vmatpush2.msra.mxu0 %v1977
        %1979 = vmatprep.subr.mxu0 0.0
        %v1980 = vand.u32 %v1730, 4294901760
        %v1981 = vsub.f32 %v1730, %v1980
        %v1982 = vand.u32 %v1981, 4294901760
        %v1983 = vsub.f32 %v1981, %v1982
        %v1984 = vand.u32 %v1983, 4294901760
        %1985 = vmatpush2.msra.mxu0 %v1984
        %1986 = vmatprep.subr.mxu0 0.0
        %v1987 = vand.u32 %v1729, 4294901760
        %v1988 = vsub.f32 %v1729, %v1987
        %v1989 = vand.u32 %v1988, 4294901760
        %v1990 = vsub.f32 %v1988, %v1989
        %v1991 = vand.u32 %v1990, 4294901760
        %1992 = vmatpush2.msra.mxu0 %v1991
        %1993 = vmatprep.subr.mxu0 0.0
        %v1994 = vand.u32 %v1728, 4294901760
        %v1995 = vsub.f32 %v1728, %v1994
        %v1996 = vand.u32 %v1995, 4294901760
        %v1997 = vsub.f32 %v1995, %v1996
        %v1998 = vand.u32 %v1997, 4294901760
        %1999 = vmatpush2.msra.mxu0 %v1998
        %2000 = vmatprep.subr.mxu0 0.0
        %v2001 = vand.u32 %v1727, 4294901760
        %v2002 = vsub.f32 %v1727, %v2001
        %v2003 = vand.u32 %v2002, 4294901760
        %v2004 = vsub.f32 %v2002, %v2003
        %v2005 = vand.u32 %v2004, 4294901760
        %2006 = vmatpush2.msra.mxu0 %v2005
        %2007 = vmatprep.subr.mxu0 0.0
        %v2008 = vand.u32 %v1726, 4294901760
        %v2009 = vsub.f32 %v1726, %v2008
        %v2010 = vand.u32 %v2009, 4294901760
        %v2011 = vsub.f32 %v2009, %v2010
        %v2012 = vand.u32 %v2011, 4294901760
        %2013 = vmatpush2.msra.mxu0 %v2012
        %2014 = vmatprep.subr.mxu0 0.0
        %v2015 = vand.u32 %v1725, 4294901760
        %v2016 = vsub.f32 %v1725, %v2015
        %v2017 = vand.u32 %v2016, 4294901760
        %v2018 = vsub.f32 %v2016, %v2017
        %v2019 = vand.u32 %v2018, 4294901760
        %2020 = vmatpush2.msra.mxu0 %v2019
        %2021 = vmatprep.subr.mxu0 0.0
        %v2022 = vand.u32 %v1724, 4294901760
        %v2023 = vsub.f32 %v1724, %v2022
        %v2024 = vand.u32 %v2023, 4294901760
        %v2025 = vsub.f32 %v2023, %v2024
        %v2026 = vand.u32 %v2025, 4294901760
        %2027 = vmatpush2.msra.mxu0 %v2026
        %2028 = vmatprep.subr.mxu0 0.0
        %v2029 = vand.u32 %v1723, 4294901760
        %v2030 = vsub.f32 %v1723, %v2029
        %v2031 = vand.u32 %v2030, 4294901760
        %v2032 = vsub.f32 %v2030, %v2031
        %v2033 = vand.u32 %v2032, 4294901760
        %2034 = vmatpush2.msra.mxu0 %v2033
        %2035 = vmatprep.subr.mxu0 0.0
        %v2036 = vand.u32 %v1722, 4294901760
        %v2037 = vsub.f32 %v1722, %v2036
        %v2038 = vand.u32 %v2037, 4294901760
        %v2039 = vsub.f32 %v2037, %v2038
        %v2040 = vand.u32 %v2039, 4294901760
        %2041 = vmatpush2.msra.mxu0 %v2040
        %2042 = vmatprep.subr.mxu0 0.0
        %v2043 = vand.u32 %v1721, 4294901760
        %v2044 = vsub.f32 %v1721, %v2043
        %v2045 = vand.u32 %v2044, 4294901760
        %v2046 = vsub.f32 %v2044, %v2045
        %v2047 = vand.u32 %v2046, 4294901760
        %2048 = vmatpush2.msra.mxu0 %v2047
        %2049 = vmatprep.subr.mxu0 0.0
        %v2050 = vand.u32 %v1720, 4294901760
        %v2051 = vsub.f32 %v1720, %v2050
        %v2052 = vand.u32 %v2051, 4294901760
        %v2053 = vsub.f32 %v2051, %v2052
        %v2054 = vand.u32 %v2053, 4294901760
        %2055 = vmatpush2.msra.mxu0 %v2054
        %2056 = vmatprep.subr.mxu0 0.0
        %v2057 = vand.u32 %v1719, 4294901760
        %v2058 = vsub.f32 %v1719, %v2057
        %v2059 = vand.u32 %v2058, 4294901760
        %v2060 = vsub.f32 %v2058, %v2059
        %v2061 = vand.u32 %v2060, 4294901760
        %2062 = vmatpush2.msra.mxu0 %v2061
        %2063 = vmatprep.subr.mxu0 0.0
        %v2064 = vand.u32 %v1718, 4294901760
        %v2065 = vsub.f32 %v1718, %v2064
        %v2066 = vand.u32 %v2065, 4294901760
        %v2067 = vsub.f32 %v2065, %v2066
        %v2068 = vand.u32 %v2067, 4294901760
        %2069 = vmatpush2.msra.mxu0 %v2068
        %v2070 = vand.u32 %v1701, 4294901760
        %2071 = vmatprep.mubr.f32.mxu0 %v2070
        %v2072 = vand.u32 %v1700, 4294901760
        %2073 = vmatmul.mubr.f32.gmra.mxu0 %v2072
        %v2074 = vpop.f32.mrf.mxu0
        %v2075 = vadd.f32 %v1843, %v2074
        %v2076 = vpop.f32.mrf.mxu0
        %2077 = vdwg.mxu0
        %2078 = vmatprep.subr.mxu0 0.0
        %v2079 = vand.u32 %v1717, 4294901760
        %v2080 = vsub.f32 %v1717, %v2079
        %2081 = vmatpush1.msra.mxu0 %v2080
        %2082 = vmatprep.subr.mxu0 0.0
        %v2083 = vand.u32 %v1716, 4294901760
        %v2084 = vsub.f32 %v1716, %v2083
        %2085 = vmatpush1.msra.mxu0 %v2084
        %2086 = vmatprep.subr.mxu0 0.0
        %v2087 = vand.u32 %v1715, 4294901760
        %v2088 = vsub.f32 %v1715, %v2087
        %2089 = vmatpush1.msra.mxu0 %v2088
        %2090 = vmatprep.subr.mxu0 0.0
        %v2091 = vand.u32 %v1714, 4294901760
        %v2092 = vsub.f32 %v1714, %v2091
        %2093 = vmatpush1.msra.mxu0 %v2092
        %2094 = vmatprep.subr.mxu0 0.0
        %v2095 = vand.u32 %v1713, 4294901760
        %v2096 = vsub.f32 %v1713, %v2095
        %2097 = vmatpush1.msra.mxu0 %v2096
        %2098 = vmatprep.subr.mxu0 0.0
        %v2099 = vand.u32 %v1712, 4294901760
        %v2100 = vsub.f32 %v1712, %v2099
        %2101 = vmatpush1.msra.mxu0 %v2100
        %2102 = vmatprep.subr.mxu0 0.0
        %v2103 = vand.u32 %v1711, 4294901760
        %v2104 = vsub.f32 %v1711, %v2103
        %2105 = vmatpush1.msra.mxu0 %v2104
        %2106 = vmatprep.subr.mxu0 0.0
        %v2107 = vand.u32 %v1710, 4294901760
        %v2108 = vsub.f32 %v1710, %v2107
        %2109 = vmatpush1.msra.mxu0 %v2108
        %2110 = vmatprep.subr.mxu0 0.0
        %v2111 = vand.u32 %v1709, 4294901760
        %v2112 = vsub.f32 %v1709, %v2111
        %2113 = vmatpush1.msra.mxu0 %v2112
        %2114 = vmatprep.subr.mxu0 0.0
        %v2115 = vand.u32 %v1708, 4294901760
        %v2116 = vsub.f32 %v1708, %v2115
        %2117 = vmatpush1.msra.mxu0 %v2116
        %2118 = vmatprep.subr.mxu0 0.0
        %v2119 = vand.u32 %v1707, 4294901760
        %v2120 = vsub.f32 %v1707, %v2119
        %2121 = vmatpush1.msra.mxu0 %v2120
        %2122 = vmatprep.subr.mxu0 0.0
        %v2123 = vand.u32 %v1706, 4294901760
        %v2124 = vsub.f32 %v1706, %v2123
        %2125 = vmatpush1.msra.mxu0 %v2124
        %2126 = vmatprep.subr.mxu0 0.0
        %v2127 = vand.u32 %v1705, 4294901760
        %v2128 = vsub.f32 %v1705, %v2127
        %2129 = vmatpush1.msra.mxu0 %v2128
        %2130 = vmatprep.subr.mxu0 0.0
        %v2131 = vand.u32 %v1704, 4294901760
        %v2132 = vsub.f32 %v1704, %v2131
        %2133 = vmatpush1.msra.mxu0 %v2132
        %2134 = vmatprep.subr.mxu0 0.0
        %v2135 = vand.u32 %v1703, 4294901760
        %v2136 = vsub.f32 %v1703, %v2135
        %2137 = vmatpush1.msra.mxu0 %v2136
        %2138 = vmatprep.subr.mxu0 0.0
        %v2139 = vand.u32 %v1702, 4294901760
        %v2140 = vsub.f32 %v1702, %v2139
        %2141 = vmatpush1.msra.mxu0 %v2140
        %2142 = vmatprep.subr.mxu0 0.0
        %v2143 = vand.u32 %v1733, 4294901760
        %v2144 = vsub.f32 %v1733, %v2143
        %2145 = vmatpush2.msra.mxu0 %v2144
        %2146 = vmatprep.subr.mxu0 0.0
        %v2147 = vand.u32 %v1732, 4294901760
        %v2148 = vsub.f32 %v1732, %v2147
        %2149 = vmatpush2.msra.mxu0 %v2148
        %2150 = vmatprep.subr.mxu0 0.0
        %v2151 = vand.u32 %v1731, 4294901760
        %v2152 = vsub.f32 %v1731, %v2151
        %2153 = vmatpush2.msra.mxu0 %v2152
        %2154 = vmatprep.subr.mxu0 0.0
        %v2155 = vand.u32 %v1730, 4294901760
        %v2156 = vsub.f32 %v1730, %v2155
        %2157 = vmatpush2.msra.mxu0 %v2156
        %2158 = vmatprep.subr.mxu0 0.0
        %v2159 = vand.u32 %v1729, 4294901760
        %v2160 = vsub.f32 %v1729, %v2159
        %2161 = vmatpush2.msra.mxu0 %v2160
        %2162 = vmatprep.subr.mxu0 0.0
        %v2163 = vand.u32 %v1728, 4294901760
        %v2164 = vsub.f32 %v1728, %v2163
        %2165 = vmatpush2.msra.mxu0 %v2164
        %2166 = vmatprep.subr.mxu0 0.0
        %v2167 = vand.u32 %v1727, 4294901760
        %v2168 = vsub.f32 %v1727, %v2167
        %2169 = vmatpush2.msra.mxu0 %v2168
        %2170 = vmatprep.subr.mxu0 0.0
        %v2171 = vand.u32 %v1726, 4294901760
        %v2172 = vsub.f32 %v1726, %v2171
        %2173 = vmatpush2.msra.mxu0 %v2172
        %2174 = vmatprep.subr.mxu0 0.0
        %v2175 = vand.u32 %v1725, 4294901760
        %v2176 = vsub.f32 %v1725, %v2175
        %2177 = vmatpush2.msra.mxu0 %v2176
        %2178 = vmatprep.subr.mxu0 0.0
        %v2179 = vand.u32 %v1724, 4294901760
        %v2180 = vsub.f32 %v1724, %v2179
        %2181 = vmatpush2.msra.mxu0 %v2180
        %2182 = vmatprep.subr.mxu0 0.0
        %v2183 = vand.u32 %v1723, 4294901760
        %v2184 = vsub.f32 %v1723, %v2183
        %2185 = vmatpush2.msra.mxu0 %v2184
        %2186 = vmatprep.subr.mxu0 0.0
        %v2187 = vand.u32 %v1722, 4294901760
        %v2188 = vsub.f32 %v1722, %v2187
        %2189 = vmatpush2.msra.mxu0 %v2188
        %2190 = vmatprep.subr.mxu0 0.0
        %v2191 = vand.u32 %v1721, 4294901760
        %v2192 = vsub.f32 %v1721, %v2191
        %2193 = vmatpush2.msra.mxu0 %v2192
        %2194 = vmatprep.subr.mxu0 0.0
        %v2195 = vand.u32 %v1720, 4294901760
        %v2196 = vsub.f32 %v1720, %v2195
        %2197 = vmatpush2.msra.mxu0 %v2196
        %2198 = vmatprep.subr.mxu0 0.0
        %v2199 = vand.u32 %v1719, 4294901760
        %v2200 = vsub.f32 %v1719, %v2199
        %2201 = vmatpush2.msra.mxu0 %v2200
        %2202 = vmatprep.subr.mxu0 0.0
        %v2203 = vand.u32 %v1718, 4294901760
        %v2204 = vsub.f32 %v1718, %v2203
        %2205 = vmatpush2.msra.mxu0 %v2204
        %v2206 = vand.u32 %v1701, 4294901760
        %v2207 = vsub.f32 %v1701, %v2206
        %2208 = vmatprep.mubr.f32.mxu0 %v2207
        %v2209 = vand.u32 %v1700, 4294901760
        %v2210 = vsub.f32 %v1700, %v2209
        %2211 = vmatmul.mubr.f32.gmra.mxu0 %v2210
        %v2212 = vpop.f32.mrf.mxu0
        %v2213 = vadd.f32 %v2075, %v2212
        %v2214 = vpop.f32.mrf.mxu0
        %2215 = vdwg.mxu0
        %2216 = vmatprep.subr.mxu0 0.0
        %v2217 = vand.u32 %v1717, 4294901760
        %2218 = vmatpush1.msra.mxu0 %v2217
        %2219 = vmatprep.subr.mxu0 0.0
        %v2220 = vand.u32 %v1716, 4294901760
        %2221 = vmatpush1.msra.mxu0 %v2220
        %2222 = vmatprep.subr.mxu0 0.0
        %v2223 = vand.u32 %v1715, 4294901760
        %2224 = vmatpush1.msra.mxu0 %v2223
        %2225 = vmatprep.subr.mxu0 0.0
        %v2226 = vand.u32 %v1714, 4294901760
        %2227 = vmatpush1.msra.mxu0 %v2226
        %2228 = vmatprep.subr.mxu0 0.0
        %v2229 = vand.u32 %v1713, 4294901760
        %2230 = vmatpush1.msra.mxu0 %v2229
        %2231 = vmatprep.subr.mxu0 0.0
        %v2232 = vand.u32 %v1712, 4294901760
        %2233 = vmatpush1.msra.mxu0 %v2232
        %2234 = vmatprep.subr.mxu0 0.0
        %v2235 = vand.u32 %v1711, 4294901760
        %2236 = vmatpush1.msra.mxu0 %v2235
        %2237 = vmatprep.subr.mxu0 0.0
        %v2238 = vand.u32 %v1710, 4294901760
        %2239 = vmatpush1.msra.mxu0 %v2238
        %2240 = vmatprep.subr.mxu0 0.0
        %v2241 = vand.u32 %v1709, 4294901760
        %2242 = vmatpush1.msra.mxu0 %v2241
        %2243 = vmatprep.subr.mxu0 0.0
        %v2244 = vand.u32 %v1708, 4294901760
        %2245 = vmatpush1.msra.mxu0 %v2244
        %2246 = vmatprep.subr.mxu0 0.0
        %v2247 = vand.u32 %v1707, 4294901760
        %2248 = vmatpush1.msra.mxu0 %v2247
        %2249 = vmatprep.subr.mxu0 0.0
        %v2250 = vand.u32 %v1706, 4294901760
        %2251 = vmatpush1.msra.mxu0 %v2250
        %2252 = vmatprep.subr.mxu0 0.0
        %v2253 = vand.u32 %v1705, 4294901760
        %2254 = vmatpush1.msra.mxu0 %v2253
        %2255 = vmatprep.subr.mxu0 0.0
        %v2256 = vand.u32 %v1704, 4294901760
        %2257 = vmatpush1.msra.mxu0 %v2256
        %2258 = vmatprep.subr.mxu0 0.0
        %v2259 = vand.u32 %v1703, 4294901760
        %2260 = vmatpush1.msra.mxu0 %v2259
        %2261 = vmatprep.subr.mxu0 0.0
        %v2262 = vand.u32 %v1702, 4294901760
        %2263 = vmatpush1.msra.mxu0 %v2262
        %2264 = vmatprep.subr.mxu0 0.0
        %v2265 = vand.u32 %v1733, 4294901760
        %2266 = vmatpush2.msra.mxu0 %v2265
        %2267 = vmatprep.subr.mxu0 0.0
        %v2268 = vand.u32 %v1732, 4294901760
        %2269 = vmatpush2.msra.mxu0 %v2268
        %2270 = vmatprep.subr.mxu0 0.0
        %v2271 = vand.u32 %v1731, 4294901760
        %2272 = vmatpush2.msra.mxu0 %v2271
        %2273 = vmatprep.subr.mxu0 0.0
        %v2274 = vand.u32 %v1730, 4294901760
        %2275 = vmatpush2.msra.mxu0 %v2274
        %2276 = vmatprep.subr.mxu0 0.0
        %v2277 = vand.u32 %v1729, 4294901760
        %2278 = vmatpush2.msra.mxu0 %v2277
        %2279 = vmatprep.subr.mxu0 0.0
        %v2280 = vand.u32 %v1728, 4294901760
        %2281 = vmatpush2.msra.mxu0 %v2280
        %2282 = vmatprep.subr.mxu0 0.0
        %v2283 = vand.u32 %v1727, 4294901760
        %2284 = vmatpush2.msra.mxu0 %v2283
        %2285 = vmatprep.subr.mxu0 0.0
        %v2286 = vand.u32 %v1726, 4294901760
        %2287 = vmatpush2.msra.mxu0 %v2286
        %2288 = vmatprep.subr.mxu0 0.0
        %v2289 = vand.u32 %v1725, 4294901760
        %2290 = vmatpush2.msra.mxu0 %v2289
        %2291 = vmatprep.subr.mxu0 0.0
        %v2292 = vand.u32 %v1724, 4294901760
        %2293 = vmatpush2.msra.mxu0 %v2292
        %2294 = vmatprep.subr.mxu0 0.0
        %v2295 = vand.u32 %v1723, 4294901760
        %2296 = vmatpush2.msra.mxu0 %v2295
        %2297 = vmatprep.subr.mxu0 0.0
        %v2298 = vand.u32 %v1722, 4294901760
        %2299 = vmatpush2.msra.mxu0 %v2298
        %2300 = vmatprep.subr.mxu0 0.0
        %v2301 = vand.u32 %v1721, 4294901760
        %2302 = vmatpush2.msra.mxu0 %v2301
        %2303 = vmatprep.subr.mxu0 0.0
        %v2304 = vand.u32 %v1720, 4294901760
        %2305 = vmatpush2.msra.mxu0 %v2304
        %2306 = vmatprep.subr.mxu0 0.0
        %v2307 = vand.u32 %v1719, 4294901760
        %2308 = vmatpush2.msra.mxu0 %v2307
        %2309 = vmatprep.subr.mxu0 0.0
        %v2310 = vand.u32 %v1718, 4294901760
        %2311 = vmatpush2.msra.mxu0 %v2310
        %v2312 = vand.u32 %v1701, 4294901760
        %v2313 = vsub.f32 %v1701, %v2312
        %v2314 = vand.u32 %v2313, 4294901760
        %2315 = vmatprep.mubr.f32.mxu0 %v2314
        %v2316 = vand.u32 %v1700, 4294901760
        %v2317 = vsub.f32 %v1700, %v2316
        %v2318 = vand.u32 %v2317, 4294901760
        %2319 = vmatmul.mubr.f32.gmra.mxu0 %v2318
        %v2320 = vpop.f32.mrf.mxu0
        %v2321 = vadd.f32 %v2213, %v2320
        %v2322 = vpop.f32.mrf.mxu0
        %2323 = vdwg.mxu0
        %2324 = vmatprep.subr.mxu0 0.0
        %v2325 = vand.u32 %v1717, 4294901760
        %v2326 = vsub.f32 %v1717, %v2325
        %v2327 = vand.u32 %v2326, 4294901760
        %2328 = vmatpush1.msra.mxu0 %v2327
        %2329 = vmatprep.subr.mxu0 0.0
        %v2330 = vand.u32 %v1716, 4294901760
        %v2331 = vsub.f32 %v1716, %v2330
        %v2332 = vand.u32 %v2331, 4294901760
        %2333 = vmatpush1.msra.mxu0 %v2332
        %2334 = vmatprep.subr.mxu0 0.0
        %v2335 = vand.u32 %v1715, 4294901760
        %v2336 = vsub.f32 %v1715, %v2335
        %v2337 = vand.u32 %v2336, 4294901760
        %2338 = vmatpush1.msra.mxu0 %v2337
        %2339 = vmatprep.subr.mxu0 0.0
        %v2340 = vand.u32 %v1714, 4294901760
        %v2341 = vsub.f32 %v1714, %v2340
        %v2342 = vand.u32 %v2341, 4294901760
        %2343 = vmatpush1.msra.mxu0 %v2342
        %2344 = vmatprep.subr.mxu0 0.0
        %v2345 = vand.u32 %v1713, 4294901760
        %v2346 = vsub.f32 %v1713, %v2345
        %v2347 = vand.u32 %v2346, 4294901760
        %2348 = vmatpush1.msra.mxu0 %v2347
        %2349 = vmatprep.subr.mxu0 0.0
        %v2350 = vand.u32 %v1712, 4294901760
        %v2351 = vsub.f32 %v1712, %v2350
        %v2352 = vand.u32 %v2351, 4294901760
        %2353 = vmatpush1.msra.mxu0 %v2352
        %2354 = vmatprep.subr.mxu0 0.0
        %v2355 = vand.u32 %v1711, 4294901760
        %v2356 = vsub.f32 %v1711, %v2355
        %v2357 = vand.u32 %v2356, 4294901760
        %2358 = vmatpush1.msra.mxu0 %v2357
        %2359 = vmatprep.subr.mxu0 0.0
        %v2360 = vand.u32 %v1710, 4294901760
        %v2361 = vsub.f32 %v1710, %v2360
        %v2362 = vand.u32 %v2361, 4294901760
        %2363 = vmatpush1.msra.mxu0 %v2362
        %2364 = vmatprep.subr.mxu0 0.0
        %v2365 = vand.u32 %v1709, 4294901760
        %v2366 = vsub.f32 %v1709, %v2365
        %v2367 = vand.u32 %v2366, 4294901760
        %2368 = vmatpush1.msra.mxu0 %v2367
        %2369 = vmatprep.subr.mxu0 0.0
        %v2370 = vand.u32 %v1708, 4294901760
        %v2371 = vsub.f32 %v1708, %v2370
        %v2372 = vand.u32 %v2371, 4294901760
        %2373 = vmatpush1.msra.mxu0 %v2372
        %2374 = vmatprep.subr.mxu0 0.0
        %v2375 = vand.u32 %v1707, 4294901760
        %v2376 = vsub.f32 %v1707, %v2375
        %v2377 = vand.u32 %v2376, 4294901760
        %2378 = vmatpush1.msra.mxu0 %v2377
        %2379 = vmatprep.subr.mxu0 0.0
        %v2380 = vand.u32 %v1706, 4294901760
        %v2381 = vsub.f32 %v1706, %v2380
        %v2382 = vand.u32 %v2381, 4294901760
        %2383 = vmatpush1.msra.mxu0 %v2382
        %2384 = vmatprep.subr.mxu0 0.0
        %v2385 = vand.u32 %v1705, 4294901760
        %v2386 = vsub.f32 %v1705, %v2385
        %v2387 = vand.u32 %v2386, 4294901760
        %2388 = vmatpush1.msra.mxu0 %v2387
        %2389 = vmatprep.subr.mxu0 0.0
        %v2390 = vand.u32 %v1704, 4294901760
        %v2391 = vsub.f32 %v1704, %v2390
        %v2392 = vand.u32 %v2391, 4294901760
        %2393 = vmatpush1.msra.mxu0 %v2392
        %2394 = vmatprep.subr.mxu0 0.0
        %v2395 = vand.u32 %v1703, 4294901760
        %v2396 = vsub.f32 %v1703, %v2395
        %v2397 = vand.u32 %v2396, 4294901760
        %2398 = vmatpush1.msra.mxu0 %v2397
        %2399 = vmatprep.subr.mxu0 0.0
        %v2400 = vand.u32 %v1702, 4294901760
        %v2401 = vsub.f32 %v1702, %v2400
        %v2402 = vand.u32 %v2401, 4294901760
        %2403 = vmatpush1.msra.mxu0 %v2402
        %2404 = vmatprep.subr.mxu0 0.0
        %v2405 = vand.u32 %v1733, 4294901760
        %v2406 = vsub.f32 %v1733, %v2405
        %v2407 = vand.u32 %v2406, 4294901760
        %2408 = vmatpush2.msra.mxu0 %v2407
        %2409 = vmatprep.subr.mxu0 0.0
        %v2410 = vand.u32 %v1732, 4294901760
        %v2411 = vsub.f32 %v1732, %v2410
        %v2412 = vand.u32 %v2411, 4294901760
        %2413 = vmatpush2.msra.mxu0 %v2412
        %2414 = vmatprep.subr.mxu0 0.0
        %v2415 = vand.u32 %v1731, 4294901760
        %v2416 = vsub.f32 %v1731, %v2415
        %v2417 = vand.u32 %v2416, 4294901760
        %2418 = vmatpush2.msra.mxu0 %v2417
        %2419 = vmatprep.subr.mxu0 0.0
        %v2420 = vand.u32 %v1730, 4294901760
        %v2421 = vsub.f32 %v1730, %v2420
        %v2422 = vand.u32 %v2421, 4294901760
        %2423 = vmatpush2.msra.mxu0 %v2422
        %2424 = vmatprep.subr.mxu0 0.0
        %v2425 = vand.u32 %v1729, 4294901760
        %v2426 = vsub.f32 %v1729, %v2425
        %v2427 = vand.u32 %v2426, 4294901760
        %2428 = vmatpush2.msra.mxu0 %v2427
        %2429 = vmatprep.subr.mxu0 0.0
        %v2430 = vand.u32 %v1728, 4294901760
        %v2431 = vsub.f32 %v1728, %v2430
        %v2432 = vand.u32 %v2431, 4294901760
        %2433 = vmatpush2.msra.mxu0 %v2432
        %2434 = vmatprep.subr.mxu0 0.0
        %v2435 = vand.u32 %v1727, 4294901760
        %v2436 = vsub.f32 %v1727, %v2435
        %v2437 = vand.u32 %v2436, 4294901760
        %2438 = vmatpush2.msra.mxu0 %v2437
        %2439 = vmatprep.subr.mxu0 0.0
        %v2440 = vand.u32 %v1726, 4294901760
        %v2441 = vsub.f32 %v1726, %v2440
        %v2442 = vand.u32 %v2441, 4294901760
        %2443 = vmatpush2.msra.mxu0 %v2442
        %2444 = vmatprep.subr.mxu0 0.0
        %v2445 = vand.u32 %v1725, 4294901760
        %v2446 = vsub.f32 %v1725, %v2445
        %v2447 = vand.u32 %v2446, 4294901760
        %2448 = vmatpush2.msra.mxu0 %v2447
        %2449 = vmatprep.subr.mxu0 0.0
        %v2450 = vand.u32 %v1724, 4294901760
        %v2451 = vsub.f32 %v1724, %v2450
        %v2452 = vand.u32 %v2451, 4294901760
        %2453 = vmatpush2.msra.mxu0 %v2452
        %2454 = vmatprep.subr.mxu0 0.0
        %v2455 = vand.u32 %v1723, 4294901760
        %v2456 = vsub.f32 %v1723, %v2455
        %v2457 = vand.u32 %v2456, 4294901760
        %2458 = vmatpush2.msra.mxu0 %v2457
        %2459 = vmatprep.subr.mxu0 0.0
        %v2460 = vand.u32 %v1722, 4294901760
        %v2461 = vsub.f32 %v1722, %v2460
        %v2462 = vand.u32 %v2461, 4294901760
        %2463 = vmatpush2.msra.mxu0 %v2462
        %2464 = vmatprep.subr.mxu0 0.0
        %v2465 = vand.u32 %v1721, 4294901760
        %v2466 = vsub.f32 %v1721, %v2465
        %v2467 = vand.u32 %v2466, 4294901760
        %2468 = vmatpush2.msra.mxu0 %v2467
        %2469 = vmatprep.subr.mxu0 0.0
        %v2470 = vand.u32 %v1720, 4294901760
        %v2471 = vsub.f32 %v1720, %v2470
        %v2472 = vand.u32 %v2471, 4294901760
        %2473 = vmatpush2.msra.mxu0 %v2472
        %2474 = vmatprep.subr.mxu0 0.0
        %v2475 = vand.u32 %v1719, 4294901760
        %v2476 = vsub.f32 %v1719, %v2475
        %v2477 = vand.u32 %v2476, 4294901760
        %2478 = vmatpush2.msra.mxu0 %v2477
        %2479 = vmatprep.subr.mxu0 0.0
        %v2480 = vand.u32 %v1718, 4294901760
        %v2481 = vsub.f32 %v1718, %v2480
        %v2482 = vand.u32 %v2481, 4294901760
        %2483 = vmatpush2.msra.mxu0 %v2482
        %v2484 = vand.u32 %v1701, 4294901760
        %2485 = vmatprep.mubr.f32.mxu0 %v2484
        %v2486 = vand.u32 %v1700, 4294901760
        %2487 = vmatmul.mubr.f32.gmra.mxu0 %v2486
        %v2488 = vpop.f32.mrf.mxu0
        %v2489 = vadd.f32 %v2321, %v2488
        %v2490 = vpop.f32.mrf.mxu0
        %2491 = vdwg.mxu0
        %2492 = vmatprep.subr.mxu0 0.0
        %v2493 = vand.u32 %v1717, 4294901760
        %2494 = vmatpush1.msra.mxu0 %v2493
        %2495 = vmatprep.subr.mxu0 0.0
        %v2496 = vand.u32 %v1716, 4294901760
        %2497 = vmatpush1.msra.mxu0 %v2496
        %2498 = vmatprep.subr.mxu0 0.0
        %v2499 = vand.u32 %v1715, 4294901760
        %2500 = vmatpush1.msra.mxu0 %v2499
        %2501 = vmatprep.subr.mxu0 0.0
        %v2502 = vand.u32 %v1714, 4294901760
        %2503 = vmatpush1.msra.mxu0 %v2502
        %2504 = vmatprep.subr.mxu0 0.0
        %v2505 = vand.u32 %v1713, 4294901760
        %2506 = vmatpush1.msra.mxu0 %v2505
        %2507 = vmatprep.subr.mxu0 0.0
        %v2508 = vand.u32 %v1712, 4294901760
        %2509 = vmatpush1.msra.mxu0 %v2508
        %2510 = vmatprep.subr.mxu0 0.0
        %v2511 = vand.u32 %v1711, 4294901760
        %2512 = vmatpush1.msra.mxu0 %v2511
        %2513 = vmatprep.subr.mxu0 0.0
        %v2514 = vand.u32 %v1710, 4294901760
        %2515 = vmatpush1.msra.mxu0 %v2514
        %2516 = vmatprep.subr.mxu0 0.0
        %v2517 = vand.u32 %v1709, 4294901760
        %2518 = vmatpush1.msra.mxu0 %v2517
        %2519 = vmatprep.subr.mxu0 0.0
        %v2520 = vand.u32 %v1708, 4294901760
        %2521 = vmatpush1.msra.mxu0 %v2520
        %2522 = vmatprep.subr.mxu0 0.0
        %v2523 = vand.u32 %v1707, 4294901760
        %2524 = vmatpush1.msra.mxu0 %v2523
        %2525 = vmatprep.subr.mxu0 0.0
        %v2526 = vand.u32 %v1706, 4294901760
        %2527 = vmatpush1.msra.mxu0 %v2526
        %2528 = vmatprep.subr.mxu0 0.0
        %v2529 = vand.u32 %v1705, 4294901760
        %2530 = vmatpush1.msra.mxu0 %v2529
        %2531 = vmatprep.subr.mxu0 0.0
        %v2532 = vand.u32 %v1704, 4294901760
        %2533 = vmatpush1.msra.mxu0 %v2532
        %2534 = vmatprep.subr.mxu0 0.0
        %v2535 = vand.u32 %v1703, 4294901760
        %2536 = vmatpush1.msra.mxu0 %v2535
        %2537 = vmatprep.subr.mxu0 0.0
        %v2538 = vand.u32 %v1702, 4294901760
        %2539 = vmatpush1.msra.mxu0 %v2538
        %2540 = vmatprep.subr.mxu0 0.0
        %v2541 = vand.u32 %v1733, 4294901760
        %2542 = vmatpush2.msra.mxu0 %v2541
        %2543 = vmatprep.subr.mxu0 0.0
        %v2544 = vand.u32 %v1732, 4294901760
        %2545 = vmatpush2.msra.mxu0 %v2544
        %2546 = vmatprep.subr.mxu0 0.0
        %v2547 = vand.u32 %v1731, 4294901760
        %2548 = vmatpush2.msra.mxu0 %v2547
        %2549 = vmatprep.subr.mxu0 0.0
        %v2550 = vand.u32 %v1730, 4294901760
        %2551 = vmatpush2.msra.mxu0 %v2550
        %2552 = vmatprep.subr.mxu0 0.0
        %v2553 = vand.u32 %v1729, 4294901760
        %2554 = vmatpush2.msra.mxu0 %v2553
        %2555 = vmatprep.subr.mxu0 0.0
        %v2556 = vand.u32 %v1728, 4294901760
        %2557 = vmatpush2.msra.mxu0 %v2556
        %2558 = vmatprep.subr.mxu0 0.0
        %v2559 = vand.u32 %v1727, 4294901760
        %2560 = vmatpush2.msra.mxu0 %v2559
        %2561 = vmatprep.subr.mxu0 0.0
        %v2562 = vand.u32 %v1726, 4294901760
        %2563 = vmatpush2.msra.mxu0 %v2562
        %2564 = vmatprep.subr.mxu0 0.0
        %v2565 = vand.u32 %v1725, 4294901760
        %2566 = vmatpush2.msra.mxu0 %v2565
        %2567 = vmatprep.subr.mxu0 0.0
        %v2568 = vand.u32 %v1724, 4294901760
        %2569 = vmatpush2.msra.mxu0 %v2568
        %2570 = vmatprep.subr.mxu0 0.0
        %v2571 = vand.u32 %v1723, 4294901760
        %2572 = vmatpush2.msra.mxu0 %v2571
        %2573 = vmatprep.subr.mxu0 0.0
        %v2574 = vand.u32 %v1722, 4294901760
        %2575 = vmatpush2.msra.mxu0 %v2574
        %2576 = vmatprep.subr.mxu0 0.0
        %v2577 = vand.u32 %v1721, 4294901760
        %2578 = vmatpush2.msra.mxu0 %v2577
        %2579 = vmatprep.subr.mxu0 0.0
        %v2580 = vand.u32 %v1720, 4294901760
        %2581 = vmatpush2.msra.mxu0 %v2580
        %2582 = vmatprep.subr.mxu0 0.0
        %v2583 = vand.u32 %v1719, 4294901760
        %2584 = vmatpush2.msra.mxu0 %v2583
        %2585 = vmatprep.subr.mxu0 0.0
        %v2586 = vand.u32 %v1718, 4294901760
        %2587 = vmatpush2.msra.mxu0 %v2586
        %v2588 = vand.u32 %v1701, 4294901760
        %2589 = vmatprep.mubr.f32.mxu0 %v2588
        %v2590 = vand.u32 %v1700, 4294901760
        %2591 = vmatmul.mubr.f32.gmra.mxu0 %v2590
        %v2592 = vpop.f32.mrf.mxu0
        %v2593 = vadd.f32 %v2489, %v2592
        %v2594 = vpop.f32.mrf.mxu0
        %2595 = vdwg.mxu0
        %v2596 = vld [vmem:[%s2 + $0x10] sm:$0x1]
        %v2597 = vld [vmem:[%s5] sm:$0x1]
        %v2599 = vsel %vm734, %v2596, 0
        %2601 = vmatprep.subr.mxu0 0.0
        %2602 = vmatpush1.msra.mxu0 0.0
        %2603 = vmatprep.subr.mxu0 0.0
        %2604 = vmatpush1.msra.mxu0 0.0
        %2605 = vmatprep.subr.mxu0 0.0
        %2606 = vmatpush1.msra.mxu0 0.0
        %2607 = vmatprep.subr.mxu0 0.0
        %2608 = vmatpush1.msra.mxu0 0.0
        %2609 = vmatprep.subr.mxu0 0.0
        %2610 = vmatpush1.msra.mxu0 0.0
        %2611 = vmatprep.subr.mxu0 0.0
        %2612 = vmatpush1.msra.mxu0 0.0
        %2613 = vmatprep.subr.mxu0 0.0
        %2614 = vmatpush1.msra.mxu0 0.0
        %2615 = vmatprep.subr.mxu0 0.0
        %2616 = vmatpush1.msra.mxu0 0.0
        %2617 = vmatprep.subr.mxu0 0.0
        %2618 = vmatpush1.msra.mxu0 0.0
        %2619 = vmatprep.subr.mxu0 0.0
        %2620 = vmatpush1.msra.mxu0 0.0
        %2621 = vmatprep.subr.mxu0 0.0
        %2622 = vmatpush1.msra.mxu0 0.0
        %2623 = vmatprep.subr.mxu0 0.0
        %2624 = vmatpush1.msra.mxu0 0.0
        %2625 = vmatprep.subr.mxu0 0.0
        %2626 = vmatpush1.msra.mxu0 0.0
        %2627 = vmatprep.subr.mxu0 0.0
        %2628 = vmatpush1.msra.mxu0 0.0
        %2629 = vmatprep.subr.mxu0 0.0
        %2630 = vmatpush1.msra.mxu0 0.0
        %2631 = vmatprep.subr.mxu0 0.0
        %v2632 = vand.u32 %v2593, 4294901760
        %2633 = vmatpush1.msra.mxu0 %v2632
        %2634 = vmatprep.subr.mxu0 0.0
        %2635 = vmatpush2.msra.mxu0 0.0
        %2636 = vmatprep.subr.mxu0 0.0
        %2637 = vmatpush2.msra.mxu0 0.0
        %2638 = vmatprep.subr.mxu0 0.0
        %2639 = vmatpush2.msra.mxu0 0.0
        %2640 = vmatprep.subr.mxu0 0.0
        %2641 = vmatpush2.msra.mxu0 0.0
        %2642 = vmatprep.subr.mxu0 0.0
        %2643 = vmatpush2.msra.mxu0 0.0
        %2644 = vmatprep.subr.mxu0 0.0
        %2645 = vmatpush2.msra.mxu0 0.0
        %2646 = vmatprep.subr.mxu0 0.0
        %2647 = vmatpush2.msra.mxu0 0.0
        %2648 = vmatprep.subr.mxu0 0.0
        %2649 = vmatpush2.msra.mxu0 0.0
        %2650 = vmatprep.subr.mxu0 0.0
        %2651 = vmatpush2.msra.mxu0 0.0
        %2652 = vmatprep.subr.mxu0 0.0
        %2653 = vmatpush2.msra.mxu0 0.0
        %2654 = vmatprep.subr.mxu0 0.0
        %2655 = vmatpush2.msra.mxu0 0.0
        %2656 = vmatprep.subr.mxu0 0.0
        %2657 = vmatpush2.msra.mxu0 0.0
        %2658 = vmatprep.subr.mxu0 0.0
        %2659 = vmatpush2.msra.mxu0 0.0
        %2660 = vmatprep.subr.mxu0 0.0
        %2661 = vmatpush2.msra.mxu0 0.0
        %2662 = vmatprep.subr.mxu0 0.0
        %2663 = vmatpush2.msra.mxu0 0.0
        %2664 = vmatprep.subr.mxu0 0.0
        %2665 = vmatpush2.msra.mxu0 0.0
        %2666 = vmatprep.mubr.f32.mxu0 0.0
        %v2667 = vand.u32 %v2599, 4294901760
        %v2668 = vsub.f32 %v2599, %v2667
        %v2669 = vand.u32 %v2668, 4294901760
        %v2670 = vsub.f32 %v2668, %v2669
        %v2671 = vand.u32 %v2670, 4294901760
        %2672 = vmatmul.mubr.f32.gmra.mxu0 %v2671
        %v2673 = vpop.f32.mrf.mxu0
        %v2674 = vadd.f32 %v2597, %v2673
        %v2675 = vpop.f32.mrf.mxu0
        %2676 = vdwg.mxu0
        %2677 = vmatprep.subr.mxu0 0.0
        %2678 = vmatpush1.msra.mxu0 0.0
        %2679 = vmatprep.subr.mxu0 0.0
        %2680 = vmatpush1.msra.mxu0 0.0
        %2681 = vmatprep.subr.mxu0 0.0
        %2682 = vmatpush1.msra.mxu0 0.0
        %2683 = vmatprep.subr.mxu0 0.0
        %2684 = vmatpush1.msra.mxu0 0.0
        %2685 = vmatprep.subr.mxu0 0.0
        %2686 = vmatpush1.msra.mxu0 0.0
        %2687 = vmatprep.subr.mxu0 0.0
        %2688 = vmatpush1.msra.mxu0 0.0
        %2689 = vmatprep.subr.mxu0 0.0
        %2690 = vmatpush1.msra.mxu0 0.0
        %2691 = vmatprep.subr.mxu0 0.0
        %2692 = vmatpush1.msra.mxu0 0.0
        %2693 = vmatprep.subr.mxu0 0.0
        %2694 = vmatpush1.msra.mxu0 0.0
        %2695 = vmatprep.subr.mxu0 0.0
        %2696 = vmatpush1.msra.mxu0 0.0
        %2697 = vmatprep.subr.mxu0 0.0
        %2698 = vmatpush1.msra.mxu0 0.0
        %2699 = vmatprep.subr.mxu0 0.0
        %2700 = vmatpush1.msra.mxu0 0.0
        %2701 = vmatprep.subr.mxu0 0.0
        %2702 = vmatpush1.msra.mxu0 0.0
        %2703 = vmatprep.subr.mxu0 0.0
        %2704 = vmatpush1.msra.mxu0 0.0
        %2705 = vmatprep.subr.mxu0 0.0
        %2706 = vmatpush1.msra.mxu0 0.0
        %2707 = vmatprep.subr.mxu0 0.0
        %v2708 = vand.u32 %v2593, 4294901760
        %v2709 = vsub.f32 %v2593, %v2708
        %v2710 = vand.u32 %v2709, 4294901760
        %v2711 = vsub.f32 %v2709, %v2710
        %v2712 = vand.u32 %v2711, 4294901760
        %2713 = vmatpush1.msra.mxu0 %v2712
        %2714 = vmatprep.subr.mxu0 0.0
        %2715 = vmatpush2.msra.mxu0 0.0
        %2716 = vmatprep.subr.mxu0 0.0
        %2717 = vmatpush2.msra.mxu0 0.0
        %2718 = vmatprep.subr.mxu0 0.0
        %2719 = vmatpush2.msra.mxu0 0.0
        %2720 = vmatprep.subr.mxu0 0.0
        %2721 = vmatpush2.msra.mxu0 0.0
        %2722 = vmatprep.subr.mxu0 0.0
        %2723 = vmatpush2.msra.mxu0 0.0
        %2724 = vmatprep.subr.mxu0 0.0
        %2725 = vmatpush2.msra.mxu0 0.0
        %2726 = vmatprep.subr.mxu0 0.0
        %2727 = vmatpush2.msra.mxu0 0.0
        %2728 = vmatprep.subr.mxu0 0.0
        %2729 = vmatpush2.msra.mxu0 0.0
        %2730 = vmatprep.subr.mxu0 0.0
        %2731 = vmatpush2.msra.mxu0 0.0
        %2732 = vmatprep.subr.mxu0 0.0
        %2733 = vmatpush2.msra.mxu0 0.0
        %2734 = vmatprep.subr.mxu0 0.0
        %2735 = vmatpush2.msra.mxu0 0.0
        %2736 = vmatprep.subr.mxu0 0.0
        %2737 = vmatpush2.msra.mxu0 0.0
        %2738 = vmatprep.subr.mxu0 0.0
        %2739 = vmatpush2.msra.mxu0 0.0
        %2740 = vmatprep.subr.mxu0 0.0
        %2741 = vmatpush2.msra.mxu0 0.0
        %2742 = vmatprep.subr.mxu0 0.0
        %2743 = vmatpush2.msra.mxu0 0.0
        %2744 = vmatprep.subr.mxu0 0.0
        %2745 = vmatpush2.msra.mxu0 0.0
        %2746 = vmatprep.mubr.f32.mxu0 0.0
        %v2747 = vand.u32 %v2599, 4294901760
        %2748 = vmatmul.mubr.f32.gmra.mxu0 %v2747
        %v2749 = vpop.f32.mrf.mxu0
        %v2750 = vadd.f32 %v2674, %v2749
        %v2751 = vpop.f32.mrf.mxu0
        %2752 = vdwg.mxu0
        %2753 = vmatprep.subr.mxu0 0.0
        %2754 = vmatpush1.msra.mxu0 0.0
        %2755 = vmatprep.subr.mxu0 0.0
        %2756 = vmatpush1.msra.mxu0 0.0
        %2757 = vmatprep.subr.mxu0 0.0
        %2758 = vmatpush1.msra.mxu0 0.0
        %2759 = vmatprep.subr.mxu0 0.0
        %2760 = vmatpush1.msra.mxu0 0.0
        %2761 = vmatprep.subr.mxu0 0.0
        %2762 = vmatpush1.msra.mxu0 0.0
        %2763 = vmatprep.subr.mxu0 0.0
        %2764 = vmatpush1.msra.mxu0 0.0
        %2765 = vmatprep.subr.mxu0 0.0
        %2766 = vmatpush1.msra.mxu0 0.0
        %2767 = vmatprep.subr.mxu0 0.0
        %2768 = vmatpush1.msra.mxu0 0.0
        %2769 = vmatprep.subr.mxu0 0.0
        %2770 = vmatpush1.msra.mxu0 0.0
        %2771 = vmatprep.subr.mxu0 0.0
        %2772 = vmatpush1.msra.mxu0 0.0
        %2773 = vmatprep.subr.mxu0 0.0
        %2774 = vmatpush1.msra.mxu0 0.0
        %2775 = vmatprep.subr.mxu0 0.0
        %2776 = vmatpush1.msra.mxu0 0.0
        %2777 = vmatprep.subr.mxu0 0.0
        %2778 = vmatpush1.msra.mxu0 0.0
        %2779 = vmatprep.subr.mxu0 0.0
        %2780 = vmatpush1.msra.mxu0 0.0
        %2781 = vmatprep.subr.mxu0 0.0
        %2782 = vmatpush1.msra.mxu0 0.0
        %2783 = vmatprep.subr.mxu0 0.0
        %v2784 = vand.u32 %v2593, 4294901760
        %v2785 = vsub.f32 %v2593, %v2784
        %2786 = vmatpush1.msra.mxu0 %v2785
        %2787 = vmatprep.subr.mxu0 0.0
        %2788 = vmatpush2.msra.mxu0 0.0
        %2789 = vmatprep.subr.mxu0 0.0
        %2790 = vmatpush2.msra.mxu0 0.0
        %2791 = vmatprep.subr.mxu0 0.0
        %2792 = vmatpush2.msra.mxu0 0.0
        %2793 = vmatprep.subr.mxu0 0.0
        %2794 = vmatpush2.msra.mxu0 0.0
        %2795 = vmatprep.subr.mxu0 0.0
        %2796 = vmatpush2.msra.mxu0 0.0
        %2797 = vmatprep.subr.mxu0 0.0
        %2798 = vmatpush2.msra.mxu0 0.0
        %2799 = vmatprep.subr.mxu0 0.0
        %2800 = vmatpush2.msra.mxu0 0.0
        %2801 = vmatprep.subr.mxu0 0.0
        %2802 = vmatpush2.msra.mxu0 0.0
        %2803 = vmatprep.subr.mxu0 0.0
        %2804 = vmatpush2.msra.mxu0 0.0
        %2805 = vmatprep.subr.mxu0 0.0
        %2806 = vmatpush2.msra.mxu0 0.0
        %2807 = vmatprep.subr.mxu0 0.0
        %2808 = vmatpush2.msra.mxu0 0.0
        %2809 = vmatprep.subr.mxu0 0.0
        %2810 = vmatpush2.msra.mxu0 0.0
        %2811 = vmatprep.subr.mxu0 0.0
        %2812 = vmatpush2.msra.mxu0 0.0
        %2813 = vmatprep.subr.mxu0 0.0
        %2814 = vmatpush2.msra.mxu0 0.0
        %2815 = vmatprep.subr.mxu0 0.0
        %2816 = vmatpush2.msra.mxu0 0.0
        %2817 = vmatprep.subr.mxu0 0.0
        %2818 = vmatpush2.msra.mxu0 0.0
        %2819 = vmatprep.mubr.f32.mxu0 0.0
        %v2820 = vand.u32 %v2599, 4294901760
        %v2821 = vsub.f32 %v2599, %v2820
        %2822 = vmatmul.mubr.f32.gmra.mxu0 %v2821
        %v2823 = vpop.f32.mrf.mxu0
        %v2824 = vadd.f32 %v2750, %v2823
        %v2825 = vpop.f32.mrf.mxu0
        %2826 = vdwg.mxu0
        %2827 = vmatprep.subr.mxu0 0.0
        %2828 = vmatpush1.msra.mxu0 0.0
        %2829 = vmatprep.subr.mxu0 0.0
        %2830 = vmatpush1.msra.mxu0 0.0
        %2831 = vmatprep.subr.mxu0 0.0
        %2832 = vmatpush1.msra.mxu0 0.0
        %2833 = vmatprep.subr.mxu0 0.0
        %2834 = vmatpush1.msra.mxu0 0.0
        %2835 = vmatprep.subr.mxu0 0.0
        %2836 = vmatpush1.msra.mxu0 0.0
        %2837 = vmatprep.subr.mxu0 0.0
        %2838 = vmatpush1.msra.mxu0 0.0
        %2839 = vmatprep.subr.mxu0 0.0
        %2840 = vmatpush1.msra.mxu0 0.0
        %2841 = vmatprep.subr.mxu0 0.0
        %2842 = vmatpush1.msra.mxu0 0.0
        %2843 = vmatprep.subr.mxu0 0.0
        %2844 = vmatpush1.msra.mxu0 0.0
        %2845 = vmatprep.subr.mxu0 0.0
        %2846 = vmatpush1.msra.mxu0 0.0
        %2847 = vmatprep.subr.mxu0 0.0
        %2848 = vmatpush1.msra.mxu0 0.0
        %2849 = vmatprep.subr.mxu0 0.0
        %2850 = vmatpush1.msra.mxu0 0.0
        %2851 = vmatprep.subr.mxu0 0.0
        %2852 = vmatpush1.msra.mxu0 0.0
        %2853 = vmatprep.subr.mxu0 0.0
        %2854 = vmatpush1.msra.mxu0 0.0
        %2855 = vmatprep.subr.mxu0 0.0
        %2856 = vmatpush1.msra.mxu0 0.0
        %2857 = vmatprep.subr.mxu0 0.0
        %v2858 = vand.u32 %v2593, 4294901760
        %2859 = vmatpush1.msra.mxu0 %v2858
        %2860 = vmatprep.subr.mxu0 0.0
        %2861 = vmatpush2.msra.mxu0 0.0
        %2862 = vmatprep.subr.mxu0 0.0
        %2863 = vmatpush2.msra.mxu0 0.0
        %2864 = vmatprep.subr.mxu0 0.0
        %2865 = vmatpush2.msra.mxu0 0.0
        %2866 = vmatprep.subr.mxu0 0.0
        %2867 = vmatpush2.msra.mxu0 0.0
        %2868 = vmatprep.subr.mxu0 0.0
        %2869 = vmatpush2.msra.mxu0 0.0
        %2870 = vmatprep.subr.mxu0 0.0
        %2871 = vmatpush2.msra.mxu0 0.0
        %2872 = vmatprep.subr.mxu0 0.0
        %2873 = vmatpush2.msra.mxu0 0.0
        %2874 = vmatprep.subr.mxu0 0.0
        %2875 = vmatpush2.msra.mxu0 0.0
        %2876 = vmatprep.subr.mxu0 0.0
        %2877 = vmatpush2.msra.mxu0 0.0
        %2878 = vmatprep.subr.mxu0 0.0
        %2879 = vmatpush2.msra.mxu0 0.0
        %2880 = vmatprep.subr.mxu0 0.0
        %2881 = vmatpush2.msra.mxu0 0.0
        %2882 = vmatprep.subr.mxu0 0.0
        %2883 = vmatpush2.msra.mxu0 0.0
        %2884 = vmatprep.subr.mxu0 0.0
        %2885 = vmatpush2.msra.mxu0 0.0
        %2886 = vmatprep.subr.mxu0 0.0
        %2887 = vmatpush2.msra.mxu0 0.0
        %2888 = vmatprep.subr.mxu0 0.0
        %2889 = vmatpush2.msra.mxu0 0.0
        %2890 = vmatprep.subr.mxu0 0.0
        %2891 = vmatpush2.msra.mxu0 0.0
        %2892 = vmatprep.mubr.f32.mxu0 0.0
        %v2893 = vand.u32 %v2599, 4294901760
        %v2894 = vsub.f32 %v2599, %v2893
        %v2895 = vand.u32 %v2894, 4294901760
        %2896 = vmatmul.mubr.f32.gmra.mxu0 %v2895
        %v2897 = vpop.f32.mrf.mxu0
        %v2898 = vadd.f32 %v2824, %v2897
        %v2899 = vpop.f32.mrf.mxu0
        %2900 = vdwg.mxu0
        %2901 = vmatprep.subr.mxu0 0.0
        %2902 = vmatpush1.msra.mxu0 0.0
        %2903 = vmatprep.subr.mxu0 0.0
        %2904 = vmatpush1.msra.mxu0 0.0
        %2905 = vmatprep.subr.mxu0 0.0
        %2906 = vmatpush1.msra.mxu0 0.0
        %2907 = vmatprep.subr.mxu0 0.0
        %2908 = vmatpush1.msra.mxu0 0.0
        %2909 = vmatprep.subr.mxu0 0.0
        %2910 = vmatpush1.msra.mxu0 0.0
        %2911 = vmatprep.subr.mxu0 0.0
        %2912 = vmatpush1.msra.mxu0 0.0
        %2913 = vmatprep.subr.mxu0 0.0
        %2914 = vmatpush1.msra.mxu0 0.0
        %2915 = vmatprep.subr.mxu0 0.0
        %2916 = vmatpush1.msra.mxu0 0.0
        %2917 = vmatprep.subr.mxu0 0.0
        %2918 = vmatpush1.msra.mxu0 0.0
        %2919 = vmatprep.subr.mxu0 0.0
        %2920 = vmatpush1.msra.mxu0 0.0
        %2921 = vmatprep.subr.mxu0 0.0
        %2922 = vmatpush1.msra.mxu0 0.0
        %2923 = vmatprep.subr.mxu0 0.0
        %2924 = vmatpush1.msra.mxu0 0.0
        %2925 = vmatprep.subr.mxu0 0.0
        %2926 = vmatpush1.msra.mxu0 0.0
        %2927 = vmatprep.subr.mxu0 0.0
        %2928 = vmatpush1.msra.mxu0 0.0
        %2929 = vmatprep.subr.mxu0 0.0
        %2930 = vmatpush1.msra.mxu0 0.0
        %2931 = vmatprep.subr.mxu0 0.0
        %v2932 = vand.u32 %v2593, 4294901760
        %v2933 = vsub.f32 %v2593, %v2932
        %v2934 = vand.u32 %v2933, 4294901760
        %2935 = vmatpush1.msra.mxu0 %v2934
        %2936 = vmatprep.subr.mxu0 0.0
        %2937 = vmatpush2.msra.mxu0 0.0
        %2938 = vmatprep.subr.mxu0 0.0
        %2939 = vmatpush2.msra.mxu0 0.0
        %2940 = vmatprep.subr.mxu0 0.0
        %2941 = vmatpush2.msra.mxu0 0.0
        %2942 = vmatprep.subr.mxu0 0.0
        %2943 = vmatpush2.msra.mxu0 0.0
        %2944 = vmatprep.subr.mxu0 0.0
        %2945 = vmatpush2.msra.mxu0 0.0
        %2946 = vmatprep.subr.mxu0 0.0
        %2947 = vmatpush2.msra.mxu0 0.0
        %2948 = vmatprep.subr.mxu0 0.0
        %2949 = vmatpush2.msra.mxu0 0.0
        %2950 = vmatprep.subr.mxu0 0.0
        %2951 = vmatpush2.msra.mxu0 0.0
        %2952 = vmatprep.subr.mxu0 0.0
        %2953 = vmatpush2.msra.mxu0 0.0
        %2954 = vmatprep.subr.mxu0 0.0
        %2955 = vmatpush2.msra.mxu0 0.0
        %2956 = vmatprep.subr.mxu0 0.0
        %2957 = vmatpush2.msra.mxu0 0.0
        %2958 = vmatprep.subr.mxu0 0.0
        %2959 = vmatpush2.msra.mxu0 0.0
        %2960 = vmatprep.subr.mxu0 0.0
        %2961 = vmatpush2.msra.mxu0 0.0
        %2962 = vmatprep.subr.mxu0 0.0
        %2963 = vmatpush2.msra.mxu0 0.0
        %2964 = vmatprep.subr.mxu0 0.0
        %2965 = vmatpush2.msra.mxu0 0.0
        %2966 = vmatprep.subr.mxu0 0.0
        %2967 = vmatpush2.msra.mxu0 0.0
        %2968 = vmatprep.mubr.f32.mxu0 0.0
        %v2969 = vand.u32 %v2599, 4294901760
        %2970 = vmatmul.mubr.f32.gmra.mxu0 %v2969
        %v2971 = vpop.f32.mrf.mxu0
        %v2972 = vadd.f32 %v2898, %v2971
        %v2973 = vpop.f32.mrf.mxu0
        %2974 = vdwg.mxu0
        %2975 = vmatprep.subr.mxu0 0.0
        %2976 = vmatpush1.msra.mxu0 0.0
        %2977 = vmatprep.subr.mxu0 0.0
        %2978 = vmatpush1.msra.mxu0 0.0
        %2979 = vmatprep.subr.mxu0 0.0
        %2980 = vmatpush1.msra.mxu0 0.0
        %2981 = vmatprep.subr.mxu0 0.0
        %2982 = vmatpush1.msra.mxu0 0.0
        %2983 = vmatprep.subr.mxu0 0.0
        %2984 = vmatpush1.msra.mxu0 0.0
        %2985 = vmatprep.subr.mxu0 0.0
        %2986 = vmatpush1.msra.mxu0 0.0
        %2987 = vmatprep.subr.mxu0 0.0
        %2988 = vmatpush1.msra.mxu0 0.0
        %2989 = vmatprep.subr.mxu0 0.0
        %2990 = vmatpush1.msra.mxu0 0.0
        %2991 = vmatprep.subr.mxu0 0.0
        %2992 = vmatpush1.msra.mxu0 0.0
        %2993 = vmatprep.subr.mxu0 0.0
        %2994 = vmatpush1.msra.mxu0 0.0
        %2995 = vmatprep.subr.mxu0 0.0
        %2996 = vmatpush1.msra.mxu0 0.0
        %2997 = vmatprep.subr.mxu0 0.0
        %2998 = vmatpush1.msra.mxu0 0.0
        %2999 = vmatprep.subr.mxu0 0.0
        %3000 = vmatpush1.msra.mxu0 0.0
        %3001 = vmatprep.subr.mxu0 0.0
        %3002 = vmatpush1.msra.mxu0 0.0
        %3003 = vmatprep.subr.mxu0 0.0
        %3004 = vmatpush1.msra.mxu0 0.0
        %3005 = vmatprep.subr.mxu0 0.0
        %v3006 = vand.u32 %v2593, 4294901760
        %3007 = vmatpush1.msra.mxu0 %v3006
        %3008 = vmatprep.subr.mxu0 0.0
        %3009 = vmatpush2.msra.mxu0 0.0
        %3010 = vmatprep.subr.mxu0 0.0
        %3011 = vmatpush2.msra.mxu0 0.0
        %3012 = vmatprep.subr.mxu0 0.0
        %3013 = vmatpush2.msra.mxu0 0.0
        %3014 = vmatprep.subr.mxu0 0.0
        %3015 = vmatpush2.msra.mxu0 0.0
        %3016 = vmatprep.subr.mxu0 0.0
        %3017 = vmatpush2.msra.mxu0 0.0
        %3018 = vmatprep.subr.mxu0 0.0
        %3019 = vmatpush2.msra.mxu0 0.0
        %3020 = vmatprep.subr.mxu0 0.0
        %3021 = vmatpush2.msra.mxu0 0.0
        %3022 = vmatprep.subr.mxu0 0.0
        %3023 = vmatpush2.msra.mxu0 0.0
        %3024 = vmatprep.subr.mxu0 0.0
        %3025 = vmatpush2.msra.mxu0 0.0
        %3026 = vmatprep.subr.mxu0 0.0
        %3027 = vmatpush2.msra.mxu0 0.0
        %3028 = vmatprep.subr.mxu0 0.0
        %3029 = vmatpush2.msra.mxu0 0.0
        %3030 = vmatprep.subr.mxu0 0.0
        %3031 = vmatpush2.msra.mxu0 0.0
        %3032 = vmatprep.subr.mxu0 0.0
        %3033 = vmatpush2.msra.mxu0 0.0
        %3034 = vmatprep.subr.mxu0 0.0
        %3035 = vmatpush2.msra.mxu0 0.0
        %3036 = vmatprep.subr.mxu0 0.0
        %3037 = vmatpush2.msra.mxu0 0.0
        %3038 = vmatprep.subr.mxu0 0.0
        %3039 = vmatpush2.msra.mxu0 0.0
        %3040 = vmatprep.mubr.f32.mxu0 0.0
        %v3041 = vand.u32 %v2599, 4294901760
        %3042 = vmatmul.mubr.f32.gmra.mxu0 %v3041
        %v3043 = vpop.f32.mrf.mxu0
        %v3044 = vadd.f32 %v2972, %v3043
        %v3045 = vpop.f32.mrf.mxu0
        %3046 = vdwg.mxu0
        %vm3047 = vcmask 319488
        %3048 = vst.msk [vmem:[%s243] sm:$0x1] %vm3047, %v3044
        %s3049 = sand.u32 %s159, 1
        %s3050 = scalar_lea.sflag [#allocation3], %s3049
        %s3051 = sand.u32 %s159, 1
        %s3052 = scalar_lea.vmem [#allocation2], %s3051
        // Predicated region
        $region45: #{tpu_custom_call.1} parent=43 // pred_check
          %p3053 = pneg %p169
        $region46: #{tpu_custom_call.1} parent=43 // pred_check_branch
          %3055 = sbr.rel (%p3053) target = $region48
        $region47: #{tpu_custom_call.1} parent=43 // pred_region
          %s3057 = ssub.s32 16, 16
          %3058 = vsyncadd %s3050, %s3057
          %s3059 = smul.addr %s20, 16
          %s3060 = scalar_lea.hbm %s6, %s3059
          %s3062 = sshll.u32 %s3052, 4
          %s3063 = int_to_ptr.vmem [resolvable:$true] %s3062
          %3065 = dma.vmem_to_hbm [thread:$0]  %s3063, 16, %s3060, %s3050
        $region48: #{tpu_custom_call.1} parent=43 // pred_fallthru
          _
      $region44: #{tpu_custom_call.1} parent=5 // pred_fallthru
        _
      %p3066 = scmp.le.s32.totalorder 2, %s15
      // Predicated region
      $region49: #{tpu_custom_call.1} parent=5 // pred_check
        %p3067 = pneg %p3066
      $region50: #{tpu_custom_call.1} parent=5 // pred_check_branch
        %3069 = sbr.rel (%p3067) target = $region52
      $region51: #{tpu_custom_call.1} parent=5 // pred_region
        %s3070 = ssub.s32 %s15, 2
        // Predicated region
        $region53: #{tpu_custom_call.1} parent=51 // pred_check
          %p3071 = pneg %p175
        $region54: #{tpu_custom_call.1} parent=51 // pred_check_branch
          %3073 = sbr.rel (%p3071) target = $region56
        $region55: #{tpu_custom_call.1} parent=51 // pred_region
          %s3074 = sand.u32 %s160, 1
          %s3075 = scalar_lea.sflag [#allocation3], %s3074
          %s3076 = sand.u32 %s160, 1
          %s3077 = scalar_lea.vmem [#allocation2], %s3076
          %3078 = dma.done %s3075, 16
        $region56: #{tpu_custom_call.1} parent=51 // pred_fallthru
          _
      $region52: #{tpu_custom_call.1} parent=5 // pred_fallthru
        _
    $region6: #{tpu_custom_call.1} parent=1 // loop_footer
      %s19 = sadd.s32 1, %s15
    $region7: #{tpu_custom_call.1} parent=1 // loop_footer_branch
      %14 = sbr.rel target = $region3
    $region8: #{tpu_custom_call.1} parent=1 // loop_exit
      _
    %3079 = vsyncpa [#allocation3], 1
    %s3080 = scalar_lea.sflag [#allocation3], 1
    %3081 = vsyncpa %s3080, 1

</llo_original>
